<compile_context>
chip_gen: v7x
topology: tpu7x:2x2x1
jax: 0.10.0
libtpu: 0.0.40
codegen_flags: <defaults>
</compile_context>

<pallas_src>
import numpy as np

import jax
import jax.numpy as jnp
from jax import lax
from jax.experimental import pallas as pl
from jax.experimental.pallas import tpu as pltpu

# ------------------------- fixed config constants ---------------------------
FEATURE_DIM = 32
MAX_IMAGES_PER_STUDY = 4          # S
NUM_IMG_CHANNELS = 1
IMG_SIZE = 16
FFN_HIDDEN_DIM = 64
CLASSES_VIEW_POSITION = 4
META_COLS = 1 + CLASSES_VIEW_POSITION   # [age | one-hot view]
BN_EPS = 1e-5                     # torch.nn.BatchNorm2d default eps
RMS_EPS = 1e-6                    # RMSNorm default eps


def _round_up(x, m):
    return (x + m - 1) // m * m


# --------------------------- fused forward kernel ---------------------------
def _fused_forward_kernel(
        x_ref, meta_ref,
        b1cat_ref, b1c2_ref, b2cat_ref, b2c2_ref,
        ppw_ref, ppb_ref, agew_ref, vemb_ref, rmsw_ref,
        f1w_ref, f1b_ref, f2w_ref, f2b_ref,
        c1w_ref, c1b_ref, c2w_ref, c2b_ref,
        out_ref):
    """One grid step == B_TILE studies (S*B_TILE image rows, image-major)."""
    f32 = jnp.float32
    bf16 = jnp.bfloat16

    def mm(a, w):                      # bf16 MXU operands, f32 accumulation
        return jnp.dot(a.astype(bf16), w, preferred_element_type=f32)

    x = x_ref[0]                                   # [S*Bt, H*W]   bf16
    meta = meta_ref[0]                             # [S*Bt, 5]     f32
    bt = x.shape[0] // MAX_IMAGES_PER_STUDY        # studies per tile (static)

    # ResNet block 1: [conv3x3/s2 | 1x1/s2 shortcut] fused in one matmul over x
    n1 = b1c2_ref.shape[0]                         # 512
    r1 = mm(x, b1cat_ref[...])                     # [M, 1024]
    h = jnp.maximum(r1[:, :n1], 0.0)               # conv1 + BN + ReLU
    h = jnp.maximum(mm(h, b1c2_ref[...]) + r1[:, n1:], 0.0)     # conv2+BN + shortcut

    # ResNet block 2: same structure, 8x8x8 -> 4x4x16
    n2 = b2c2_ref.shape[0]                         # 256
    r2 = mm(h, b2cat_ref[...])                     # [M, 512]
    g = jnp.maximum(r2[:, :n2], 0.0)
    g = jnp.maximum(mm(g, b2c2_ref[...]) + r2[:, n2:], 0.0)     # [M, 256]

    # AdaptiveAvgPool2d((1,1)) + projector (+ proj_b + age_b folded) + metadata
    age = meta[:, 0:1]
    view_oh = meta[:, 1:META_COLS]
    feats = mm(g, ppw_ref[...]) + ppb_ref[...]                   # [M, F]
    feats = feats + age * agew_ref[...] + mm(view_oh, vemb_ref[...])

    # pre-FFN RMSNorm over the feature dim (scale = 1 + weight, folded at prep)
    r = lax.rsqrt(jnp.mean(feats * feats, axis=-1, keepdims=True) + RMS_EPS)
    feats = (feats * r * rmsw_ref[...]).astype(bf16)             # [M, F]

    # FFN on the flattened study [Bt, S*F]: rows are image-major, so each image's
    # features are a contiguous [Bt, F] slice -> S full-height matmuls, no reshape.
    acc = jnp.dot(feats[0:bt, :], f1w_ref[0:FEATURE_DIM, :],
                  preferred_element_type=f32)
    for s in range(1, MAX_IMAGES_PER_STUDY):
        acc = acc + jnp.dot(
            feats[s * bt:(s + 1) * bt, :],
            f1w_ref[s * FEATURE_DIM:(s + 1) * FEATURE_DIM, :],
            preferred_element_type=f32)
    hf = jnp.maximum(acc + f1b_ref[...], 0.0)                    # [Bt, 64]
    hf = jnp.maximum(mm(hf, f2w_ref[...]) + f2b_ref[...], 0.0)   # [Bt, F]

    # classifier: Linear(F,F)+ReLU -> Linear(F,1)
    hc = jnp.maximum(mm(hf, c1w_ref[...]) + c1b_ref[...], 0.0)
    out_ref[0] = mm(hc, c2w_ref[...]) + c2b_ref[...]             # [Bt, 1]


# ----------------- weight preparation (runs once, outside jit) ---------------
def conv_to_matrix(w_oihw, H, W, stride, pad):
    """Fold a conv into a dense GEMM matrix: out_flat = in_flat @ big.

    Input rows indexed (h*W + w)*Cin + ci ; output cols (ho*Wo + wo)*Cout + co.
    """
    w = np.asarray(w_oihw, np.float32)
    cout, cin, kh, kw = w.shape
    Ho = (H + 2 * pad - kh) // stride + 1
    Wo = (W + 2 * pad - kw) // stride + 1
    big = np.zeros((H * W * cin, Ho * Wo * cout), np.float32)
    for dh in range(kh):
        for dw in range(kw):
            for ho in range(Ho):
                h = ho * stride + dh - pad
                if h < 0 or h >= H:
                    continue
                for wo in range(Wo):
                    wc = wo * stride + dw - pad
                    if wc < 0 or wc >= W:
                        continue
                    col0 = (ho * Wo + wo) * cout
                    for ci in range(cin):
                        row = (h * W + wc) * cin + ci
                        big[row, col0:col0 + cout] += w[:, ci, dh, dw]
    return big


def prepare_inference_weights(params):
    """Fold convs -> GEMM, eval-BN scale into weights, pool into projector,
    biases together; concatenate same-operand matrices; cast MXU operands bf16."""
    bn_scale = 1.0 / np.sqrt(1.0 + BN_EPS)     # BN eval @ init: y = x/sqrt(1+eps)
    n_spatial = (IMG_SIZE // 4) ** 2           # spatial positions after 2 stride-2 blocks
    f32, bf16 = jnp.float32, jnp.bfloat16

    b1c1 = conv_to_matrix(params['b1_w1'], IMG_SIZE, IMG_SIZE, 2, 1) * bn_scale
    b1sc = conv_to_matrix(params['b1_wsc'], IMG_SIZE, IMG_SIZE, 2, 0) * bn_scale
    b1c2 = conv_to_matrix(params['b1_w2'], IMG_SIZE // 2, IMG_SIZE // 2, 1, 1) * bn_scale
    b2c1 = conv_to_matrix(params['b2_w1'], IMG_SIZE // 2, IMG_SIZE // 2, 2, 1) * bn_scale
    b2sc = conv_to_matrix(params['b2_wsc'], IMG_SIZE // 2, IMG_SIZE // 2, 2, 0) * bn_scale
    b2c2 = conv_to_matrix(params['b2_w2'], IMG_SIZE // 4, IMG_SIZE // 4, 1, 1) * bn_scale

    proj_w = np.asarray(params['proj_w'], np.float32)          # [16, F]
    proj_b = np.asarray(params['proj_b'], np.float32)
    age_w = np.asarray(params['age_w'], np.float32)
    age_b = np.asarray(params['age_b'], np.float32)

    prep = {
        # same-operand matrices concatenated along N: one matmul over x / over h
        'b1cat': jnp.asarray(np.concatenate([b1c1, b1sc], axis=1), bf16),   # [256, 1024]
        'b1c2': jnp.asarray(b1c2, bf16),                                    # [512, 512]
        'b2cat': jnp.asarray(np.concatenate([b2c1, b2sc], axis=1), bf16),   # [512, 512]
        'b2c2': jnp.asarray(b2c2, bf16),                                    # [256, 256]
        # global-average-pool + projector fused into one matrix [n_spatial*C, F]
        'pp_w': jnp.asarray(np.tile(proj_w, (n_spatial, 1)) / float(n_spatial), bf16),
        'pp_b': jnp.asarray((proj_b + age_b).reshape(1, FEATURE_DIM), f32),
        'age_w': jnp.asarray(age_w.reshape(1, FEATURE_DIM), f32),
        'view_emb': jnp.asarray(params['view_emb'], bf16),                  # [4, F]
        'rms_scale': jnp.asarray(
            1.0 + np.asarray(params['rms_w'], np.float32).reshape(1, FEATURE_DIM), f32),
        'ffn_w1': jnp.asarray(params['ffn_w1'], bf16),                      # [S*F, 64]
        'ffn_b1': jnp.asarray(params['ffn_b1'], f32).reshape(1, FFN_HIDDEN_DIM),
        'ffn_w2': jnp.asarray(params['ffn_w2'], bf16),                      # [64, F]
        'ffn_b2': jnp.asarray(params['ffn_b2'], f32).reshape(1, FEATURE_DIM),
        'cls_w1': jnp.asarray(params['cls_w1'], bf16),                      # [F, F]
        'cls_b1': jnp.asarray(params['cls_b1'], f32).reshape(1, FEATURE_DIM),
        'cls_w2': jnp.asarray(params['cls_w2'], bf16),                      # [F, 1]
        'cls_b2': jnp.asarray(params['cls_b2'], f32).reshape(1, 1),
    }
    return prep


_WEIGHT_ORDER = ('b1cat', 'b1c2', 'b2cat', 'b2c2',
                 'pp_w', 'pp_b', 'age_w', 'view_emb', 'rms_scale',
                 'ffn_w1', 'ffn_b1', 'ffn_w2', 'ffn_b2',
                 'cls_w1', 'cls_b1', 'cls_w2', 'cls_b2')


# --------------------------------- forward ------------------------------------
def forward(prep, image_sets, image_mask, imgs_metadata, *, b_tile=64):
    """image_sets: [B,S,C,H,W]; image_mask: [B,S] (unused on FFN path);
    imgs_metadata: [B,S,2] = (PatientAge, ViewPosition-index)."""
    del image_mask  # only the transformer branch uses it (use_ffn=True here)
    B, S, C, H, W = image_sets.shape
    assert S == MAX_IMAGES_PER_STUDY and C == NUM_IMG_CHANNELS
    HW = H * W * C

    # ---- tiling: B_TILE studies per grid step (M = B_TILE*S rows per matmul) ----
    bt = _round_up(min(b_tile, _round_up(B, 8)), 8)     # multiple of 8 sublanes
    padded_B = _round_up(B, bt)
    n_tiles = padded_B // bt

    # C==1 -> plain reshape (no copy); bf16 halves the only B-scaled HBM stream
    x = image_sets.reshape(B, S, HW).astype(jnp.bfloat16)
    age = imgs_metadata[:, :, 0:1].astype(jnp.float32)
    view_oh = jax.nn.one_hot(imgs_metadata[:, :, 1].astype(jnp.int32),
                             CLASSES_VIEW_POSITION, dtype=jnp.float32)
    meta = jnp.concatenate([age, view_oh], axis=-1)      # [B, S, 5]

    pad = padded_B - B
    if pad:
        x = jnp.pad(x, ((0, pad), (0, 0), (0, 0)))
        meta = jnp.pad(meta, ((0, pad), (0, 0), (0, 0)))

    # image-major within each tile: row index = s*bt + b, so the FFN's per-image
    # slices are contiguous [bt, F] blocks inside the kernel.
    x = x.reshape(n_tiles, bt, S, HW).transpose(0, 2, 1, 3).reshape(n_tiles, S * bt, HW)
    meta = (meta.reshape(n_tiles, bt, S, META_COLS)
                .transpose(0, 2, 1, 3).reshape(n_tiles, S * bt, META_COLS))

    weights = tuple(prep[n] for n in _WEIGHT_ORDER)

    in_specs = [
        pl.BlockSpec((1, S * bt, HW), lambda i: (i, 0, 0)),
        pl.BlockSpec((1, S * bt, META_COLS), lambda i: (i, 0, 0)),
    ] + [pl.BlockSpec(w.shape, lambda i: (0, 0)) for w in weights]   # VMEM-resident

    out = pl.pallas_call(
        _fused_forward_kernel,
        out_shape=jax.ShapeDtypeStruct((n_tiles, bt, 1), jnp.float32),
        grid=(n_tiles,),
        in_specs=in_specs,
        out_specs=pl.BlockSpec((1, bt, 1), lambda i: (i, 0, 0)),
        compiler_params=pltpu.CompilerParams(
            dimension_semantics=("parallel",)),          # v7x: tiles split across both TCs
    )(x, meta, *weights)
    return out.reshape(padded_B)[:B]                     # [B]


# ------------------------------- parameters -----------------------------------
def init_params(key):
    ks = jax.random.split(key, 19)

    def nrm(k, shape, scale=0.1):
        return (scale * jax.random.normal(k, shape)).astype(jnp.float32)

    p = {}
    # ResNet block 1: 1 -> 8, stride 2
    p['b1_w1'] = nrm(ks[0], (8, 1, 3, 3))
    p['b1_w2'] = nrm(ks[1], (8, 8, 3, 3))
    p['b1_wsc'] = nrm(ks[2], (8, 1, 1, 1))
    # ResNet block 2: 8 -> 16, stride 2
    p['b2_w1'] = nrm(ks[3], (16, 8, 3, 3))
    p['b2_w2'] = nrm(ks[4], (16, 16, 3, 3))
    p['b2_wsc'] = nrm(ks[5], (16, 8, 1, 1))
    # projector: Linear(16, feature_dim)
    p['proj_w'] = nrm(ks[6], (16, FEATURE_DIM))
    p['proj_b'] = nrm(ks[7], (FEATURE_DIM,))
    # metadata embeddings: PatientAge -> Linear(1, F); ViewPosition -> Embedding(4, F)
    p['age_w'] = nrm(ks[8], (FEATURE_DIM,))
    p['age_b'] = nrm(ks[9], (FEATURE_DIM,))
    p['view_emb'] = nrm(ks[10], (CLASSES_VIEW_POSITION, FEATURE_DIM))
    # pre-FFN RMSNorm weight (torch init: ones)
    p['rms_w'] = jnp.ones((FEATURE_DIM,), jnp.float32)
    # FFN: Linear(S*F, hidden) + ReLU + Linear(hidden, F) + ReLU  (dropout=0)
    p['ffn_w1'] = nrm(ks[11], (FEATURE_DIM * MAX_IMAGES_PER_STUDY, FFN_HIDDEN_DIM))
    p['ffn_b1'] = nrm(ks[12], (FFN_HIDDEN_DIM,))
    p['ffn_w2'] = nrm(ks[13], (FFN_HIDDEN_DIM, FEATURE_DIM))
    p['ffn_b2'] = nrm(ks[14], (FEATURE_DIM,))
    # classifier: Linear(F,F) + ReLU + Linear(F,1)
    p['cls_w1'] = nrm(ks[15], (FEATURE_DIM, FEATURE_DIM))
    p['cls_b1'] = nrm(ks[16], (FEATURE_DIM,))
    p['cls_w2'] = nrm(ks[17], (FEATURE_DIM, 1))
    p['cls_b2'] = nrm(ks[18], (1,))
    return p


# --------------------------- pure-JAX reference --------------------------------
def reference_forward(params, image_sets, image_mask, imgs_metadata):
    del image_mask
    b, s, c, h, w = image_sets.shape
    x = jnp.transpose(image_sets.reshape(b * s, c, h, w), (0, 2, 3, 1)).astype(jnp.float32)

    bn = lambda y: y / jnp.sqrt(1.0 + BN_EPS)

    def conv(x, w_oihw, stride, pad):
        wk = jnp.transpose(w_oihw, (2, 3, 1, 0))
        return lax.conv_general_dilated(
            x, wk, (stride, stride), [(pad, pad), (pad, pad)],
            dimension_numbers=('NHWC', 'HWIO', 'NHWC'))

    def block(x, w1, w2, wsc, stride):
        sc = bn(conv(x, wsc, stride, 0))
        hh = jax.nn.relu(bn(conv(x, w1, stride, 1)))
        hh = bn(conv(hh, w2, 1, 1))
        return jax.nn.relu(hh + sc)

    x = block(x, params['b1_w1'], params['b1_w2'], params['b1_wsc'], 2)
    x = block(x, params['b2_w1'], params['b2_w2'], params['b2_wsc'], 2)
    feats = jnp.mean(x, axis=(1, 2))
    feats = feats @ params['proj_w'] + params['proj_b']
    feats = feats.reshape(b, s, FEATURE_DIM)
    ages = imgs_metadata[:, :, 0:1].astype(jnp.float32)
    feats = feats + ages * params['age_w'] + params['age_b']
    feats = feats + jnp.take(params['view_emb'], imgs_metadata[:, :, 1].astype(jnp.int32), axis=0)
    rms = lax.rsqrt(jnp.mean(feats * feats, axis=-1, keepdims=True) + RMS_EPS)
    feats = feats * rms * (1.0 + params['rms_w'])
    feats = feats.reshape(b, s * FEATURE_DIM)
    feats = jax.nn.relu(feats @ params['ffn_w1'] + params['ffn_b1'])
    feats = jax.nn.relu(feats @ params['ffn_w2'] + params['ffn_b2'])
    feats = jax.nn.relu(feats @ params['cls_w1'] + params['cls_b1'])
    return (feats @ params['cls_w2'] + params['cls_b2'])[:, 0]


# ----------------------------------- main --------------------------------------
if __name__ == "__main__":
    key = jax.random.PRNGKey(0)
    kp, kx, ka, kv = jax.random.split(key, 4)
    params = init_params(kp)
    prep = prepare_inference_weights(params)     # one-time, outside the hot path

    B, S = 2, MAX_IMAGES_PER_STUDY
    image_sets = jax.random.normal(
        kx, (B, S, NUM_IMG_CHANNELS, IMG_SIZE, IMG_SIZE), jnp.float32)
    image_mask = jnp.ones((B, S), jnp.float32)
    ages = jax.random.uniform(ka, (B, S, 1), minval=30.0, maxval=80.0)
    views = jax.random.randint(kv, (B, S, 1), 0, CLASSES_VIEW_POSITION).astype(jnp.float32)
    imgs_metadata = jnp.concatenate([ages, views], axis=-1)   # [B, S, 2]

    fwd = jax.jit(forward)
    out = jax.block_until_ready(fwd(prep, image_sets, image_mask, imgs_metadata))

    with jax.default_matmul_precision('float32'):
        ref = reference_forward(params, image_sets, image_mask, imgs_metadata)

    assert out.shape == (B,), out.shape
    # tolerance accounts for bf16 MXU operands (f32 accumulation) in the fused kernel
    assert jnp.allclose(out, ref, rtol=5e-2, atol=5e-2), (out, ref)

    print("KERNEL_OK")
</pallas_src>

<mosaic_0001>
module attributes {stable_mosaic.version = 11 : i64} {
  func.func @_fused_forward_kernel(%arg0: i32, %arg1: memref<1x32x256xbf16, #tpu.memory_space<vmem>>, %arg2: memref<1x32x5xf32, #tpu.memory_space<vmem>>, %arg3: memref<256x1024xbf16, #tpu.memory_space<vmem>>, %arg4: memref<512x512xbf16, #tpu.memory_space<vmem>>, %arg5: memref<512x512xbf16, #tpu.memory_space<vmem>>, %arg6: memref<256x256xbf16, #tpu.memory_space<vmem>>, %arg7: memref<256x32xbf16, #tpu.memory_space<vmem>>, %arg8: memref<1x32xf32, #tpu.memory_space<vmem>>, %arg9: memref<1x32xf32, #tpu.memory_space<vmem>>, %arg10: memref<4x32xbf16, #tpu.memory_space<vmem>>, %arg11: memref<1x32xf32, #tpu.memory_space<vmem>>, %arg12: memref<128x64xbf16, #tpu.memory_space<vmem>>, %arg13: memref<1x64xf32, #tpu.memory_space<vmem>>, %arg14: memref<64x32xbf16, #tpu.memory_space<vmem>>, %arg15: memref<1x32xf32, #tpu.memory_space<vmem>>, %arg16: memref<32x32xbf16, #tpu.memory_space<vmem>>, %arg17: memref<1x32xf32, #tpu.memory_space<vmem>>, %arg18: memref<32x1xbf16, #tpu.memory_space<vmem>>, %arg19: memref<1x1xf32, #tpu.memory_space<vmem>>, %arg20: memref<1x8x1xf32, #tpu.memory_space<vmem>>) attributes {dimension_semantics = [#tpu.dimension_semantics<parallel>], iteration_bounds = array<i64: 1>, scalar_prefetch = 0 : i64, scratch_operands = 0 : i64, tpu.core_type = #tpu.core_type<tc>, window_params = [{transform_indices = @transform_0, window_bounds = array<i64: 1, 32, 256>}, {transform_indices = @transform_1, window_bounds = array<i64: 1, 32, 5>}, {pipeline_mode = #tpu.pipeline_mode<synchronous>, transform_indices = @transform_2, window_bounds = array<i64: 256, 1024>}, {pipeline_mode = #tpu.pipeline_mode<synchronous>, transform_indices = @transform_3, window_bounds = array<i64: 512, 512>}, {pipeline_mode = #tpu.pipeline_mode<synchronous>, transform_indices = @transform_4, window_bounds = array<i64: 512, 512>}, {pipeline_mode = #tpu.pipeline_mode<synchronous>, transform_indices = @transform_5, window_bounds = array<i64: 256, 256>}, {pipeline_mode = #tpu.pipeline_mode<synchronous>, transform_indices = @transform_6, window_bounds = array<i64: 256, 32>}, {pipeline_mode = #tpu.pipeline_mode<synchronous>, transform_indices = @transform_7, window_bounds = array<i64: 1, 32>}, {pipeline_mode = #tpu.pipeline_mode<synchronous>, transform_indices = @transform_8, window_bounds = array<i64: 1, 32>}, {pipeline_mode = #tpu.pipeline_mode<synchronous>, transform_indices = @transform_9, window_bounds = array<i64: 4, 32>}, {pipeline_mode = #tpu.pipeline_mode<synchronous>, transform_indices = @transform_10, window_bounds = array<i64: 1, 32>}, {pipeline_mode = #tpu.pipeline_mode<synchronous>, transform_indices = @transform_11, window_bounds = array<i64: 128, 64>}, {pipeline_mode = #tpu.pipeline_mode<synchronous>, transform_indices = @transform_12, window_bounds = array<i64: 1, 64>}, {pipeline_mode = #tpu.pipeline_mode<synchronous>, transform_indices = @transform_13, window_bounds = array<i64: 64, 32>}, {pipeline_mode = #tpu.pipeline_mode<synchronous>, transform_indices = @transform_14, window_bounds = array<i64: 1, 32>}, {pipeline_mode = #tpu.pipeline_mode<synchronous>, transform_indices = @transform_15, window_bounds = array<i64: 32, 32>}, {pipeline_mode = #tpu.pipeline_mode<synchronous>, transform_indices = @transform_16, window_bounds = array<i64: 1, 32>}, {pipeline_mode = #tpu.pipeline_mode<synchronous>, transform_indices = @transform_17, window_bounds = array<i64: 32, 1>}, {pipeline_mode = #tpu.pipeline_mode<synchronous>, transform_indices = @transform_18, window_bounds = array<i64: 1, 1>}, {transform_indices = @transform_19, window_bounds = array<i64: 1, 8, 1>}]} {
    %c0 = arith.constant 0 : index
    %c0_0 = arith.constant 0 : index
    %c0_1 = arith.constant 0 : index
    %0 = vector.load %arg1[%c0, %c0_0, %c0_1] : memref<1x32x256xbf16, #tpu.memory_space<vmem>>, vector<1x32x256xbf16>
    %1 = vector.shape_cast %0 : vector<1x32x256xbf16> to vector<32x256xbf16>
    %c0_2 = arith.constant 0 : index
    %c0_3 = arith.constant 0 : index
    %c0_4 = arith.constant 0 : index
    %2 = vector.load %arg2[%c0_2, %c0_3, %c0_4] : memref<1x32x5xf32, #tpu.memory_space<vmem>>, vector<1x32x5xf32>
    %3 = vector.shape_cast %2 : vector<1x32x5xf32> to vector<32x5xf32>
    %c0_5 = arith.constant 0 : index
    %c0_6 = arith.constant 0 : index
    %4 = vector.load %arg3[%c0_5, %c0_6] : memref<256x1024xbf16, #tpu.memory_space<vmem>>, vector<256x1024xbf16>
    %cst = arith.constant dense<0.000000e+00> : vector<32x1024xf32>
    %5 = tpu.matmul %1, %4, %cst {dimension_numbers = #tpu.dot_dimension_numbers<[1], [0], [0], [1], [0, 0, 1, 1], [], []>} : vector<32x256xbf16>, vector<256x1024xbf16>, vector<32x1024xf32> -> vector<32x1024xf32>
    %6 = vector.extract_strided_slice %5 {offsets = [0, 0], sizes = [32, 512], strides = [1, 1]} : vector<32x1024xf32> to vector<32x512xf32>
    %cst_7 = arith.constant 0.000000e+00 : f32
    %7 = vector.broadcast %cst_7 : f32 to vector<32x512xf32>
    %8 = arith.maximumf %6, %7 : vector<32x512xf32>
    %c0_8 = arith.constant 0 : index
    %c0_9 = arith.constant 0 : index
    %9 = vector.load %arg4[%c0_8, %c0_9] : memref<512x512xbf16, #tpu.memory_space<vmem>>, vector<512x512xbf16>
    %10 = arith.truncf %8 : vector<32x512xf32> to vector<32x512xbf16>
    %cst_10 = arith.constant dense<0.000000e+00> : vector<32x512xf32>
    %11 = tpu.matmul %10, %9, %cst_10 {dimension_numbers = #tpu.dot_dimension_numbers<[1], [0], [0], [1], [0, 0, 1, 1], [], []>} : vector<32x512xbf16>, vector<512x512xbf16>, vector<32x512xf32> -> vector<32x512xf32>
    %12 = vector.extract_strided_slice %5 {offsets = [0, 512], sizes = [32, 512], strides = [1, 1]} : vector<32x1024xf32> to vector<32x512xf32>
    %13 = arith.addf %11, %12 : vector<32x512xf32>
    %cst_11 = arith.constant 0.000000e+00 : f32
    %14 = vector.broadcast %cst_11 : f32 to vector<32x512xf32>
    %15 = arith.maximumf %13, %14 : vector<32x512xf32>
    %c0_12 = arith.constant 0 : index
    %c0_13 = arith.constant 0 : index
    %16 = vector.load %arg5[%c0_12, %c0_13] : memref<512x512xbf16, #tpu.memory_space<vmem>>, vector<512x512xbf16>
    %17 = arith.truncf %15 : vector<32x512xf32> to vector<32x512xbf16>
    %cst_14 = arith.constant dense<0.000000e+00> : vector<32x512xf32>
    %18 = tpu.matmul %17, %16, %cst_14 {dimension_numbers = #tpu.dot_dimension_numbers<[1], [0], [0], [1], [0, 0, 1, 1], [], []>} : vector<32x512xbf16>, vector<512x512xbf16>, vector<32x512xf32> -> vector<32x512xf32>
    %19 = vector.extract_strided_slice %18 {offsets = [0, 0], sizes = [32, 256], strides = [1, 1]} : vector<32x512xf32> to vector<32x256xf32>
    %cst_15 = arith.constant 0.000000e+00 : f32
    %20 = vector.broadcast %cst_15 : f32 to vector<32x256xf32>
    %21 = arith.maximumf %19, %20 : vector<32x256xf32>
    %c0_16 = arith.constant 0 : index
    %c0_17 = arith.constant 0 : index
    %22 = vector.load %arg6[%c0_16, %c0_17] : memref<256x256xbf16, #tpu.memory_space<vmem>>, vector<256x256xbf16>
    %23 = arith.truncf %21 : vector<32x256xf32> to vector<32x256xbf16>
    %cst_18 = arith.constant dense<0.000000e+00> : vector<32x256xf32>
    %24 = tpu.matmul %23, %22, %cst_18 {dimension_numbers = #tpu.dot_dimension_numbers<[1], [0], [0], [1], [0, 0, 1, 1], [], []>} : vector<32x256xbf16>, vector<256x256xbf16>, vector<32x256xf32> -> vector<32x256xf32>
    %25 = vector.extract_strided_slice %18 {offsets = [0, 256], sizes = [32, 256], strides = [1, 1]} : vector<32x512xf32> to vector<32x256xf32>
    %26 = arith.addf %24, %25 : vector<32x256xf32>
    %cst_19 = arith.constant 0.000000e+00 : f32
    %27 = vector.broadcast %cst_19 : f32 to vector<32x256xf32>
    %28 = arith.maximumf %26, %27 : vector<32x256xf32>
    %29 = vector.extract_strided_slice %3 {offsets = [0, 0], sizes = [32, 1], strides = [1, 1]} : vector<32x5xf32> to vector<32x1xf32>
    %30 = vector.extract_strided_slice %3 {offsets = [0, 1], sizes = [32, 4], strides = [1, 1]} : vector<32x5xf32> to vector<32x4xf32>
    %c0_20 = arith.constant 0 : index
    %c0_21 = arith.constant 0 : index
    %31 = vector.load %arg7[%c0_20, %c0_21] : memref<256x32xbf16, #tpu.memory_space<vmem>>, vector<256x32xbf16>
    %32 = arith.truncf %28 : vector<32x256xf32> to vector<32x256xbf16>
    %cst_22 = arith.constant dense<0.000000e+00> : vector<32x32xf32>
    %33 = tpu.matmul %32, %31, %cst_22 {dimension_numbers = #tpu.dot_dimension_numbers<[1], [0], [0], [1], [0, 0, 1, 1], [], []>} : vector<32x256xbf16>, vector<256x32xbf16>, vector<32x32xf32> -> vector<32x32xf32>
    %c0_23 = arith.constant 0 : index
    %c0_24 = arith.constant 0 : index
    %34 = vector.load %arg8[%c0_23, %c0_24] : memref<1x32xf32, #tpu.memory_space<vmem>>, vector<1x32xf32>
    %35 = vector.broadcast %34 : vector<1x32xf32> to vector<32x32xf32>
    %36 = arith.addf %33, %35 : vector<32x32xf32>
    %c0_25 = arith.constant 0 : index
    %c0_26 = arith.constant 0 : index
    %37 = vector.load %arg9[%c0_25, %c0_26] : memref<1x32xf32, #tpu.memory_space<vmem>>, vector<1x32xf32>
    %38 = vector.broadcast %29 : vector<32x1xf32> to vector<32x32xf32>
    %39 = vector.broadcast %37 : vector<1x32xf32> to vector<32x32xf32>
    %40 = arith.mulf %38, %39 : vector<32x32xf32>
    %41 = arith.addf %36, %40 : vector<32x32xf32>
    %c0_27 = arith.constant 0 : index
    %c0_28 = arith.constant 0 : index
    %42 = vector.load %arg10[%c0_27, %c0_28] : memref<4x32xbf16, #tpu.memory_space<vmem>>, vector<4x32xbf16>
    %43 = arith.truncf %30 : vector<32x4xf32> to vector<32x4xbf16>
    %cst_29 = arith.constant dense<0.000000e+00> : vector<32x32xf32>
    %44 = tpu.matmul %43, %42, %cst_29 {dimension_numbers = #tpu.dot_dimension_numbers<[1], [0], [0], [1], [0, 0, 1, 1], [], []>} : vector<32x4xbf16>, vector<4x32xbf16>, vector<32x32xf32> -> vector<32x32xf32>
    %45 = arith.addf %41, %44 : vector<32x32xf32>
    %46 = arith.mulf %45, %45 : vector<32x32xf32>
    %cst_30 = arith.constant dense<0.000000e+00> : vector<32xf32>
    %47 = vector.multi_reduction <add>, %46, %cst_30 [1] : vector<32x32xf32> to vector<32xf32>
    %48 = vector.shape_cast %47 : vector<32xf32> to vector<32x1xf32>
    %cst_31 = arith.constant 3.200000e+01 : f32
    %49 = vector.broadcast %cst_31 : f32 to vector<32x1xf32>
    %50 = arith.divf %48, %49 : vector<32x1xf32>
    %cst_32 = arith.constant 9.99999997E-7 : f32
    %51 = vector.broadcast %cst_32 : f32 to vector<32x1xf32>
    %52 = arith.addf %50, %51 : vector<32x1xf32>
    %53 = math.rsqrt %52 : vector<32x1xf32>
    %54 = vector.broadcast %53 : vector<32x1xf32> to vector<32x32xf32>
    %55 = arith.mulf %45, %54 : vector<32x32xf32>
    %c0_33 = arith.constant 0 : index
    %c0_34 = arith.constant 0 : index
    %56 = vector.load %arg11[%c0_33, %c0_34] : memref<1x32xf32, #tpu.memory_space<vmem>>, vector<1x32xf32>
    %57 = vector.broadcast %56 : vector<1x32xf32> to vector<32x32xf32>
    %58 = arith.mulf %55, %57 : vector<32x32xf32>
    %59 = arith.truncf %58 : vector<32x32xf32> to vector<32x32xbf16>
    %60 = vector.extract_strided_slice %59 {offsets = [0, 0], sizes = [8, 32], strides = [1, 1]} : vector<32x32xbf16> to vector<8x32xbf16>
    %c0_35 = arith.constant 0 : index
    %c0_36 = arith.constant 0 : index
    %61 = vector.load %arg12[%c0_35, %c0_36] : memref<128x64xbf16, #tpu.memory_space<vmem>>, vector<32x64xbf16>
    %cst_37 = arith.constant dense<0.000000e+00> : vector<8x64xf32>
    %62 = tpu.matmul %60, %61, %cst_37 {dimension_numbers = #tpu.dot_dimension_numbers<[1], [0], [0], [1], [0, 0, 1, 1], [], []>} : vector<8x32xbf16>, vector<32x64xbf16>, vector<8x64xf32> -> vector<8x64xf32>
    %63 = vector.extract_strided_slice %59 {offsets = [8, 0], sizes = [8, 32], strides = [1, 1]} : vector<32x32xbf16> to vector<8x32xbf16>
    %c32 = arith.constant 32 : index
    %c0_38 = arith.constant 0 : index
    %64 = vector.load %arg12[%c32, %c0_38] : memref<128x64xbf16, #tpu.memory_space<vmem>>, vector<32x64xbf16>
    %cst_39 = arith.constant dense<0.000000e+00> : vector<8x64xf32>
    %65 = tpu.matmul %63, %64, %cst_39 {dimension_numbers = #tpu.dot_dimension_numbers<[1], [0], [0], [1], [0, 0, 1, 1], [], []>} : vector<8x32xbf16>, vector<32x64xbf16>, vector<8x64xf32> -> vector<8x64xf32>
    %66 = arith.addf %62, %65 : vector<8x64xf32>
    %67 = vector.extract_strided_slice %59 {offsets = [16, 0], sizes = [8, 32], strides = [1, 1]} : vector<32x32xbf16> to vector<8x32xbf16>
    %c64 = arith.constant 64 : index
    %c0_40 = arith.constant 0 : index
    %68 = vector.load %arg12[%c64, %c0_40] : memref<128x64xbf16, #tpu.memory_space<vmem>>, vector<32x64xbf16>
    %cst_41 = arith.constant dense<0.000000e+00> : vector<8x64xf32>
    %69 = tpu.matmul %67, %68, %cst_41 {dimension_numbers = #tpu.dot_dimension_numbers<[1], [0], [0], [1], [0, 0, 1, 1], [], []>} : vector<8x32xbf16>, vector<32x64xbf16>, vector<8x64xf32> -> vector<8x64xf32>
    %70 = arith.addf %66, %69 : vector<8x64xf32>
    %71 = vector.extract_strided_slice %59 {offsets = [24, 0], sizes = [8, 32], strides = [1, 1]} : vector<32x32xbf16> to vector<8x32xbf16>
    %c96 = arith.constant 96 : index
    %c0_42 = arith.constant 0 : index
    %72 = vector.load %arg12[%c96, %c0_42] : memref<128x64xbf16, #tpu.memory_space<vmem>>, vector<32x64xbf16>
    %cst_43 = arith.constant dense<0.000000e+00> : vector<8x64xf32>
    %73 = tpu.matmul %71, %72, %cst_43 {dimension_numbers = #tpu.dot_dimension_numbers<[1], [0], [0], [1], [0, 0, 1, 1], [], []>} : vector<8x32xbf16>, vector<32x64xbf16>, vector<8x64xf32> -> vector<8x64xf32>
    %74 = arith.addf %70, %73 : vector<8x64xf32>
    %c0_44 = arith.constant 0 : index
    %c0_45 = arith.constant 0 : index
    %75 = vector.load %arg13[%c0_44, %c0_45] : memref<1x64xf32, #tpu.memory_space<vmem>>, vector<1x64xf32>
    %76 = vector.broadcast %75 : vector<1x64xf32> to vector<8x64xf32>
    %77 = arith.addf %74, %76 : vector<8x64xf32>
    %cst_46 = arith.constant 0.000000e+00 : f32
    %78 = vector.broadcast %cst_46 : f32 to vector<8x64xf32>
    %79 = arith.maximumf %77, %78 : vector<8x64xf32>
    %c0_47 = arith.constant 0 : index
    %c0_48 = arith.constant 0 : index
    %80 = vector.load %arg14[%c0_47, %c0_48] : memref<64x32xbf16, #tpu.memory_space<vmem>>, vector<64x32xbf16>
    %81 = arith.truncf %79 : vector<8x64xf32> to vector<8x64xbf16>
    %cst_49 = arith.constant dense<0.000000e+00> : vector<8x32xf32>
    %82 = tpu.matmul %81, %80, %cst_49 {dimension_numbers = #tpu.dot_dimension_numbers<[1], [0], [0], [1], [0, 0, 1, 1], [], []>} : vector<8x64xbf16>, vector<64x32xbf16>, vector<8x32xf32> -> vector<8x32xf32>
    %c0_50 = arith.constant 0 : index
    %c0_51 = arith.constant 0 : index
    %83 = vector.load %arg15[%c0_50, %c0_51] : memref<1x32xf32, #tpu.memory_space<vmem>>, vector<1x32xf32>
    %84 = vector.broadcast %83 : vector<1x32xf32> to vector<8x32xf32>
    %85 = arith.addf %82, %84 : vector<8x32xf32>
    %cst_52 = arith.constant 0.000000e+00 : f32
    %86 = vector.broadcast %cst_52 : f32 to vector<8x32xf32>
    %87 = arith.maximumf %85, %86 : vector<8x32xf32>
    %c0_53 = arith.constant 0 : index
    %c0_54 = arith.constant 0 : index
    %88 = vector.load %arg16[%c0_53, %c0_54] : memref<32x32xbf16, #tpu.memory_space<vmem>>, vector<32x32xbf16>
    %89 = arith.truncf %87 : vector<8x32xf32> to vector<8x32xbf16>
    %cst_55 = arith.constant dense<0.000000e+00> : vector<8x32xf32>
    %90 = tpu.matmul %89, %88, %cst_55 {dimension_numbers = #tpu.dot_dimension_numbers<[1], [0], [0], [1], [0, 0, 1, 1], [], []>} : vector<8x32xbf16>, vector<32x32xbf16>, vector<8x32xf32> -> vector<8x32xf32>
    %c0_56 = arith.constant 0 : index
    %c0_57 = arith.constant 0 : index
    %91 = vector.load %arg17[%c0_56, %c0_57] : memref<1x32xf32, #tpu.memory_space<vmem>>, vector<1x32xf32>
    %92 = vector.broadcast %91 : vector<1x32xf32> to vector<8x32xf32>
    %93 = arith.addf %90, %92 : vector<8x32xf32>
    %cst_58 = arith.constant 0.000000e+00 : f32
    %94 = vector.broadcast %cst_58 : f32 to vector<8x32xf32>
    %95 = arith.maximumf %93, %94 : vector<8x32xf32>
    %c0_59 = arith.constant 0 : index
    %c0_60 = arith.constant 0 : index
    %96 = vector.load %arg18[%c0_59, %c0_60] : memref<32x1xbf16, #tpu.memory_space<vmem>>, vector<32x1xbf16>
    %97 = arith.truncf %95 : vector<8x32xf32> to vector<8x32xbf16>
    %cst_61 = arith.constant dense<0.000000e+00> : vector<8x1xf32>
    %98 = tpu.matmul %97, %96, %cst_61 {dimension_numbers = #tpu.dot_dimension_numbers<[1], [0], [0], [1], [0, 0, 1, 1], [], []>} : vector<8x32xbf16>, vector<32x1xbf16>, vector<8x1xf32> -> vector<8x1xf32>
    %c0_62 = arith.constant 0 : index
    %c0_63 = arith.constant 0 : index
    %99 = vector.load %arg19[%c0_62, %c0_63] : memref<1x1xf32, #tpu.memory_space<vmem>>, vector<1x1xf32>
    %100 = vector.broadcast %99 : vector<1x1xf32> to vector<8x1xf32>
    %101 = arith.addf %98, %100 : vector<8x1xf32>
    %c0_64 = arith.constant 0 : index
    %c0_65 = arith.constant 0 : index
    %c0_66 = arith.constant 0 : index
    %102 = vector.load %arg20[%c0_64, %c0_65, %c0_66] : memref<1x8x1xf32, #tpu.memory_space<vmem>>, vector<1x8x1xf32>
    %103 = vector.shape_cast %102 : vector<1x8x1xf32> to vector<8x1xf32>
    %104 = vector.shape_cast %101 : vector<8x1xf32> to vector<1x8x1xf32>
    tpu.vector_store %arg20[%c0_64, %c0_65, %c0_66], %104 {strides = array<i32>} : memref<1x8x1xf32, #tpu.memory_space<vmem>>, vector<1x8x1xf32>,
    return
  }
  func.func @transform_0(%arg0: i32) -> (i32, i32, i32) {
    %c0_i32 = arith.constant 0 : i32
    %c0_i32_0 = arith.constant 0 : i32
    %c0_i32_1 = arith.constant 0 : i32
    return %arg0, %c0_i32, %c0_i32_0 : i32, i32, i32
  }
  func.func @transform_1(%arg0: i32) -> (i32, i32, i32) {
    %c0_i32 = arith.constant 0 : i32
    %c0_i32_0 = arith.constant 0 : i32
    %c0_i32_1 = arith.constant 0 : i32
    return %arg0, %c0_i32, %c0_i32_0 : i32, i32, i32
  }
  func.func @transform_2(%arg0: i32) -> (i32, i32) {
    %c0_i32 = arith.constant 0 : i32
    %c0_i32_0 = arith.constant 0 : i32
    %c0_i32_1 = arith.constant 0 : i32
    return %c0_i32, %c0_i32_0 : i32, i32
  }
  func.func @transform_3(%arg0: i32) -> (i32, i32) {
    %c0_i32 = arith.constant 0 : i32
    %c0_i32_0 = arith.constant 0 : i32
    %c0_i32_1 = arith.constant 0 : i32
    return %c0_i32, %c0_i32_0 : i32, i32
  }
  func.func @transform_4(%arg0: i32) -> (i32, i32) {
    %c0_i32 = arith.constant 0 : i32
    %c0_i32_0 = arith.constant 0 : i32
    %c0_i32_1 = arith.constant 0 : i32
    return %c0_i32, %c0_i32_0 : i32, i32
  }
  func.func @transform_5(%arg0: i32) -> (i32, i32) {
    %c0_i32 = arith.constant 0 : i32
    %c0_i32_0 = arith.constant 0 : i32
    %c0_i32_1 = arith.constant 0 : i32
    return %c0_i32, %c0_i32_0 : i32, i32
  }
  func.func @transform_6(%arg0: i32) -> (i32, i32) {
    %c0_i32 = arith.constant 0 : i32
    %c0_i32_0 = arith.constant 0 : i32
    %c0_i32_1 = arith.constant 0 : i32
    return %c0_i32, %c0_i32_0 : i32, i32
  }
  func.func @transform_7(%arg0: i32) -> (i32, i32) {
    %c0_i32 = arith.constant 0 : i32
    %c0_i32_0 = arith.constant 0 : i32
    %c0_i32_1 = arith.constant 0 : i32
    return %c0_i32, %c0_i32_0 : i32, i32
  }
  func.func @transform_8(%arg0: i32) -> (i32, i32) {
    %c0_i32 = arith.constant 0 : i32
    %c0_i32_0 = arith.constant 0 : i32
    %c0_i32_1 = arith.constant 0 : i32
    return %c0_i32, %c0_i32_0 : i32, i32
  }
  func.func @transform_9(%arg0: i32) -> (i32, i32) {
    %c0_i32 = arith.constant 0 : i32
    %c0_i32_0 = arith.constant 0 : i32
    %c0_i32_1 = arith.constant 0 : i32
    return %c0_i32, %c0_i32_0 : i32, i32
  }
  func.func @transform_10(%arg0: i32) -> (i32, i32) {
    %c0_i32 = arith.constant 0 : i32
    %c0_i32_0 = arith.constant 0 : i32
    %c0_i32_1 = arith.constant 0 : i32
    return %c0_i32, %c0_i32_0 : i32, i32
  }
  func.func @transform_11(%arg0: i32) -> (i32, i32) {
    %c0_i32 = arith.constant 0 : i32
    %c0_i32_0 = arith.constant 0 : i32
    %c0_i32_1 = arith.constant 0 : i32
    return %c0_i32, %c0_i32_0 : i32, i32
  }
  func.func @transform_12(%arg0: i32) -> (i32, i32) {
    %c0_i32 = arith.constant 0 : i32
    %c0_i32_0 = arith.constant 0 : i32
    %c0_i32_1 = arith.constant 0 : i32
    return %c0_i32, %c0_i32_0 : i32, i32
  }
  func.func @transform_13(%arg0: i32) -> (i32, i32) {
    %c0_i32 = arith.constant 0 : i32
    %c0_i32_0 = arith.constant 0 : i32
    %c0_i32_1 = arith.constant 0 : i32
    return %c0_i32, %c0_i32_0 : i32, i32
  }
  func.func @transform_14(%arg0: i32) -> (i32, i32) {
    %c0_i32 = arith.constant 0 : i32
    %c0_i32_0 = arith.constant 0 : i32
    %c0_i32_1 = arith.constant 0 : i32
    return %c0_i32, %c0_i32_0 : i32, i32
  }
  func.func @transform_15(%arg0: i32) -> (i32, i32) {
    %c0_i32 = arith.constant 0 : i32
    %c0_i32_0 = arith.constant 0 : i32
    %c0_i32_1 = arith.constant 0 : i32
    return %c0_i32, %c0_i32_0 : i32, i32
  }
  func.func @transform_16(%arg0: i32) -> (i32, i32) {
    %c0_i32 = arith.constant 0 : i32
    %c0_i32_0 = arith.constant 0 : i32
    %c0_i32_1 = arith.constant 0 : i32
    return %c0_i32, %c0_i32_0 : i32, i32
  }
  func.func @transform_17(%arg0: i32) -> (i32, i32) {
    %c0_i32 = arith.constant 0 : i32
    %c0_i32_0 = arith.constant 0 : i32
    %c0_i32_1 = arith.constant 0 : i32
    return %c0_i32, %c0_i32_0 : i32, i32
  }
  func.func @transform_18(%arg0: i32) -> (i32, i32) {
    %c0_i32 = arith.constant 0 : i32
    %c0_i32_0 = arith.constant 0 : i32
    %c0_i32_1 = arith.constant 0 : i32
    return %c0_i32, %c0_i32_0 : i32, i32
  }
  func.func @transform_19(%arg0: i32) -> (i32, i32, i32) {
    %c0_i32 = arith.constant 0 : i32
    %c0_i32_0 = arith.constant 0 : i32
    %c0_i32_1 = arith.constant 0 : i32
    return %arg0, %c0_i32, %c0_i32_0 : i32, i32, i32
  }
}

</mosaic_0001>

<llo_original>
// kernel: forward.1
$region0: #{forward.1}
  #allocation0 [shape = 'u32[]', space=smem, size = 0x4, offset = 0x4, fixed_abs, tag = 'smem constant byte address 0x4 - core index']
  #allocation1 [shape = 'u32[144,128]{1,0:T(1,128)}', space=vmem, size = 0x12000, scoped, tag = 'internal scratch']
  #allocation2 [shape = 'f32[1,1]{1,0:T(1,128)S(1)}', space=vmem, size = 0x200, scoped, tag = 'scoped memory for forward.1']
  %s0 = inlined_call_operand.vmem [shape: bf16[1,32,256], index: 0, kind: input, shape index: {}]
  %s1 = inlined_call_operand.vmem [shape: f32[1,32,5], index: 1, kind: input, shape index: {}]
  %s2 = inlined_call_operand.hbm [shape: bf16[256,1024], index: 2, kind: input, shape index: {}]
  %s3 = inlined_call_operand.hbm [shape: bf16[512,512], index: 3, kind: input, shape index: {}]
  %s4 = inlined_call_operand.hbm [shape: bf16[512,512], index: 4, kind: input, shape index: {}]
  %s5 = inlined_call_operand.vmem [shape: bf16[256,256], index: 5, kind: input, shape index: {}]
  %s6 = inlined_call_operand.vmem [shape: bf16[256,32], index: 6, kind: input, shape index: {}]
  %s7 = inlined_call_operand.vmem [shape: f32[1,32], index: 7, kind: input, shape index: {}]
  %s8 = inlined_call_operand.vmem [shape: f32[1,32], index: 8, kind: input, shape index: {}]
  %s9 = inlined_call_operand.vmem [shape: bf16[4,32], index: 9, kind: input, shape index: {}]
  %s10 = inlined_call_operand.vmem [shape: f32[1,32], index: 10, kind: input, shape index: {}]
  %s11 = inlined_call_operand.vmem [shape: bf16[128,64], index: 11, kind: input, shape index: {}]
  %s12 = inlined_call_operand.vmem [shape: f32[1,64], index: 12, kind: input, shape index: {}]
  %s13 = inlined_call_operand.vmem [shape: bf16[64,32], index: 13, kind: input, shape index: {}]
  %s14 = inlined_call_operand.vmem [shape: f32[1,32], index: 14, kind: input, shape index: {}]
  %s15 = inlined_call_operand.vmem [shape: bf16[32,32], index: 15, kind: input, shape index: {}]
  %s16 = inlined_call_operand.vmem [shape: f32[1,32], index: 16, kind: input, shape index: {}]
  %s17 = inlined_call_operand.vmem [shape: bf16[32,1], index: 17, kind: input, shape index: {}]
  %s18 = inlined_call_operand.<no memory space> [shape: f32[1,1], index: 18, kind: input, shape index: {}]
  %s19 = inlined_call_operand.vmem [shape: f32[1,8,1], index: 19, kind: output, shape index: {}]
  %s20 = sld [smem:[#allocation0]]
  $region98: #{forward.1} parent=0
    _
  %s22 = ssub.s32 1, %s20
  %s23 = scalar_select 0, %s22, %s20
  %v24 = vstv %s18
  %25 = vst [vmem:[#allocation2] sm:$0x1] %v24
  $region1: #{forward.1} parent=0
    #allocation3 [shape = 'u8[524288]{0}', space=vmem, size = 0x80000, scoped, tag = 'input window, operand 2, single buffered']
    #allocation4 [shape = 's32[1]{0}', space=sflag, size = 0x4, scoped, tag = 'scoped memory for forward.1']
    #allocation5 [shape = 'u8[524288]{0}', space=vmem, size = 0x80000, scoped, tag = 'input window, operand 3, single buffered']
    #allocation6 [shape = 's32[1]{0}', space=sflag, size = 0x4, scoped, tag = 'scoped memory for forward.1']
    #allocation7 [shape = 'u8[524288]{0}', space=vmem, size = 0x80000, scoped, tag = 'input window, operand 4, single buffered']
    %26 = vsyncpa [#allocation4], 0
    %27 = vsyncpa [#allocation6], 0
    // Predicated region
    $region2: #{forward.1} parent=1 // pred_check
      _
    $region3: #{forward.1} parent=1 // pred_check_branch
      %29 = sbr.rel (0) target = $region5
    $region4: #{forward.1} parent=1 // pred_region
      _
    $region5: #{forward.1} parent=1 // pred_fallthru
      _
    // Predicated region
    $region6: #{forward.1} parent=1 // pred_check
      _
    $region7: #{forward.1} parent=1 // pred_check_branch
      %31 = sbr.rel (0) target = $region9
    $region8: #{forward.1} parent=1 // pred_region
      _
    $region9: #{forward.1} parent=1 // pred_fallthru
      _
    // Predicated region
    $region10: #{forward.1} parent=1 // pred_check
      _
    $region11: #{forward.1} parent=1 // pred_check_branch
      %33 = sbr.rel (0) target = $region13
    $region12: #{forward.1} parent=1 // pred_region
      %s35 = ssub.s32 16384, 16384
      %36 = vsyncadd [#allocation4], %s35
      %s37 = sshll.u32 [#allocation3], 4
      %s38 = int_to_ptr.vmem [resolvable:$true] %s37
      %43 = dma.hbm_to_vmem [thread:$0]  %s2, 16384, %s38, [#allocation4], 512, 512, 32
    $region13: #{forward.1} parent=1 // pred_fallthru
      _
    // Predicated region
    $region14: #{forward.1} parent=1 // pred_check
      _
    $region15: #{forward.1} parent=1 // pred_check_branch
      %45 = sbr.rel (0) target = $region17
    $region16: #{forward.1} parent=1 // pred_region
      %s47 = ssub.s32 16384, 16384
      %48 = vsyncadd [#allocation6], %s47
      %s49 = sshll.u32 [#allocation5], 4
      %s50 = int_to_ptr.vmem [resolvable:$true] %s49
      %55 = dma.hbm_to_vmem [thread:$0]  %s3, 16384, %s50, [#allocation6], 256, 256, 16
    $region17: #{forward.1} parent=1 // pred_fallthru
      _
    // Predicated region
    $region18: #{forward.1} parent=1 // pred_check
      _
    $region19: #{forward.1} parent=1 // pred_check_branch
      %57 = sbr.rel (0) target = $region21
    $region20: #{forward.1} parent=1 // pred_region
      %s59 = ssub.s32 16384, 16384
      %60 = vsyncadd [#allocation6], %s59
      %s61 = sshll.u32 [#allocation7], 4
      %s62 = int_to_ptr.vmem [resolvable:$true] %s61
      %67 = dma.hbm_to_vmem [thread:$0]  %s4, 16384, %s62, [#allocation6], 256, 256, 16
    $region21: #{forward.1} parent=1 // pred_fallthru
      _
    // Predicated region
    $region22: #{forward.1} parent=1 // pred_check
      _
    $region23: #{forward.1} parent=1 // pred_check_branch
      %69 = sbr.rel (0) target = $region25
    $region24: #{forward.1} parent=1 // pred_region
      _
    $region25: #{forward.1} parent=1 // pred_fallthru
      _
    // Predicated region
    $region26: #{forward.1} parent=1 // pred_check
      _
    $region27: #{forward.1} parent=1 // pred_check_branch
      %71 = sbr.rel (0) target = $region29
    $region28: #{forward.1} parent=1 // pred_region
      _
    $region29: #{forward.1} parent=1 // pred_fallthru
      _
    // Predicated region
    $region30: #{forward.1} parent=1 // pred_check
      _
    $region31: #{forward.1} parent=1 // pred_check_branch
      %73 = sbr.rel (0) target = $region33
    $region32: #{forward.1} parent=1 // pred_region
      _
    $region33: #{forward.1} parent=1 // pred_fallthru
      _
    // Predicated region
    $region34: #{forward.1} parent=1 // pred_check
      _
    $region35: #{forward.1} parent=1 // pred_check_branch
      %75 = sbr.rel (0) target = $region37
    $region36: #{forward.1} parent=1 // pred_region
      _
    $region37: #{forward.1} parent=1 // pred_fallthru
      _
    // Predicated region
    $region38: #{forward.1} parent=1 // pred_check
      _
    $region39: #{forward.1} parent=1 // pred_check_branch
      %77 = sbr.rel (0) target = $region41
    $region40: #{forward.1} parent=1 // pred_region
      _
    $region41: #{forward.1} parent=1 // pred_fallthru
      _
    // Predicated region
    $region42: #{forward.1} parent=1 // pred_check
      _
    $region43: #{forward.1} parent=1 // pred_check_branch
      %79 = sbr.rel (0) target = $region45
    $region44: #{forward.1} parent=1 // pred_region
      _
    $region45: #{forward.1} parent=1 // pred_fallthru
      _
    // Predicated region
    $region46: #{forward.1} parent=1 // pred_check
      _
    $region47: #{forward.1} parent=1 // pred_check_branch
      %81 = sbr.rel (0) target = $region49
    $region48: #{forward.1} parent=1 // pred_region
      _
    $region49: #{forward.1} parent=1 // pred_fallthru
      _
    // Predicated region
    $region50: #{forward.1} parent=1 // pred_check
      _
    $region51: #{forward.1} parent=1 // pred_check_branch
      %83 = sbr.rel (0) target = $region53
    $region52: #{forward.1} parent=1 // pred_region
      _
    $region53: #{forward.1} parent=1 // pred_fallthru
      _
    // Predicated region
    $region54: #{forward.1} parent=1 // pred_check
      _
    $region55: #{forward.1} parent=1 // pred_check_branch
      %85 = sbr.rel (0) target = $region57
    $region56: #{forward.1} parent=1 // pred_region
      _
    $region57: #{forward.1} parent=1 // pred_fallthru
      _
    // Predicated region
    $region58: #{forward.1} parent=1 // pred_check
      _
    $region59: #{forward.1} parent=1 // pred_check_branch
      %87 = sbr.rel (0) target = $region61
    $region60: #{forward.1} parent=1 // pred_region
      _
    $region61: #{forward.1} parent=1 // pred_fallthru
      _
    // Predicated region
    $region62: #{forward.1} parent=1 // pred_check
      _
    $region63: #{forward.1} parent=1 // pred_check_branch
      %89 = sbr.rel (0) target = $region65
    $region64: #{forward.1} parent=1 // pred_region
      _
    $region65: #{forward.1} parent=1 // pred_fallthru
      _
    // Predicated region
    $region66: #{forward.1} parent=1 // pred_check
      _
    $region67: #{forward.1} parent=1 // pred_check_branch
      %91 = sbr.rel (0) target = $region69
    $region68: #{forward.1} parent=1 // pred_region
      _
    $region69: #{forward.1} parent=1 // pred_fallthru
      _
    // Predicated region
    $region70: #{forward.1} parent=1 // pred_check
      _
    $region71: #{forward.1} parent=1 // pred_check_branch
      %93 = sbr.rel (0) target = $region73
    $region72: #{forward.1} parent=1 // pred_region
      _
    $region73: #{forward.1} parent=1 // pred_fallthru
      _
    // Predicated region
    $region74: #{forward.1} parent=1 // pred_check
      _
    $region75: #{forward.1} parent=1 // pred_check_branch
      %95 = sbr.rel (0) target = $region77
    $region76: #{forward.1} parent=1 // pred_region
      _
    $region77: #{forward.1} parent=1 // pred_fallthru
      _
    // Predicated region
    $region78: #{forward.1} parent=1 // pred_check
      _
    $region79: #{forward.1} parent=1 // pred_check_branch
      %97 = sbr.rel (0) target = $region81
    $region80: #{forward.1} parent=1 // pred_region
      %98 = dma.done [#allocation4], 16384
    $region81: #{forward.1} parent=1 // pred_fallthru
      _
    // Predicated region
    $region82: #{forward.1} parent=1 // pred_check
      _
    $region83: #{forward.1} parent=1 // pred_check_branch
      %100 = sbr.rel (0) target = $region85
    $region84: #{forward.1} parent=1 // pred_region
      %101 = dma.done [#allocation6], 16384
    $region85: #{forward.1} parent=1 // pred_fallthru
      _
    // Predicated region
    $region86: #{forward.1} parent=1 // pred_check
      _
    $region87: #{forward.1} parent=1 // pred_check_branch
      %103 = sbr.rel (0) target = $region89
    $region88: #{forward.1} parent=1 // pred_region
      %104 = dma.done [#allocation6], 16384
    $region89: #{forward.1} parent=1 // pred_fallthru
      _
    %v106 = vld [vmem:[%s0] sm:$0xff]
    %v107 = vld [vmem:[%s0 + $0x8] sm:$0xff]
    %v108 = vld [vmem:[%s0 + $0x10] sm:$0xff]
    %v109 = vld [vmem:[%s0 + $0x18] sm:$0xff]
    %v110 = vld [vmem:[%s1] sm:$0xff]
    %v111 = vld [vmem:[%s1 + $0x8] sm:$0xff]
    %v112 = vld [vmem:[%s1 + $0x10] sm:$0xff]
    %v113 = vld [vmem:[%s1 + $0x18] sm:$0xff]
    %v114 = vld [vmem:[#allocation3] sm:$0xff]
    %v115 = vld [vmem:[#allocation3 + $0x8] sm:$0xff]
    %v116 = vld [vmem:[#allocation3 + $0x10] sm:$0xff]
    %v117 = vld [vmem:[#allocation3 + $0x18] sm:$0xff]
    %v118 = vld [vmem:[#allocation3 + $0x20] sm:$0xff]
    %v119 = vld [vmem:[#allocation3 + $0x28] sm:$0xff]
    %v120 = vld [vmem:[#allocation3 + $0x30] sm:$0xff]
    %v121 = vld [vmem:[#allocation3 + $0x38] sm:$0xff]
    %v122 = vld [vmem:[#allocation3 + $0x40] sm:$0xff]
    %v123 = vld [vmem:[#allocation3 + $0x48] sm:$0xff]
    %v124 = vld [vmem:[#allocation3 + $0x50] sm:$0xff]
    %v125 = vld [vmem:[#allocation3 + $0x58] sm:$0xff]
    %v126 = vld [vmem:[#allocation3 + $0x60] sm:$0xff]
    %v127 = vld [vmem:[#allocation3 + $0x68] sm:$0xff]
    %v128 = vld [vmem:[#allocation3 + $0x70] sm:$0xff]
    %v129 = vld [vmem:[#allocation3 + $0x78] sm:$0xff]
    %v130 = vld [vmem:[#allocation3 + $0x80] sm:$0xff]
    %v131 = vld [vmem:[#allocation3 + $0x88] sm:$0xff]
    %v132 = vld [vmem:[#allocation3 + $0x90] sm:$0xff]
    %v133 = vld [vmem:[#allocation3 + $0x98] sm:$0xff]
    %v134 = vld [vmem:[#allocation3 + $0xa0] sm:$0xff]
    %v135 = vld [vmem:[#allocation3 + $0xa8] sm:$0xff]
    %v136 = vld [vmem:[#allocation3 + $0xb0] sm:$0xff]
    %v137 = vld [vmem:[#allocation3 + $0xb8] sm:$0xff]
    %v138 = vld [vmem:[#allocation3 + $0xc0] sm:$0xff]
    %v139 = vld [vmem:[#allocation3 + $0xc8] sm:$0xff]
    %v140 = vld [vmem:[#allocation3 + $0xd0] sm:$0xff]
    %v141 = vld [vmem:[#allocation3 + $0xd8] sm:$0xff]
    %v142 = vld [vmem:[#allocation3 + $0xe0] sm:$0xff]
    %v143 = vld [vmem:[#allocation3 + $0xe8] sm:$0xff]
    %v144 = vld [vmem:[#allocation3 + $0xf0] sm:$0xff]
    %v145 = vld [vmem:[#allocation3 + $0xf8] sm:$0xff]
    %v146 = vld [vmem:[#allocation3 + $0x100] sm:$0xff]
    %v147 = vld [vmem:[#allocation3 + $0x108] sm:$0xff]
    %v148 = vld [vmem:[#allocation3 + $0x110] sm:$0xff]
    %v149 = vld [vmem:[#allocation3 + $0x118] sm:$0xff]
    %v150 = vld [vmem:[#allocation3 + $0x120] sm:$0xff]
    %v151 = vld [vmem:[#allocation3 + $0x128] sm:$0xff]
    %v152 = vld [vmem:[#allocation3 + $0x130] sm:$0xff]
    %v153 = vld [vmem:[#allocation3 + $0x138] sm:$0xff]
    %v154 = vld [vmem:[#allocation3 + $0x140] sm:$0xff]
    %v155 = vld [vmem:[#allocation3 + $0x148] sm:$0xff]
    %v156 = vld [vmem:[#allocation3 + $0x150] sm:$0xff]
    %v157 = vld [vmem:[#allocation3 + $0x158] sm:$0xff]
    %v158 = vld [vmem:[#allocation3 + $0x160] sm:$0xff]
    %v159 = vld [vmem:[#allocation3 + $0x168] sm:$0xff]
    %v160 = vld [vmem:[#allocation3 + $0x170] sm:$0xff]
    %v161 = vld [vmem:[#allocation3 + $0x178] sm:$0xff]
    %v162 = vld [vmem:[#allocation3 + $0x180] sm:$0xff]
    %v163 = vld [vmem:[#allocation3 + $0x188] sm:$0xff]
    %v164 = vld [vmem:[#allocation3 + $0x190] sm:$0xff]
    %v165 = vld [vmem:[#allocation3 + $0x198] sm:$0xff]
    %v166 = vld [vmem:[#allocation3 + $0x1a0] sm:$0xff]
    %v167 = vld [vmem:[#allocation3 + $0x1a8] sm:$0xff]
    %v168 = vld [vmem:[#allocation3 + $0x1b0] sm:$0xff]
    %v169 = vld [vmem:[#allocation3 + $0x1b8] sm:$0xff]
    %v170 = vld [vmem:[#allocation3 + $0x1c0] sm:$0xff]
    %v171 = vld [vmem:[#allocation3 + $0x1c8] sm:$0xff]
    %v172 = vld [vmem:[#allocation3 + $0x1d0] sm:$0xff]
    %v173 = vld [vmem:[#allocation3 + $0x1d8] sm:$0xff]
    %v174 = vld [vmem:[#allocation3 + $0x1e0] sm:$0xff]
    %v175 = vld [vmem:[#allocation3 + $0x1e8] sm:$0xff]
    %v176 = vld [vmem:[#allocation3 + $0x1f0] sm:$0xff]
    %v177 = vld [vmem:[#allocation3 + $0x1f8] sm:$0xff]
    %v178 = vld [vmem:[#allocation3 + $0x200] sm:$0xff]
    %v179 = vld [vmem:[#allocation3 + $0x208] sm:$0xff]
    %v180 = vld [vmem:[#allocation3 + $0x210] sm:$0xff]
    %v181 = vld [vmem:[#allocation3 + $0x218] sm:$0xff]
    %v182 = vld [vmem:[#allocation3 + $0x220] sm:$0xff]
    %v183 = vld [vmem:[#allocation3 + $0x228] sm:$0xff]
    %v184 = vld [vmem:[#allocation3 + $0x230] sm:$0xff]
    %v185 = vld [vmem:[#allocation3 + $0x238] sm:$0xff]
    %v186 = vld [vmem:[#allocation3 + $0x240] sm:$0xff]
    %v187 = vld [vmem:[#allocation3 + $0x248] sm:$0xff]
    %v188 = vld [vmem:[#allocation3 + $0x250] sm:$0xff]
    %v189 = vld [vmem:[#allocation3 + $0x258] sm:$0xff]
    %v190 = vld [vmem:[#allocation3 + $0x260] sm:$0xff]
    %v191 = vld [vmem:[#allocation3 + $0x268] sm:$0xff]
    %v192 = vld [vmem:[#allocation3 + $0x270] sm:$0xff]
    %v193 = vld [vmem:[#allocation3 + $0x278] sm:$0xff]
    %v194 = vld [vmem:[#allocation3 + $0x280] sm:$0xff]
    %v195 = vld [vmem:[#allocation3 + $0x288] sm:$0xff]
    %v196 = vld [vmem:[#allocation3 + $0x290] sm:$0xff]
    %v197 = vld [vmem:[#allocation3 + $0x298] sm:$0xff]
    %v198 = vld [vmem:[#allocation3 + $0x2a0] sm:$0xff]
    %v199 = vld [vmem:[#allocation3 + $0x2a8] sm:$0xff]
    %v200 = vld [vmem:[#allocation3 + $0x2b0] sm:$0xff]
    %v201 = vld [vmem:[#allocation3 + $0x2b8] sm:$0xff]
    %v202 = vld [vmem:[#allocation3 + $0x2c0] sm:$0xff]
    %v203 = vld [vmem:[#allocation3 + $0x2c8] sm:$0xff]
    %v204 = vld [vmem:[#allocation3 + $0x2d0] sm:$0xff]
    %v205 = vld [vmem:[#allocation3 + $0x2d8] sm:$0xff]
    %v206 = vld [vmem:[#allocation3 + $0x2e0] sm:$0xff]
    %v207 = vld [vmem:[#allocation3 + $0x2e8] sm:$0xff]
    %v208 = vld [vmem:[#allocation3 + $0x2f0] sm:$0xff]
    %v209 = vld [vmem:[#allocation3 + $0x2f8] sm:$0xff]
    %v210 = vld [vmem:[#allocation3 + $0x300] sm:$0xff]
    %v211 = vld [vmem:[#allocation3 + $0x308] sm:$0xff]
    %v212 = vld [vmem:[#allocation3 + $0x310] sm:$0xff]
    %v213 = vld [vmem:[#allocation3 + $0x318] sm:$0xff]
    %v214 = vld [vmem:[#allocation3 + $0x320] sm:$0xff]
    %v215 = vld [vmem:[#allocation3 + $0x328] sm:$0xff]
    %v216 = vld [vmem:[#allocation3 + $0x330] sm:$0xff]
    %v217 = vld [vmem:[#allocation3 + $0x338] sm:$0xff]
    %v218 = vld [vmem:[#allocation3 + $0x340] sm:$0xff]
    %v219 = vld [vmem:[#allocation3 + $0x348] sm:$0xff]
    %v220 = vld [vmem:[#allocation3 + $0x350] sm:$0xff]
    %v221 = vld [vmem:[#allocation3 + $0x358] sm:$0xff]
    %v222 = vld [vmem:[#allocation3 + $0x360] sm:$0xff]
    %v223 = vld [vmem:[#allocation3 + $0x368] sm:$0xff]
    %v224 = vld [vmem:[#allocation3 + $0x370] sm:$0xff]
    %v225 = vld [vmem:[#allocation3 + $0x378] sm:$0xff]
    %v226 = vld [vmem:[#allocation3 + $0x380] sm:$0xff]
    %v227 = vld [vmem:[#allocation3 + $0x388] sm:$0xff]
    %v228 = vld [vmem:[#allocation3 + $0x390] sm:$0xff]
    %v229 = vld [vmem:[#allocation3 + $0x398] sm:$0xff]
    %v230 = vld [vmem:[#allocation3 + $0x3a0] sm:$0xff]
    %v231 = vld [vmem:[#allocation3 + $0x3a8] sm:$0xff]
    %v232 = vld [vmem:[#allocation3 + $0x3b0] sm:$0xff]
    %v233 = vld [vmem:[#allocation3 + $0x3b8] sm:$0xff]
    %v234 = vld [vmem:[#allocation3 + $0x3c0] sm:$0xff]
    %v235 = vld [vmem:[#allocation3 + $0x3c8] sm:$0xff]
    %v236 = vld [vmem:[#allocation3 + $0x3d0] sm:$0xff]
    %v237 = vld [vmem:[#allocation3 + $0x3d8] sm:$0xff]
    %v238 = vld [vmem:[#allocation3 + $0x3e0] sm:$0xff]
    %v239 = vld [vmem:[#allocation3 + $0x3e8] sm:$0xff]
    %v240 = vld [vmem:[#allocation3 + $0x3f0] sm:$0xff]
    %v241 = vld [vmem:[#allocation3 + $0x3f8] sm:$0xff]
    %v246 = vunpack.c.l.b16 %v106
    %v247 = vunpack.c.h.b16 %v106
    %v248 = vunpack.c.l.b16 %v107
    %v249 = vunpack.c.h.b16 %v107
    %v250 = vunpack.c.l.b16 %v108
    %v251 = vunpack.c.h.b16 %v108
    %v252 = vunpack.c.l.b16 %v109
    %v253 = vunpack.c.h.b16 %v109
    %v254 = vpack.c.b16 %v248, %v246
    %v255 = vpack.c.b16 %v249, %v247
    %v256 = vpack.c.b16 %v252, %v250
    %v257 = vpack.c.b16 %v253, %v251
    %v390 = vunpack.c.l.b16 %v114
    %v391 = vunpack.c.h.b16 %v114
    %v392 = vunpack.c.l.b16 %v115
    %v393 = vunpack.c.h.b16 %v115
    %v394 = vunpack.c.l.b16 %v116
    %v395 = vunpack.c.h.b16 %v116
    %v396 = vunpack.c.l.b16 %v117
    %v397 = vunpack.c.h.b16 %v117
    %v398 = vunpack.c.l.b16 %v118
    %v399 = vunpack.c.h.b16 %v118
    %v400 = vunpack.c.l.b16 %v119
    %v401 = vunpack.c.h.b16 %v119
    %v402 = vunpack.c.l.b16 %v120
    %v403 = vunpack.c.h.b16 %v120
    %v404 = vunpack.c.l.b16 %v121
    %v405 = vunpack.c.h.b16 %v121
    %v406 = vunpack.c.l.b16 %v122
    %v407 = vunpack.c.h.b16 %v122
    %v408 = vunpack.c.l.b16 %v123
    %v409 = vunpack.c.h.b16 %v123
    %v410 = vunpack.c.l.b16 %v124
    %v411 = vunpack.c.h.b16 %v124
    %v412 = vunpack.c.l.b16 %v125
    %v413 = vunpack.c.h.b16 %v125
    %v414 = vunpack.c.l.b16 %v126
    %v415 = vunpack.c.h.b16 %v126
    %v416 = vunpack.c.l.b16 %v127
    %v417 = vunpack.c.h.b16 %v127
    %v418 = vunpack.c.l.b16 %v128
    %v419 = vunpack.c.h.b16 %v128
    %v420 = vunpack.c.l.b16 %v129
    %v421 = vunpack.c.h.b16 %v129
    %v422 = vunpack.c.l.b16 %v130
    %v423 = vunpack.c.h.b16 %v130
    %v424 = vunpack.c.l.b16 %v131
    %v425 = vunpack.c.h.b16 %v131
    %v426 = vunpack.c.l.b16 %v132
    %v427 = vunpack.c.h.b16 %v132
    %v428 = vunpack.c.l.b16 %v133
    %v429 = vunpack.c.h.b16 %v133
    %v430 = vunpack.c.l.b16 %v134
    %v431 = vunpack.c.h.b16 %v134
    %v432 = vunpack.c.l.b16 %v135
    %v433 = vunpack.c.h.b16 %v135
    %v434 = vunpack.c.l.b16 %v136
    %v435 = vunpack.c.h.b16 %v136
    %v436 = vunpack.c.l.b16 %v137
    %v437 = vunpack.c.h.b16 %v137
    %v438 = vunpack.c.l.b16 %v138
    %v439 = vunpack.c.h.b16 %v138
    %v440 = vunpack.c.l.b16 %v139
    %v441 = vunpack.c.h.b16 %v139
    %v442 = vunpack.c.l.b16 %v140
    %v443 = vunpack.c.h.b16 %v140
    %v444 = vunpack.c.l.b16 %v141
    %v445 = vunpack.c.h.b16 %v141
    %v446 = vunpack.c.l.b16 %v142
    %v447 = vunpack.c.h.b16 %v142
    %v448 = vunpack.c.l.b16 %v143
    %v449 = vunpack.c.h.b16 %v143
    %v450 = vunpack.c.l.b16 %v144
    %v451 = vunpack.c.h.b16 %v144
    %v452 = vunpack.c.l.b16 %v145
    %v453 = vunpack.c.h.b16 %v145
    %v454 = vunpack.c.l.b16 %v146
    %v455 = vunpack.c.h.b16 %v146
    %v456 = vunpack.c.l.b16 %v147
    %v457 = vunpack.c.h.b16 %v147
    %v458 = vunpack.c.l.b16 %v148
    %v459 = vunpack.c.h.b16 %v148
    %v460 = vunpack.c.l.b16 %v149
    %v461 = vunpack.c.h.b16 %v149
    %v462 = vunpack.c.l.b16 %v150
    %v463 = vunpack.c.h.b16 %v150
    %v464 = vunpack.c.l.b16 %v151
    %v465 = vunpack.c.h.b16 %v151
    %v466 = vunpack.c.l.b16 %v152
    %v467 = vunpack.c.h.b16 %v152
    %v468 = vunpack.c.l.b16 %v153
    %v469 = vunpack.c.h.b16 %v153
    %v470 = vunpack.c.l.b16 %v154
    %v471 = vunpack.c.h.b16 %v154
    %v472 = vunpack.c.l.b16 %v155
    %v473 = vunpack.c.h.b16 %v155
    %v474 = vunpack.c.l.b16 %v156
    %v475 = vunpack.c.h.b16 %v156
    %v476 = vunpack.c.l.b16 %v157
    %v477 = vunpack.c.h.b16 %v157
    %v478 = vunpack.c.l.b16 %v158
    %v479 = vunpack.c.h.b16 %v158
    %v480 = vunpack.c.l.b16 %v159
    %v481 = vunpack.c.h.b16 %v159
    %v482 = vunpack.c.l.b16 %v160
    %v483 = vunpack.c.h.b16 %v160
    %v484 = vunpack.c.l.b16 %v161
    %v485 = vunpack.c.h.b16 %v161
    %v486 = vunpack.c.l.b16 %v162
    %v487 = vunpack.c.h.b16 %v162
    %v488 = vunpack.c.l.b16 %v163
    %v489 = vunpack.c.h.b16 %v163
    %v490 = vunpack.c.l.b16 %v164
    %v491 = vunpack.c.h.b16 %v164
    %v492 = vunpack.c.l.b16 %v165
    %v493 = vunpack.c.h.b16 %v165
    %v494 = vunpack.c.l.b16 %v166
    %v495 = vunpack.c.h.b16 %v166
    %v496 = vunpack.c.l.b16 %v167
    %v497 = vunpack.c.h.b16 %v167
    %v498 = vunpack.c.l.b16 %v168
    %v499 = vunpack.c.h.b16 %v168
    %v500 = vunpack.c.l.b16 %v169
    %v501 = vunpack.c.h.b16 %v169
    %v502 = vunpack.c.l.b16 %v170
    %v503 = vunpack.c.h.b16 %v170
    %v504 = vunpack.c.l.b16 %v171
    %v505 = vunpack.c.h.b16 %v171
    %v506 = vunpack.c.l.b16 %v172
    %v507 = vunpack.c.h.b16 %v172
    %v508 = vunpack.c.l.b16 %v173
    %v509 = vunpack.c.h.b16 %v173
    %v510 = vunpack.c.l.b16 %v174
    %v511 = vunpack.c.h.b16 %v174
    %v512 = vunpack.c.l.b16 %v175
    %v513 = vunpack.c.h.b16 %v175
    %v514 = vunpack.c.l.b16 %v176
    %v515 = vunpack.c.h.b16 %v176
    %v516 = vunpack.c.l.b16 %v177
    %v517 = vunpack.c.h.b16 %v177
    %v518 = vunpack.c.l.b16 %v178
    %v519 = vunpack.c.h.b16 %v178
    %v520 = vunpack.c.l.b16 %v179
    %v521 = vunpack.c.h.b16 %v179
    %v522 = vunpack.c.l.b16 %v180
    %v523 = vunpack.c.h.b16 %v180
    %v524 = vunpack.c.l.b16 %v181
    %v525 = vunpack.c.h.b16 %v181
    %v526 = vunpack.c.l.b16 %v182
    %v527 = vunpack.c.h.b16 %v182
    %v528 = vunpack.c.l.b16 %v183
    %v529 = vunpack.c.h.b16 %v183
    %v530 = vunpack.c.l.b16 %v184
    %v531 = vunpack.c.h.b16 %v184
    %v532 = vunpack.c.l.b16 %v185
    %v533 = vunpack.c.h.b16 %v185
    %v534 = vunpack.c.l.b16 %v186
    %v535 = vunpack.c.h.b16 %v186
    %v536 = vunpack.c.l.b16 %v187
    %v537 = vunpack.c.h.b16 %v187
    %v538 = vunpack.c.l.b16 %v188
    %v539 = vunpack.c.h.b16 %v188
    %v540 = vunpack.c.l.b16 %v189
    %v541 = vunpack.c.h.b16 %v189
    %v542 = vunpack.c.l.b16 %v190
    %v543 = vunpack.c.h.b16 %v190
    %v544 = vunpack.c.l.b16 %v191
    %v545 = vunpack.c.h.b16 %v191
    %v546 = vunpack.c.l.b16 %v192
    %v547 = vunpack.c.h.b16 %v192
    %v548 = vunpack.c.l.b16 %v193
    %v549 = vunpack.c.h.b16 %v193
    %v550 = vunpack.c.l.b16 %v194
    %v551 = vunpack.c.h.b16 %v194
    %v552 = vunpack.c.l.b16 %v195
    %v553 = vunpack.c.h.b16 %v195
    %v554 = vunpack.c.l.b16 %v196
    %v555 = vunpack.c.h.b16 %v196
    %v556 = vunpack.c.l.b16 %v197
    %v557 = vunpack.c.h.b16 %v197
    %v558 = vunpack.c.l.b16 %v198
    %v559 = vunpack.c.h.b16 %v198
    %v560 = vunpack.c.l.b16 %v199
    %v561 = vunpack.c.h.b16 %v199
    %v562 = vunpack.c.l.b16 %v200
    %v563 = vunpack.c.h.b16 %v200
    %v564 = vunpack.c.l.b16 %v201
    %v565 = vunpack.c.h.b16 %v201
    %v566 = vunpack.c.l.b16 %v202
    %v567 = vunpack.c.h.b16 %v202
    %v568 = vunpack.c.l.b16 %v203
    %v569 = vunpack.c.h.b16 %v203
    %v570 = vunpack.c.l.b16 %v204
    %v571 = vunpack.c.h.b16 %v204
    %v572 = vunpack.c.l.b16 %v205
    %v573 = vunpack.c.h.b16 %v205
    %v574 = vunpack.c.l.b16 %v206
    %v575 = vunpack.c.h.b16 %v206
    %v576 = vunpack.c.l.b16 %v207
    %v577 = vunpack.c.h.b16 %v207
    %v578 = vunpack.c.l.b16 %v208
    %v579 = vunpack.c.h.b16 %v208
    %v580 = vunpack.c.l.b16 %v209
    %v581 = vunpack.c.h.b16 %v209
    %v582 = vunpack.c.l.b16 %v210
    %v583 = vunpack.c.h.b16 %v210
    %v584 = vunpack.c.l.b16 %v211
    %v585 = vunpack.c.h.b16 %v211
    %v586 = vunpack.c.l.b16 %v212
    %v587 = vunpack.c.h.b16 %v212
    %v588 = vunpack.c.l.b16 %v213
    %v589 = vunpack.c.h.b16 %v213
    %v590 = vunpack.c.l.b16 %v214
    %v591 = vunpack.c.h.b16 %v214
    %v592 = vunpack.c.l.b16 %v215
    %v593 = vunpack.c.h.b16 %v215
    %v594 = vunpack.c.l.b16 %v216
    %v595 = vunpack.c.h.b16 %v216
    %v596 = vunpack.c.l.b16 %v217
    %v597 = vunpack.c.h.b16 %v217
    %v598 = vunpack.c.l.b16 %v218
    %v599 = vunpack.c.h.b16 %v218
    %v600 = vunpack.c.l.b16 %v219
    %v601 = vunpack.c.h.b16 %v219
    %v602 = vunpack.c.l.b16 %v220
    %v603 = vunpack.c.h.b16 %v220
    %v604 = vunpack.c.l.b16 %v221
    %v605 = vunpack.c.h.b16 %v221
    %v606 = vunpack.c.l.b16 %v222
    %v607 = vunpack.c.h.b16 %v222
    %v608 = vunpack.c.l.b16 %v223
    %v609 = vunpack.c.h.b16 %v223
    %v610 = vunpack.c.l.b16 %v224
    %v611 = vunpack.c.h.b16 %v224
    %v612 = vunpack.c.l.b16 %v225
    %v613 = vunpack.c.h.b16 %v225
    %v614 = vunpack.c.l.b16 %v226
    %v615 = vunpack.c.h.b16 %v226
    %v616 = vunpack.c.l.b16 %v227
    %v617 = vunpack.c.h.b16 %v227
    %v618 = vunpack.c.l.b16 %v228
    %v619 = vunpack.c.h.b16 %v228
    %v620 = vunpack.c.l.b16 %v229
    %v621 = vunpack.c.h.b16 %v229
    %v622 = vunpack.c.l.b16 %v230
    %v623 = vunpack.c.h.b16 %v230
    %v624 = vunpack.c.l.b16 %v231
    %v625 = vunpack.c.h.b16 %v231
    %v626 = vunpack.c.l.b16 %v232
    %v627 = vunpack.c.h.b16 %v232
    %v628 = vunpack.c.l.b16 %v233
    %v629 = vunpack.c.h.b16 %v233
    %v630 = vunpack.c.l.b16 %v234
    %v631 = vunpack.c.h.b16 %v234
    %v632 = vunpack.c.l.b16 %v235
    %v633 = vunpack.c.h.b16 %v235
    %v634 = vunpack.c.l.b16 %v236
    %v635 = vunpack.c.h.b16 %v236
    %v636 = vunpack.c.l.b16 %v237
    %v637 = vunpack.c.h.b16 %v237
    %v638 = vunpack.c.l.b16 %v238
    %v639 = vunpack.c.h.b16 %v238
    %v640 = vunpack.c.l.b16 %v239
    %v641 = vunpack.c.h.b16 %v239
    %v642 = vunpack.c.l.b16 %v240
    %v643 = vunpack.c.h.b16 %v240
    %v644 = vunpack.c.l.b16 %v241
    %v645 = vunpack.c.h.b16 %v241
    %v646 = vpack.c.b16 %v398, %v390
    %v647 = vpack.c.b16 %v399, %v391
    %v648 = vpack.c.b16 %v400, %v392
    %v649 = vpack.c.b16 %v401, %v393
    %v650 = vpack.c.b16 %v402, %v394
    %v651 = vpack.c.b16 %v403, %v395
    %v652 = vpack.c.b16 %v404, %v396
    %v653 = vpack.c.b16 %v405, %v397
    %v654 = vpack.c.b16 %v414, %v406
    %v655 = vpack.c.b16 %v415, %v407
    %v656 = vpack.c.b16 %v416, %v408
    %v657 = vpack.c.b16 %v417, %v409
    %v658 = vpack.c.b16 %v418, %v410
    %v659 = vpack.c.b16 %v419, %v411
    %v660 = vpack.c.b16 %v420, %v412
    %v661 = vpack.c.b16 %v421, %v413
    %v662 = vpack.c.b16 %v430, %v422
    %v663 = vpack.c.b16 %v431, %v423
    %v664 = vpack.c.b16 %v432, %v424
    %v665 = vpack.c.b16 %v433, %v425
    %v666 = vpack.c.b16 %v434, %v426
    %v667 = vpack.c.b16 %v435, %v427
    %v668 = vpack.c.b16 %v436, %v428
    %v669 = vpack.c.b16 %v437, %v429
    %v670 = vpack.c.b16 %v446, %v438
    %v671 = vpack.c.b16 %v447, %v439
    %v672 = vpack.c.b16 %v448, %v440
    %v673 = vpack.c.b16 %v449, %v441
    %v674 = vpack.c.b16 %v450, %v442
    %v675 = vpack.c.b16 %v451, %v443
    %v676 = vpack.c.b16 %v452, %v444
    %v677 = vpack.c.b16 %v453, %v445
    %v678 = vpack.c.b16 %v462, %v454
    %v679 = vpack.c.b16 %v463, %v455
    %v680 = vpack.c.b16 %v464, %v456
    %v681 = vpack.c.b16 %v465, %v457
    %v682 = vpack.c.b16 %v466, %v458
    %v683 = vpack.c.b16 %v467, %v459
    %v684 = vpack.c.b16 %v468, %v460
    %v685 = vpack.c.b16 %v469, %v461
    %v686 = vpack.c.b16 %v478, %v470
    %v687 = vpack.c.b16 %v479, %v471
    %v688 = vpack.c.b16 %v480, %v472
    %v689 = vpack.c.b16 %v481, %v473
    %v690 = vpack.c.b16 %v482, %v474
    %v691 = vpack.c.b16 %v483, %v475
    %v692 = vpack.c.b16 %v484, %v476
    %v693 = vpack.c.b16 %v485, %v477
    %v694 = vpack.c.b16 %v494, %v486
    %v695 = vpack.c.b16 %v495, %v487
    %v696 = vpack.c.b16 %v496, %v488
    %v697 = vpack.c.b16 %v497, %v489
    %v698 = vpack.c.b16 %v498, %v490
    %v699 = vpack.c.b16 %v499, %v491
    %v700 = vpack.c.b16 %v500, %v492
    %v701 = vpack.c.b16 %v501, %v493
    %v702 = vpack.c.b16 %v510, %v502
    %v703 = vpack.c.b16 %v511, %v503
    %v704 = vpack.c.b16 %v512, %v504
    %v705 = vpack.c.b16 %v513, %v505
    %v706 = vpack.c.b16 %v514, %v506
    %v707 = vpack.c.b16 %v515, %v507
    %v708 = vpack.c.b16 %v516, %v508
    %v709 = vpack.c.b16 %v517, %v509
    %v710 = vpack.c.b16 %v526, %v518
    %v711 = vpack.c.b16 %v527, %v519
    %v712 = vpack.c.b16 %v528, %v520
    %v713 = vpack.c.b16 %v529, %v521
    %v714 = vpack.c.b16 %v530, %v522
    %v715 = vpack.c.b16 %v531, %v523
    %v716 = vpack.c.b16 %v532, %v524
    %v717 = vpack.c.b16 %v533, %v525
    %v718 = vpack.c.b16 %v542, %v534
    %v719 = vpack.c.b16 %v543, %v535
    %v720 = vpack.c.b16 %v544, %v536
    %v721 = vpack.c.b16 %v545, %v537
    %v722 = vpack.c.b16 %v546, %v538
    %v723 = vpack.c.b16 %v547, %v539
    %v724 = vpack.c.b16 %v548, %v540
    %v725 = vpack.c.b16 %v549, %v541
    %v726 = vpack.c.b16 %v558, %v550
    %v727 = vpack.c.b16 %v559, %v551
    %v728 = vpack.c.b16 %v560, %v552
    %v729 = vpack.c.b16 %v561, %v553
    %v730 = vpack.c.b16 %v562, %v554
    %v731 = vpack.c.b16 %v563, %v555
    %v732 = vpack.c.b16 %v564, %v556
    %v733 = vpack.c.b16 %v565, %v557
    %v734 = vpack.c.b16 %v574, %v566
    %v735 = vpack.c.b16 %v575, %v567
    %v736 = vpack.c.b16 %v576, %v568
    %v737 = vpack.c.b16 %v577, %v569
    %v738 = vpack.c.b16 %v578, %v570
    %v739 = vpack.c.b16 %v579, %v571
    %v740 = vpack.c.b16 %v580, %v572
    %v741 = vpack.c.b16 %v581, %v573
    %v742 = vpack.c.b16 %v590, %v582
    %v743 = vpack.c.b16 %v591, %v583
    %v744 = vpack.c.b16 %v592, %v584
    %v745 = vpack.c.b16 %v593, %v585
    %v746 = vpack.c.b16 %v594, %v586
    %v747 = vpack.c.b16 %v595, %v587
    %v748 = vpack.c.b16 %v596, %v588
    %v749 = vpack.c.b16 %v597, %v589
    %v750 = vpack.c.b16 %v606, %v598
    %v751 = vpack.c.b16 %v607, %v599
    %v752 = vpack.c.b16 %v608, %v600
    %v753 = vpack.c.b16 %v609, %v601
    %v754 = vpack.c.b16 %v610, %v602
    %v755 = vpack.c.b16 %v611, %v603
    %v756 = vpack.c.b16 %v612, %v604
    %v757 = vpack.c.b16 %v613, %v605
    %v758 = vpack.c.b16 %v622, %v614
    %v759 = vpack.c.b16 %v623, %v615
    %v760 = vpack.c.b16 %v624, %v616
    %v761 = vpack.c.b16 %v625, %v617
    %v762 = vpack.c.b16 %v626, %v618
    %v763 = vpack.c.b16 %v627, %v619
    %v764 = vpack.c.b16 %v628, %v620
    %v765 = vpack.c.b16 %v629, %v621
    %v766 = vpack.c.b16 %v638, %v630
    %v767 = vpack.c.b16 %v639, %v631
    %v768 = vpack.c.b16 %v640, %v632
    %v769 = vpack.c.b16 %v641, %v633
    %v770 = vpack.c.b16 %v642, %v634
    %v771 = vpack.c.b16 %v643, %v635
    %v772 = vpack.c.b16 %v644, %v636
    %v773 = vpack.c.b16 %v645, %v637
    %902 = vmatprep.subr.bf16.mxu0 %v647
    %903 = vmatpush1.bf16.msra.mxu0 %v646
    %904 = vmatprep.subr.bf16.mxu0 %v655
    %905 = vmatpush1.bf16.msra.mxu0 %v654
    %906 = vmatprep.subr.bf16.mxu0 %v663
    %907 = vmatpush1.bf16.msra.mxu0 %v662
    %908 = vmatprep.subr.bf16.mxu0 %v671
    %909 = vmatpush1.bf16.msra.mxu0 %v670
    %910 = vmatprep.subr.bf16.mxu0 %v679
    %911 = vmatpush1.bf16.msra.mxu0 %v678
    %912 = vmatprep.subr.bf16.mxu0 %v687
    %913 = vmatpush1.bf16.msra.mxu0 %v686
    %914 = vmatprep.subr.bf16.mxu0 %v695
    %915 = vmatpush1.bf16.msra.mxu0 %v694
    %916 = vmatprep.subr.bf16.mxu0 %v703
    %917 = vmatpush1.bf16.msra.mxu0 %v702
    %918 = vmatprep.subr.bf16.mxu0 %v711
    %919 = vmatpush1.bf16.msra.mxu0 %v710
    %920 = vmatprep.subr.bf16.mxu0 %v719
    %921 = vmatpush1.bf16.msra.mxu0 %v718
    %922 = vmatprep.subr.bf16.mxu0 %v727
    %923 = vmatpush1.bf16.msra.mxu0 %v726
    %924 = vmatprep.subr.bf16.mxu0 %v735
    %925 = vmatpush1.bf16.msra.mxu0 %v734
    %926 = vmatprep.subr.bf16.mxu0 %v743
    %927 = vmatpush1.bf16.msra.mxu0 %v742
    %928 = vmatprep.subr.bf16.mxu0 %v751
    %929 = vmatpush1.bf16.msra.mxu0 %v750
    %930 = vmatprep.subr.bf16.mxu0 %v759
    %931 = vmatpush1.bf16.msra.mxu0 %v758
    %932 = vmatprep.subr.bf16.mxu0 %v767
    %933 = vmatpush1.bf16.msra.mxu0 %v766
    %934 = vmatprep.mubr.bf16.mxu0 %v255
    %935 = vmatmul.mubr.bf16.gmra.mrb[0].mxu0 %v254
    %v936 = vpop.f32.mrb[0].mxu0
    %v937 = vadd.f32 0.0, %v936
    %v938 = vpop.f32.mrb[0].mxu0
    %v939 = vadd.f32 0.0, %v938
    %v940 = vpop.f32.mrb[0].mxu0
    %v941 = vadd.f32 0.0, %v940
    %v942 = vpop.f32.mrb[0].mxu0
    %v943 = vadd.f32 0.0, %v942
    %944 = vmatprep.mubr.bf16.mxu0 %v257
    %945 = vmatmul.mubr.bf16.gmra.mrb[0].mxu0 %v256
    %v946 = vpop.f32.mrb[0].mxu0
    %v947 = vadd.f32 0.0, %v946
    %v948 = vpop.f32.mrb[0].mxu0
    %v949 = vadd.f32 0.0, %v948
    %v950 = vpop.f32.mrb[0].mxu0
    %v951 = vadd.f32 0.0, %v950
    %v952 = vpop.f32.mrb[0].mxu0
    %v953 = vadd.f32 0.0, %v952
    %954 = vdwg.mxu0
    %955 = vmatprep.subr.bf16.mxu0 %v649
    %956 = vmatpush1.bf16.msra.mxu0 %v648
    %957 = vmatprep.subr.bf16.mxu0 %v657
    %958 = vmatpush1.bf16.msra.mxu0 %v656
    %959 = vmatprep.subr.bf16.mxu0 %v665
    %960 = vmatpush1.bf16.msra.mxu0 %v664
    %961 = vmatprep.subr.bf16.mxu0 %v673
    %962 = vmatpush1.bf16.msra.mxu0 %v672
    %963 = vmatprep.subr.bf16.mxu0 %v681
    %964 = vmatpush1.bf16.msra.mxu0 %v680
    %965 = vmatprep.subr.bf16.mxu0 %v689
    %966 = vmatpush1.bf16.msra.mxu0 %v688
    %967 = vmatprep.subr.bf16.mxu0 %v697
    %968 = vmatpush1.bf16.msra.mxu0 %v696
    %969 = vmatprep.subr.bf16.mxu0 %v705
    %970 = vmatpush1.bf16.msra.mxu0 %v704
    %971 = vmatprep.subr.bf16.mxu0 %v713
    %972 = vmatpush1.bf16.msra.mxu0 %v712
    %973 = vmatprep.subr.bf16.mxu0 %v721
    %974 = vmatpush1.bf16.msra.mxu0 %v720
    %975 = vmatprep.subr.bf16.mxu0 %v729
    %976 = vmatpush1.bf16.msra.mxu0 %v728
    %977 = vmatprep.subr.bf16.mxu0 %v737
    %978 = vmatpush1.bf16.msra.mxu0 %v736
    %979 = vmatprep.subr.bf16.mxu0 %v745
    %980 = vmatpush1.bf16.msra.mxu0 %v744
    %981 = vmatprep.subr.bf16.mxu0 %v753
    %982 = vmatpush1.bf16.msra.mxu0 %v752
    %983 = vmatprep.subr.bf16.mxu0 %v761
    %984 = vmatpush1.bf16.msra.mxu0 %v760
    %985 = vmatprep.subr.bf16.mxu0 %v769
    %986 = vmatpush1.bf16.msra.mxu0 %v768
    %987 = vmatprep.mubr.bf16.mxu0 %v255
    %988 = vmatmul.mubr.bf16.gmra.mrb[0].mxu0 %v254
    %v989 = vpop.f32.mrb[0].mxu0
    %v990 = vadd.f32 0.0, %v989
    %v991 = vpop.f32.mrb[0].mxu0
    %v992 = vadd.f32 0.0, %v991
    %v993 = vpop.f32.mrb[0].mxu0
    %v994 = vadd.f32 0.0, %v993
    %v995 = vpop.f32.mrb[0].mxu0
    %v996 = vadd.f32 0.0, %v995
    %997 = vmatprep.mubr.bf16.mxu0 %v257
    %998 = vmatmul.mubr.bf16.gmra.mrb[0].mxu0 %v256
    %v999 = vpop.f32.mrb[0].mxu0
    %v1000 = vadd.f32 0.0, %v999
    %v1001 = vpop.f32.mrb[0].mxu0
    %v1002 = vadd.f32 0.0, %v1001
    %v1003 = vpop.f32.mrb[0].mxu0
    %v1004 = vadd.f32 0.0, %v1003
    %v1005 = vpop.f32.mrb[0].mxu0
    %v1006 = vadd.f32 0.0, %v1005
    %1007 = vdwg.mxu0
    %1008 = vmatprep.subr.bf16.mxu0 %v651
    %1009 = vmatpush1.bf16.msra.mxu0 %v650
    %1010 = vmatprep.subr.bf16.mxu0 %v659
    %1011 = vmatpush1.bf16.msra.mxu0 %v658
    %1012 = vmatprep.subr.bf16.mxu0 %v667
    %1013 = vmatpush1.bf16.msra.mxu0 %v666
    %1014 = vmatprep.subr.bf16.mxu0 %v675
    %1015 = vmatpush1.bf16.msra.mxu0 %v674
    %1016 = vmatprep.subr.bf16.mxu0 %v683
    %1017 = vmatpush1.bf16.msra.mxu0 %v682
    %1018 = vmatprep.subr.bf16.mxu0 %v691
    %1019 = vmatpush1.bf16.msra.mxu0 %v690
    %1020 = vmatprep.subr.bf16.mxu0 %v699
    %1021 = vmatpush1.bf16.msra.mxu0 %v698
    %1022 = vmatprep.subr.bf16.mxu0 %v707
    %1023 = vmatpush1.bf16.msra.mxu0 %v706
    %1024 = vmatprep.subr.bf16.mxu0 %v715
    %1025 = vmatpush1.bf16.msra.mxu0 %v714
    %1026 = vmatprep.subr.bf16.mxu0 %v723
    %1027 = vmatpush1.bf16.msra.mxu0 %v722
    %1028 = vmatprep.subr.bf16.mxu0 %v731
    %1029 = vmatpush1.bf16.msra.mxu0 %v730
    %1030 = vmatprep.subr.bf16.mxu0 %v739
    %1031 = vmatpush1.bf16.msra.mxu0 %v738
    %1032 = vmatprep.subr.bf16.mxu0 %v747
    %1033 = vmatpush1.bf16.msra.mxu0 %v746
    %1034 = vmatprep.subr.bf16.mxu0 %v755
    %1035 = vmatpush1.bf16.msra.mxu0 %v754
    %1036 = vmatprep.subr.bf16.mxu0 %v763
    %1037 = vmatpush1.bf16.msra.mxu0 %v762
    %1038 = vmatprep.subr.bf16.mxu0 %v771
    %1039 = vmatpush1.bf16.msra.mxu0 %v770
    %1040 = vmatprep.mubr.bf16.mxu0 %v255
    %1041 = vmatmul.mubr.bf16.gmra.mrb[0].mxu0 %v254
    %v1042 = vpop.f32.mrb[0].mxu0
    %v1043 = vadd.f32 0.0, %v1042
    %v1044 = vpop.f32.mrb[0].mxu0
    %v1045 = vadd.f32 0.0, %v1044
    %v1046 = vpop.f32.mrb[0].mxu0
    %v1047 = vadd.f32 0.0, %v1046
    %v1048 = vpop.f32.mrb[0].mxu0
    %v1049 = vadd.f32 0.0, %v1048
    %1050 = vmatprep.mubr.bf16.mxu0 %v257
    %1051 = vmatmul.mubr.bf16.gmra.mrb[0].mxu0 %v256
    %v1052 = vpop.f32.mrb[0].mxu0
    %v1053 = vadd.f32 0.0, %v1052
    %v1054 = vpop.f32.mrb[0].mxu0
    %v1055 = vadd.f32 0.0, %v1054
    %v1056 = vpop.f32.mrb[0].mxu0
    %v1057 = vadd.f32 0.0, %v1056
    %v1058 = vpop.f32.mrb[0].mxu0
    %v1059 = vadd.f32 0.0, %v1058
    %1060 = vdwg.mxu0
    %1061 = vmatprep.subr.bf16.mxu0 %v653
    %1062 = vmatpush1.bf16.msra.mxu0 %v652
    %1063 = vmatprep.subr.bf16.mxu0 %v661
    %1064 = vmatpush1.bf16.msra.mxu0 %v660
    %1065 = vmatprep.subr.bf16.mxu0 %v669
    %1066 = vmatpush1.bf16.msra.mxu0 %v668
    %1067 = vmatprep.subr.bf16.mxu0 %v677
    %1068 = vmatpush1.bf16.msra.mxu0 %v676
    %1069 = vmatprep.subr.bf16.mxu0 %v685
    %1070 = vmatpush1.bf16.msra.mxu0 %v684
    %1071 = vmatprep.subr.bf16.mxu0 %v693
    %1072 = vmatpush1.bf16.msra.mxu0 %v692
    %1073 = vmatprep.subr.bf16.mxu0 %v701
    %1074 = vmatpush1.bf16.msra.mxu0 %v700
    %1075 = vmatprep.subr.bf16.mxu0 %v709
    %1076 = vmatpush1.bf16.msra.mxu0 %v708
    %1077 = vmatprep.subr.bf16.mxu0 %v717
    %1078 = vmatpush1.bf16.msra.mxu0 %v716
    %1079 = vmatprep.subr.bf16.mxu0 %v725
    %1080 = vmatpush1.bf16.msra.mxu0 %v724
    %1081 = vmatprep.subr.bf16.mxu0 %v733
    %1082 = vmatpush1.bf16.msra.mxu0 %v732
    %1083 = vmatprep.subr.bf16.mxu0 %v741
    %1084 = vmatpush1.bf16.msra.mxu0 %v740
    %1085 = vmatprep.subr.bf16.mxu0 %v749
    %1086 = vmatpush1.bf16.msra.mxu0 %v748
    %1087 = vmatprep.subr.bf16.mxu0 %v757
    %1088 = vmatpush1.bf16.msra.mxu0 %v756
    %1089 = vmatprep.subr.bf16.mxu0 %v765
    %1090 = vmatpush1.bf16.msra.mxu0 %v764
    %1091 = vmatprep.subr.bf16.mxu0 %v773
    %1092 = vmatpush1.bf16.msra.mxu0 %v772
    %1093 = vmatprep.mubr.bf16.mxu0 %v255
    %1094 = vmatmul.mubr.bf16.gmra.mrb[0].mxu0 %v254
    %v1095 = vpop.f32.mrb[0].mxu0
    %v1096 = vadd.f32 0.0, %v1095
    %v1097 = vpop.f32.mrb[0].mxu0
    %v1098 = vadd.f32 0.0, %v1097
    %v1099 = vpop.f32.mrb[0].mxu0
    %v1100 = vadd.f32 0.0, %v1099
    %v1101 = vpop.f32.mrb[0].mxu0
    %v1102 = vadd.f32 0.0, %v1101
    %1103 = vmatprep.mubr.bf16.mxu0 %v257
    %1104 = vmatmul.mubr.bf16.gmra.mrb[0].mxu0 %v256
    %v1105 = vpop.f32.mrb[0].mxu0
    %v1106 = vadd.f32 0.0, %v1105
    %v1107 = vpop.f32.mrb[0].mxu0
    %v1108 = vadd.f32 0.0, %v1107
    %v1109 = vpop.f32.mrb[0].mxu0
    %v1110 = vadd.f32 0.0, %v1109
    %v1111 = vpop.f32.mrb[0].mxu0
    %v1112 = vadd.f32 0.0, %v1111
    %1113 = vdwg.mxu0
    %v1114 = vmax.f32 %v937, 0.0
    %v1115 = vmax.f32 %v939, 0.0
    %v1116 = vmax.f32 %v990, 0.0
    %v1117 = vmax.f32 %v992, 0.0
    %v1118 = vmax.f32 %v941, 0.0
    %v1119 = vmax.f32 %v943, 0.0
    %v1120 = vmax.f32 %v994, 0.0
    %v1121 = vmax.f32 %v996, 0.0
    %v1122 = vmax.f32 %v947, 0.0
    %v1123 = vmax.f32 %v949, 0.0
    %v1124 = vmax.f32 %v1000, 0.0
    %v1125 = vmax.f32 %v1002, 0.0
    %v1126 = vmax.f32 %v951, 0.0
    %v1127 = vmax.f32 %v953, 0.0
    %v1128 = vmax.f32 %v1004, 0.0
    %v1129 = vmax.f32 %v1006, 0.0
    %v1130 = vld [vmem:[#allocation5] sm:$0xff]
    %v1131 = vld [vmem:[#allocation5 + $0x8] sm:$0xff]
    %v1132 = vld [vmem:[#allocation5 + $0x10] sm:$0xff]
    %v1133 = vld [vmem:[#allocation5 + $0x18] sm:$0xff]
    %v1134 = vld [vmem:[#allocation5 + $0x20] sm:$0xff]
    %v1135 = vld [vmem:[#allocation5 + $0x28] sm:$0xff]
    %v1136 = vld [vmem:[#allocation5 + $0x30] sm:$0xff]
    %v1137 = vld [vmem:[#allocation5 + $0x38] sm:$0xff]
    %v1138 = vld [vmem:[#allocation5 + $0x40] sm:$0xff]
    %v1139 = vld [vmem:[#allocation5 + $0x48] sm:$0xff]
    %v1140 = vld [vmem:[#allocation5 + $0x50] sm:$0xff]
    %v1141 = vld [vmem:[#allocation5 + $0x58] sm:$0xff]
    %v1142 = vld [vmem:[#allocation5 + $0x60] sm:$0xff]
    %v1143 = vld [vmem:[#allocation5 + $0x68] sm:$0xff]
    %v1144 = vld [vmem:[#allocation5 + $0x70] sm:$0xff]
    %v1145 = vld [vmem:[#allocation5 + $0x78] sm:$0xff]
    %v1146 = vld [vmem:[#allocation5 + $0x80] sm:$0xff]
    %v1147 = vld [vmem:[#allocation5 + $0x88] sm:$0xff]
    %v1148 = vld [vmem:[#allocation5 + $0x90] sm:$0xff]
    %v1149 = vld [vmem:[#allocation5 + $0x98] sm:$0xff]
    %v1150 = vld [vmem:[#allocation5 + $0xa0] sm:$0xff]
    %v1151 = vld [vmem:[#allocation5 + $0xa8] sm:$0xff]
    %v1152 = vld [vmem:[#allocation5 + $0xb0] sm:$0xff]
    %v1153 = vld [vmem:[#allocation5 + $0xb8] sm:$0xff]
    %v1154 = vld [vmem:[#allocation5 + $0xc0] sm:$0xff]
    %v1155 = vld [vmem:[#allocation5 + $0xc8] sm:$0xff]
    %v1156 = vld [vmem:[#allocation5 + $0xd0] sm:$0xff]
    %v1157 = vld [vmem:[#allocation5 + $0xd8] sm:$0xff]
    %v1158 = vld [vmem:[#allocation5 + $0xe0] sm:$0xff]
    %v1159 = vld [vmem:[#allocation5 + $0xe8] sm:$0xff]
    %v1160 = vld [vmem:[#allocation5 + $0xf0] sm:$0xff]
    %v1161 = vld [vmem:[#allocation5 + $0xf8] sm:$0xff]
    %v1162 = vld [vmem:[#allocation5 + $0x100] sm:$0xff]
    %v1163 = vld [vmem:[#allocation5 + $0x108] sm:$0xff]
    %v1164 = vld [vmem:[#allocation5 + $0x110] sm:$0xff]
    %v1165 = vld [vmem:[#allocation5 + $0x118] sm:$0xff]
    %v1166 = vld [vmem:[#allocation5 + $0x120] sm:$0xff]
    %v1167 = vld [vmem:[#allocation5 + $0x128] sm:$0xff]
    %v1168 = vld [vmem:[#allocation5 + $0x130] sm:$0xff]
    %v1169 = vld [vmem:[#allocation5 + $0x138] sm:$0xff]
    %v1170 = vld [vmem:[#allocation5 + $0x140] sm:$0xff]
    %v1171 = vld [vmem:[#allocation5 + $0x148] sm:$0xff]
    %v1172 = vld [vmem:[#allocation5 + $0x150] sm:$0xff]
    %v1173 = vld [vmem:[#allocation5 + $0x158] sm:$0xff]
    %v1174 = vld [vmem:[#allocation5 + $0x160] sm:$0xff]
    %v1175 = vld [vmem:[#allocation5 + $0x168] sm:$0xff]
    %v1176 = vld [vmem:[#allocation5 + $0x170] sm:$0xff]
    %v1177 = vld [vmem:[#allocation5 + $0x178] sm:$0xff]
    %v1178 = vld [vmem:[#allocation5 + $0x180] sm:$0xff]
    %v1179 = vld [vmem:[#allocation5 + $0x188] sm:$0xff]
    %v1180 = vld [vmem:[#allocation5 + $0x190] sm:$0xff]
    %v1181 = vld [vmem:[#allocation5 + $0x198] sm:$0xff]
    %v1182 = vld [vmem:[#allocation5 + $0x1a0] sm:$0xff]
    %v1183 = vld [vmem:[#allocation5 + $0x1a8] sm:$0xff]
    %v1184 = vld [vmem:[#allocation5 + $0x1b0] sm:$0xff]
    %v1185 = vld [vmem:[#allocation5 + $0x1b8] sm:$0xff]
    %v1186 = vld [vmem:[#allocation5 + $0x1c0] sm:$0xff]
    %v1187 = vld [vmem:[#allocation5 + $0x1c8] sm:$0xff]
    %v1188 = vld [vmem:[#allocation5 + $0x1d0] sm:$0xff]
    %v1189 = vld [vmem:[#allocation5 + $0x1d8] sm:$0xff]
    %v1190 = vld [vmem:[#allocation5 + $0x1e0] sm:$0xff]
    %v1191 = vld [vmem:[#allocation5 + $0x1e8] sm:$0xff]
    %v1192 = vld [vmem:[#allocation5 + $0x1f0] sm:$0xff]
    %v1193 = vld [vmem:[#allocation5 + $0x1f8] sm:$0xff]
    %v1194 = vld [vmem:[#allocation5 + $0x200] sm:$0xff]
    %v1195 = vld [vmem:[#allocation5 + $0x208] sm:$0xff]
    %v1196 = vld [vmem:[#allocation5 + $0x210] sm:$0xff]
    %v1197 = vld [vmem:[#allocation5 + $0x218] sm:$0xff]
    %v1198 = vld [vmem:[#allocation5 + $0x220] sm:$0xff]
    %v1199 = vld [vmem:[#allocation5 + $0x228] sm:$0xff]
    %v1200 = vld [vmem:[#allocation5 + $0x230] sm:$0xff]
    %v1201 = vld [vmem:[#allocation5 + $0x238] sm:$0xff]
    %v1202 = vld [vmem:[#allocation5 + $0x240] sm:$0xff]
    %v1203 = vld [vmem:[#allocation5 + $0x248] sm:$0xff]
    %v1204 = vld [vmem:[#allocation5 + $0x250] sm:$0xff]
    %v1205 = vld [vmem:[#allocation5 + $0x258] sm:$0xff]
    %v1206 = vld [vmem:[#allocation5 + $0x260] sm:$0xff]
    %v1207 = vld [vmem:[#allocation5 + $0x268] sm:$0xff]
    %v1208 = vld [vmem:[#allocation5 + $0x270] sm:$0xff]
    %v1209 = vld [vmem:[#allocation5 + $0x278] sm:$0xff]
    %v1210 = vld [vmem:[#allocation5 + $0x280] sm:$0xff]
    %v1211 = vld [vmem:[#allocation5 + $0x288] sm:$0xff]
    %v1212 = vld [vmem:[#allocation5 + $0x290] sm:$0xff]
    %v1213 = vld [vmem:[#allocation5 + $0x298] sm:$0xff]
    %v1214 = vld [vmem:[#allocation5 + $0x2a0] sm:$0xff]
    %v1215 = vld [vmem:[#allocation5 + $0x2a8] sm:$0xff]
    %v1216 = vld [vmem:[#allocation5 + $0x2b0] sm:$0xff]
    %v1217 = vld [vmem:[#allocation5 + $0x2b8] sm:$0xff]
    %v1218 = vld [vmem:[#allocation5 + $0x2c0] sm:$0xff]
    %v1219 = vld [vmem:[#allocation5 + $0x2c8] sm:$0xff]
    %v1220 = vld [vmem:[#allocation5 + $0x2d0] sm:$0xff]
    %v1221 = vld [vmem:[#allocation5 + $0x2d8] sm:$0xff]
    %v1222 = vld [vmem:[#allocation5 + $0x2e0] sm:$0xff]
    %v1223 = vld [vmem:[#allocation5 + $0x2e8] sm:$0xff]
    %v1224 = vld [vmem:[#allocation5 + $0x2f0] sm:$0xff]
    %v1225 = vld [vmem:[#allocation5 + $0x2f8] sm:$0xff]
    %v1226 = vld [vmem:[#allocation5 + $0x300] sm:$0xff]
    %v1227 = vld [vmem:[#allocation5 + $0x308] sm:$0xff]
    %v1228 = vld [vmem:[#allocation5 + $0x310] sm:$0xff]
    %v1229 = vld [vmem:[#allocation5 + $0x318] sm:$0xff]
    %v1230 = vld [vmem:[#allocation5 + $0x320] sm:$0xff]
    %v1231 = vld [vmem:[#allocation5 + $0x328] sm:$0xff]
    %v1232 = vld [vmem:[#allocation5 + $0x330] sm:$0xff]
    %v1233 = vld [vmem:[#allocation5 + $0x338] sm:$0xff]
    %v1234 = vld [vmem:[#allocation5 + $0x340] sm:$0xff]
    %v1235 = vld [vmem:[#allocation5 + $0x348] sm:$0xff]
    %v1236 = vld [vmem:[#allocation5 + $0x350] sm:$0xff]
    %v1237 = vld [vmem:[#allocation5 + $0x358] sm:$0xff]
    %v1238 = vld [vmem:[#allocation5 + $0x360] sm:$0xff]
    %v1239 = vld [vmem:[#allocation5 + $0x368] sm:$0xff]
    %v1240 = vld [vmem:[#allocation5 + $0x370] sm:$0xff]
    %v1241 = vld [vmem:[#allocation5 + $0x378] sm:$0xff]
    %v1242 = vld [vmem:[#allocation5 + $0x380] sm:$0xff]
    %v1243 = vld [vmem:[#allocation5 + $0x388] sm:$0xff]
    %v1244 = vld [vmem:[#allocation5 + $0x390] sm:$0xff]
    %v1245 = vld [vmem:[#allocation5 + $0x398] sm:$0xff]
    %v1246 = vld [vmem:[#allocation5 + $0x3a0] sm:$0xff]
    %v1247 = vld [vmem:[#allocation5 + $0x3a8] sm:$0xff]
    %v1248 = vld [vmem:[#allocation5 + $0x3b0] sm:$0xff]
    %v1249 = vld [vmem:[#allocation5 + $0x3b8] sm:$0xff]
    %v1250 = vld [vmem:[#allocation5 + $0x3c0] sm:$0xff]
    %v1251 = vld [vmem:[#allocation5 + $0x3c8] sm:$0xff]
    %v1252 = vld [vmem:[#allocation5 + $0x3d0] sm:$0xff]
    %v1253 = vld [vmem:[#allocation5 + $0x3d8] sm:$0xff]
    %v1254 = vld [vmem:[#allocation5 + $0x3e0] sm:$0xff]
    %v1255 = vld [vmem:[#allocation5 + $0x3e8] sm:$0xff]
    %v1256 = vld [vmem:[#allocation5 + $0x3f0] sm:$0xff]
    %v1257 = vld [vmem:[#allocation5 + $0x3f8] sm:$0xff]
    %v1258 = vpack.c.bf16 %v1118, %v1114
    %v1259 = vpack.c.bf16 %v1119, %v1115
    %v1260 = vpack.c.bf16 %v1120, %v1116
    %v1261 = vpack.c.bf16 %v1121, %v1117
    %v1262 = vpack.c.bf16 %v1126, %v1122
    %v1263 = vpack.c.bf16 %v1127, %v1123
    %v1264 = vpack.c.bf16 %v1128, %v1124
    %v1265 = vpack.c.bf16 %v1129, %v1125
    %v1394 = vunpack.c.l.b16 %v1130
    %v1395 = vunpack.c.h.b16 %v1130
    %v1396 = vunpack.c.l.b16 %v1131
    %v1397 = vunpack.c.h.b16 %v1131
    %v1398 = vunpack.c.l.b16 %v1132
    %v1399 = vunpack.c.h.b16 %v1132
    %v1400 = vunpack.c.l.b16 %v1133
    %v1401 = vunpack.c.h.b16 %v1133
    %v1402 = vunpack.c.l.b16 %v1134
    %v1403 = vunpack.c.h.b16 %v1134
    %v1404 = vunpack.c.l.b16 %v1135
    %v1405 = vunpack.c.h.b16 %v1135
    %v1406 = vunpack.c.l.b16 %v1136
    %v1407 = vunpack.c.h.b16 %v1136
    %v1408 = vunpack.c.l.b16 %v1137
    %v1409 = vunpack.c.h.b16 %v1137
    %v1410 = vunpack.c.l.b16 %v1138
    %v1411 = vunpack.c.h.b16 %v1138
    %v1412 = vunpack.c.l.b16 %v1139
    %v1413 = vunpack.c.h.b16 %v1139
    %v1414 = vunpack.c.l.b16 %v1140
    %v1415 = vunpack.c.h.b16 %v1140
    %v1416 = vunpack.c.l.b16 %v1141
    %v1417 = vunpack.c.h.b16 %v1141
    %v1418 = vunpack.c.l.b16 %v1142
    %v1419 = vunpack.c.h.b16 %v1142
    %v1420 = vunpack.c.l.b16 %v1143
    %v1421 = vunpack.c.h.b16 %v1143
    %v1422 = vunpack.c.l.b16 %v1144
    %v1423 = vunpack.c.h.b16 %v1144
    %v1424 = vunpack.c.l.b16 %v1145
    %v1425 = vunpack.c.h.b16 %v1145
    %v1426 = vunpack.c.l.b16 %v1146
    %v1427 = vunpack.c.h.b16 %v1146
    %v1428 = vunpack.c.l.b16 %v1147
    %v1429 = vunpack.c.h.b16 %v1147
    %v1430 = vunpack.c.l.b16 %v1148
    %v1431 = vunpack.c.h.b16 %v1148
    %v1432 = vunpack.c.l.b16 %v1149
    %v1433 = vunpack.c.h.b16 %v1149
    %v1434 = vunpack.c.l.b16 %v1150
    %v1435 = vunpack.c.h.b16 %v1150
    %v1436 = vunpack.c.l.b16 %v1151
    %v1437 = vunpack.c.h.b16 %v1151
    %v1438 = vunpack.c.l.b16 %v1152
    %v1439 = vunpack.c.h.b16 %v1152
    %v1440 = vunpack.c.l.b16 %v1153
    %v1441 = vunpack.c.h.b16 %v1153
    %v1442 = vunpack.c.l.b16 %v1154
    %v1443 = vunpack.c.h.b16 %v1154
    %v1444 = vunpack.c.l.b16 %v1155
    %v1445 = vunpack.c.h.b16 %v1155
    %v1446 = vunpack.c.l.b16 %v1156
    %v1447 = vunpack.c.h.b16 %v1156
    %v1448 = vunpack.c.l.b16 %v1157
    %v1449 = vunpack.c.h.b16 %v1157
    %v1450 = vunpack.c.l.b16 %v1158
    %v1451 = vunpack.c.h.b16 %v1158
    %v1452 = vunpack.c.l.b16 %v1159
    %v1453 = vunpack.c.h.b16 %v1159
    %v1454 = vunpack.c.l.b16 %v1160
    %v1455 = vunpack.c.h.b16 %v1160
    %v1456 = vunpack.c.l.b16 %v1161
    %v1457 = vunpack.c.h.b16 %v1161
    %v1458 = vunpack.c.l.b16 %v1162
    %v1459 = vunpack.c.h.b16 %v1162
    %v1460 = vunpack.c.l.b16 %v1163
    %v1461 = vunpack.c.h.b16 %v1163
    %v1462 = vunpack.c.l.b16 %v1164
    %v1463 = vunpack.c.h.b16 %v1164
    %v1464 = vunpack.c.l.b16 %v1165
    %v1465 = vunpack.c.h.b16 %v1165
    %v1466 = vunpack.c.l.b16 %v1166
    %v1467 = vunpack.c.h.b16 %v1166
    %v1468 = vunpack.c.l.b16 %v1167
    %v1469 = vunpack.c.h.b16 %v1167
    %v1470 = vunpack.c.l.b16 %v1168
    %v1471 = vunpack.c.h.b16 %v1168
    %v1472 = vunpack.c.l.b16 %v1169
    %v1473 = vunpack.c.h.b16 %v1169
    %v1474 = vunpack.c.l.b16 %v1170
    %v1475 = vunpack.c.h.b16 %v1170
    %v1476 = vunpack.c.l.b16 %v1171
    %v1477 = vunpack.c.h.b16 %v1171
    %v1478 = vunpack.c.l.b16 %v1172
    %v1479 = vunpack.c.h.b16 %v1172
    %v1480 = vunpack.c.l.b16 %v1173
    %v1481 = vunpack.c.h.b16 %v1173
    %v1482 = vunpack.c.l.b16 %v1174
    %v1483 = vunpack.c.h.b16 %v1174
    %v1484 = vunpack.c.l.b16 %v1175
    %v1485 = vunpack.c.h.b16 %v1175
    %v1486 = vunpack.c.l.b16 %v1176
    %v1487 = vunpack.c.h.b16 %v1176
    %v1488 = vunpack.c.l.b16 %v1177
    %v1489 = vunpack.c.h.b16 %v1177
    %v1490 = vunpack.c.l.b16 %v1178
    %v1491 = vunpack.c.h.b16 %v1178
    %v1492 = vunpack.c.l.b16 %v1179
    %v1493 = vunpack.c.h.b16 %v1179
    %v1494 = vunpack.c.l.b16 %v1180
    %v1495 = vunpack.c.h.b16 %v1180
    %v1496 = vunpack.c.l.b16 %v1181
    %v1497 = vunpack.c.h.b16 %v1181
    %v1498 = vunpack.c.l.b16 %v1182
    %v1499 = vunpack.c.h.b16 %v1182
    %v1500 = vunpack.c.l.b16 %v1183
    %v1501 = vunpack.c.h.b16 %v1183
    %v1502 = vunpack.c.l.b16 %v1184
    %v1503 = vunpack.c.h.b16 %v1184
    %v1504 = vunpack.c.l.b16 %v1185
    %v1505 = vunpack.c.h.b16 %v1185
    %v1506 = vunpack.c.l.b16 %v1186
    %v1507 = vunpack.c.h.b16 %v1186
    %v1508 = vunpack.c.l.b16 %v1187
    %v1509 = vunpack.c.h.b16 %v1187
    %v1510 = vunpack.c.l.b16 %v1188
    %v1511 = vunpack.c.h.b16 %v1188
    %v1512 = vunpack.c.l.b16 %v1189
    %v1513 = vunpack.c.h.b16 %v1189
    %v1514 = vunpack.c.l.b16 %v1190
    %v1515 = vunpack.c.h.b16 %v1190
    %v1516 = vunpack.c.l.b16 %v1191
    %v1517 = vunpack.c.h.b16 %v1191
    %v1518 = vunpack.c.l.b16 %v1192
    %v1519 = vunpack.c.h.b16 %v1192
    %v1520 = vunpack.c.l.b16 %v1193
    %v1521 = vunpack.c.h.b16 %v1193
    %v1522 = vunpack.c.l.b16 %v1194
    %v1523 = vunpack.c.h.b16 %v1194
    %v1524 = vunpack.c.l.b16 %v1195
    %v1525 = vunpack.c.h.b16 %v1195
    %v1526 = vunpack.c.l.b16 %v1196
    %v1527 = vunpack.c.h.b16 %v1196
    %v1528 = vunpack.c.l.b16 %v1197
    %v1529 = vunpack.c.h.b16 %v1197
    %v1530 = vunpack.c.l.b16 %v1198
    %v1531 = vunpack.c.h.b16 %v1198
    %v1532 = vunpack.c.l.b16 %v1199
    %v1533 = vunpack.c.h.b16 %v1199
    %v1534 = vunpack.c.l.b16 %v1200
    %v1535 = vunpack.c.h.b16 %v1200
    %v1536 = vunpack.c.l.b16 %v1201
    %v1537 = vunpack.c.h.b16 %v1201
    %v1538 = vunpack.c.l.b16 %v1202
    %v1539 = vunpack.c.h.b16 %v1202
    %v1540 = vunpack.c.l.b16 %v1203
    %v1541 = vunpack.c.h.b16 %v1203
    %v1542 = vunpack.c.l.b16 %v1204
    %v1543 = vunpack.c.h.b16 %v1204
    %v1544 = vunpack.c.l.b16 %v1205
    %v1545 = vunpack.c.h.b16 %v1205
    %v1546 = vunpack.c.l.b16 %v1206
    %v1547 = vunpack.c.h.b16 %v1206
    %v1548 = vunpack.c.l.b16 %v1207
    %v1549 = vunpack.c.h.b16 %v1207
    %v1550 = vunpack.c.l.b16 %v1208
    %v1551 = vunpack.c.h.b16 %v1208
    %v1552 = vunpack.c.l.b16 %v1209
    %v1553 = vunpack.c.h.b16 %v1209
    %v1554 = vunpack.c.l.b16 %v1210
    %v1555 = vunpack.c.h.b16 %v1210
    %v1556 = vunpack.c.l.b16 %v1211
    %v1557 = vunpack.c.h.b16 %v1211
    %v1558 = vunpack.c.l.b16 %v1212
    %v1559 = vunpack.c.h.b16 %v1212
    %v1560 = vunpack.c.l.b16 %v1213
    %v1561 = vunpack.c.h.b16 %v1213
    %v1562 = vunpack.c.l.b16 %v1214
    %v1563 = vunpack.c.h.b16 %v1214
    %v1564 = vunpack.c.l.b16 %v1215
    %v1565 = vunpack.c.h.b16 %v1215
    %v1566 = vunpack.c.l.b16 %v1216
    %v1567 = vunpack.c.h.b16 %v1216
    %v1568 = vunpack.c.l.b16 %v1217
    %v1569 = vunpack.c.h.b16 %v1217
    %v1570 = vunpack.c.l.b16 %v1218
    %v1571 = vunpack.c.h.b16 %v1218
    %v1572 = vunpack.c.l.b16 %v1219
    %v1573 = vunpack.c.h.b16 %v1219
    %v1574 = vunpack.c.l.b16 %v1220
    %v1575 = vunpack.c.h.b16 %v1220
    %v1576 = vunpack.c.l.b16 %v1221
    %v1577 = vunpack.c.h.b16 %v1221
    %v1578 = vunpack.c.l.b16 %v1222
    %v1579 = vunpack.c.h.b16 %v1222
    %v1580 = vunpack.c.l.b16 %v1223
    %v1581 = vunpack.c.h.b16 %v1223
    %v1582 = vunpack.c.l.b16 %v1224
    %v1583 = vunpack.c.h.b16 %v1224
    %v1584 = vunpack.c.l.b16 %v1225
    %v1585 = vunpack.c.h.b16 %v1225
    %v1586 = vunpack.c.l.b16 %v1226
    %v1587 = vunpack.c.h.b16 %v1226
    %v1588 = vunpack.c.l.b16 %v1227
    %v1589 = vunpack.c.h.b16 %v1227
    %v1590 = vunpack.c.l.b16 %v1228
    %v1591 = vunpack.c.h.b16 %v1228
    %v1592 = vunpack.c.l.b16 %v1229
    %v1593 = vunpack.c.h.b16 %v1229
    %v1594 = vunpack.c.l.b16 %v1230
    %v1595 = vunpack.c.h.b16 %v1230
    %v1596 = vunpack.c.l.b16 %v1231
    %v1597 = vunpack.c.h.b16 %v1231
    %v1598 = vunpack.c.l.b16 %v1232
    %v1599 = vunpack.c.h.b16 %v1232
    %v1600 = vunpack.c.l.b16 %v1233
    %v1601 = vunpack.c.h.b16 %v1233
    %v1602 = vunpack.c.l.b16 %v1234
    %v1603 = vunpack.c.h.b16 %v1234
    %v1604 = vunpack.c.l.b16 %v1235
    %v1605 = vunpack.c.h.b16 %v1235
    %v1606 = vunpack.c.l.b16 %v1236
    %v1607 = vunpack.c.h.b16 %v1236
    %v1608 = vunpack.c.l.b16 %v1237
    %v1609 = vunpack.c.h.b16 %v1237
    %v1610 = vunpack.c.l.b16 %v1238
    %v1611 = vunpack.c.h.b16 %v1238
    %v1612 = vunpack.c.l.b16 %v1239
    %v1613 = vunpack.c.h.b16 %v1239
    %v1614 = vunpack.c.l.b16 %v1240
    %v1615 = vunpack.c.h.b16 %v1240
    %v1616 = vunpack.c.l.b16 %v1241
    %v1617 = vunpack.c.h.b16 %v1241
    %v1618 = vunpack.c.l.b16 %v1242
    %v1619 = vunpack.c.h.b16 %v1242
    %v1620 = vunpack.c.l.b16 %v1243
    %v1621 = vunpack.c.h.b16 %v1243
    %v1622 = vunpack.c.l.b16 %v1244
    %v1623 = vunpack.c.h.b16 %v1244
    %v1624 = vunpack.c.l.b16 %v1245
    %v1625 = vunpack.c.h.b16 %v1245
    %v1626 = vunpack.c.l.b16 %v1246
    %v1627 = vunpack.c.h.b16 %v1246
    %v1628 = vunpack.c.l.b16 %v1247
    %v1629 = vunpack.c.h.b16 %v1247
    %v1630 = vunpack.c.l.b16 %v1248
    %v1631 = vunpack.c.h.b16 %v1248
    %v1632 = vunpack.c.l.b16 %v1249
    %v1633 = vunpack.c.h.b16 %v1249
    %v1634 = vunpack.c.l.b16 %v1250
    %v1635 = vunpack.c.h.b16 %v1250
    %v1636 = vunpack.c.l.b16 %v1251
    %v1637 = vunpack.c.h.b16 %v1251
    %v1638 = vunpack.c.l.b16 %v1252
    %v1639 = vunpack.c.h.b16 %v1252
    %v1640 = vunpack.c.l.b16 %v1253
    %v1641 = vunpack.c.h.b16 %v1253
    %v1642 = vunpack.c.l.b16 %v1254
    %v1643 = vunpack.c.h.b16 %v1254
    %v1644 = vunpack.c.l.b16 %v1255
    %v1645 = vunpack.c.h.b16 %v1255
    %v1646 = vunpack.c.l.b16 %v1256
    %v1647 = vunpack.c.h.b16 %v1256
    %v1648 = vunpack.c.l.b16 %v1257
    %v1649 = vunpack.c.h.b16 %v1257
    %v1650 = vpack.c.b16 %v1398, %v1394
    %v1651 = vpack.c.b16 %v1399, %v1395
    %v1652 = vpack.c.b16 %v1400, %v1396
    %v1653 = vpack.c.b16 %v1401, %v1397
    %v1654 = vpack.c.b16 %v1406, %v1402
    %v1655 = vpack.c.b16 %v1407, %v1403
    %v1656 = vpack.c.b16 %v1408, %v1404
    %v1657 = vpack.c.b16 %v1409, %v1405
    %v1658 = vpack.c.b16 %v1414, %v1410
    %v1659 = vpack.c.b16 %v1415, %v1411
    %v1660 = vpack.c.b16 %v1416, %v1412
    %v1661 = vpack.c.b16 %v1417, %v1413
    %v1662 = vpack.c.b16 %v1422, %v1418
    %v1663 = vpack.c.b16 %v1423, %v1419
    %v1664 = vpack.c.b16 %v1424, %v1420
    %v1665 = vpack.c.b16 %v1425, %v1421
    %v1666 = vpack.c.b16 %v1430, %v1426
    %v1667 = vpack.c.b16 %v1431, %v1427
    %v1668 = vpack.c.b16 %v1432, %v1428
    %v1669 = vpack.c.b16 %v1433, %v1429
    %v1670 = vpack.c.b16 %v1438, %v1434
    %v1671 = vpack.c.b16 %v1439, %v1435
    %v1672 = vpack.c.b16 %v1440, %v1436
    %v1673 = vpack.c.b16 %v1441, %v1437
    %v1674 = vpack.c.b16 %v1446, %v1442
    %v1675 = vpack.c.b16 %v1447, %v1443
    %v1676 = vpack.c.b16 %v1448, %v1444
    %v1677 = vpack.c.b16 %v1449, %v1445
    %v1678 = vpack.c.b16 %v1454, %v1450
    %v1679 = vpack.c.b16 %v1455, %v1451
    %v1680 = vpack.c.b16 %v1456, %v1452
    %v1681 = vpack.c.b16 %v1457, %v1453
    %v1682 = vpack.c.b16 %v1462, %v1458
    %v1683 = vpack.c.b16 %v1463, %v1459
    %v1684 = vpack.c.b16 %v1464, %v1460
    %v1685 = vpack.c.b16 %v1465, %v1461
    %v1686 = vpack.c.b16 %v1470, %v1466
    %v1687 = vpack.c.b16 %v1471, %v1467
    %v1688 = vpack.c.b16 %v1472, %v1468
    %v1689 = vpack.c.b16 %v1473, %v1469
    %v1690 = vpack.c.b16 %v1478, %v1474
    %v1691 = vpack.c.b16 %v1479, %v1475
    %v1692 = vpack.c.b16 %v1480, %v1476
    %v1693 = vpack.c.b16 %v1481, %v1477
    %v1694 = vpack.c.b16 %v1486, %v1482
    %v1695 = vpack.c.b16 %v1487, %v1483
    %v1696 = vpack.c.b16 %v1488, %v1484
    %v1697 = vpack.c.b16 %v1489, %v1485
    %v1698 = vpack.c.b16 %v1494, %v1490
    %v1699 = vpack.c.b16 %v1495, %v1491
    %v1700 = vpack.c.b16 %v1496, %v1492
    %v1701 = vpack.c.b16 %v1497, %v1493
    %v1702 = vpack.c.b16 %v1502, %v1498
    %v1703 = vpack.c.b16 %v1503, %v1499
    %v1704 = vpack.c.b16 %v1504, %v1500
    %v1705 = vpack.c.b16 %v1505, %v1501
    %v1706 = vpack.c.b16 %v1510, %v1506
    %v1707 = vpack.c.b16 %v1511, %v1507
    %v1708 = vpack.c.b16 %v1512, %v1508
    %v1709 = vpack.c.b16 %v1513, %v1509
    %v1710 = vpack.c.b16 %v1518, %v1514
    %v1711 = vpack.c.b16 %v1519, %v1515
    %v1712 = vpack.c.b16 %v1520, %v1516
    %v1713 = vpack.c.b16 %v1521, %v1517
    %v1714 = vpack.c.b16 %v1526, %v1522
    %v1715 = vpack.c.b16 %v1527, %v1523
    %v1716 = vpack.c.b16 %v1528, %v1524
    %v1717 = vpack.c.b16 %v1529, %v1525
    %v1718 = vpack.c.b16 %v1534, %v1530
    %v1719 = vpack.c.b16 %v1535, %v1531
    %v1720 = vpack.c.b16 %v1536, %v1532
    %v1721 = vpack.c.b16 %v1537, %v1533
    %v1722 = vpack.c.b16 %v1542, %v1538
    %v1723 = vpack.c.b16 %v1543, %v1539
    %v1724 = vpack.c.b16 %v1544, %v1540
    %v1725 = vpack.c.b16 %v1545, %v1541
    %v1726 = vpack.c.b16 %v1550, %v1546
    %v1727 = vpack.c.b16 %v1551, %v1547
    %v1728 = vpack.c.b16 %v1552, %v1548
    %v1729 = vpack.c.b16 %v1553, %v1549
    %v1730 = vpack.c.b16 %v1558, %v1554
    %v1731 = vpack.c.b16 %v1559, %v1555
    %v1732 = vpack.c.b16 %v1560, %v1556
    %v1733 = vpack.c.b16 %v1561, %v1557
    %v1734 = vpack.c.b16 %v1566, %v1562
    %v1735 = vpack.c.b16 %v1567, %v1563
    %v1736 = vpack.c.b16 %v1568, %v1564
    %v1737 = vpack.c.b16 %v1569, %v1565
    %v1738 = vpack.c.b16 %v1574, %v1570
    %v1739 = vpack.c.b16 %v1575, %v1571
    %v1740 = vpack.c.b16 %v1576, %v1572
    %v1741 = vpack.c.b16 %v1577, %v1573
    %v1742 = vpack.c.b16 %v1582, %v1578
    %v1743 = vpack.c.b16 %v1583, %v1579
    %v1744 = vpack.c.b16 %v1584, %v1580
    %v1745 = vpack.c.b16 %v1585, %v1581
    %v1746 = vpack.c.b16 %v1590, %v1586
    %v1747 = vpack.c.b16 %v1591, %v1587
    %v1748 = vpack.c.b16 %v1592, %v1588
    %v1749 = vpack.c.b16 %v1593, %v1589
    %v1750 = vpack.c.b16 %v1598, %v1594
    %v1751 = vpack.c.b16 %v1599, %v1595
    %v1752 = vpack.c.b16 %v1600, %v1596
    %v1753 = vpack.c.b16 %v1601, %v1597
    %v1754 = vpack.c.b16 %v1606, %v1602
    %v1755 = vpack.c.b16 %v1607, %v1603
    %v1756 = vpack.c.b16 %v1608, %v1604
    %v1757 = vpack.c.b16 %v1609, %v1605
    %v1758 = vpack.c.b16 %v1614, %v1610
    %v1759 = vpack.c.b16 %v1615, %v1611
    %v1760 = vpack.c.b16 %v1616, %v1612
    %v1761 = vpack.c.b16 %v1617, %v1613
    %v1762 = vpack.c.b16 %v1622, %v1618
    %v1763 = vpack.c.b16 %v1623, %v1619
    %v1764 = vpack.c.b16 %v1624, %v1620
    %v1765 = vpack.c.b16 %v1625, %v1621
    %v1766 = vpack.c.b16 %v1630, %v1626
    %v1767 = vpack.c.b16 %v1631, %v1627
    %v1768 = vpack.c.b16 %v1632, %v1628
    %v1769 = vpack.c.b16 %v1633, %v1629
    %v1770 = vpack.c.b16 %v1638, %v1634
    %v1771 = vpack.c.b16 %v1639, %v1635
    %v1772 = vpack.c.b16 %v1640, %v1636
    %v1773 = vpack.c.b16 %v1641, %v1637
    %v1774 = vpack.c.b16 %v1646, %v1642
    %v1775 = vpack.c.b16 %v1647, %v1643
    %v1776 = vpack.c.b16 %v1648, %v1644
    %v1777 = vpack.c.b16 %v1649, %v1645
    %1906 = vmatprep.subr.bf16.mxu0 %v1651
    %1907 = vmatpush1.bf16.msra.mxu0 %v1650
    %1908 = vmatprep.subr.bf16.mxu0 %v1655
    %1909 = vmatpush1.bf16.msra.mxu0 %v1654
    %1910 = vmatprep.subr.bf16.mxu0 %v1659
    %1911 = vmatpush1.bf16.msra.mxu0 %v1658
    %1912 = vmatprep.subr.bf16.mxu0 %v1663
    %1913 = vmatpush1.bf16.msra.mxu0 %v1662
    %1914 = vmatprep.subr.bf16.mxu0 %v1667
    %1915 = vmatpush1.bf16.msra.mxu0 %v1666
    %1916 = vmatprep.subr.bf16.mxu0 %v1671
    %1917 = vmatpush1.bf16.msra.mxu0 %v1670
    %1918 = vmatprep.subr.bf16.mxu0 %v1675
    %1919 = vmatpush1.bf16.msra.mxu0 %v1674
    %1920 = vmatprep.subr.bf16.mxu0 %v1679
    %1921 = vmatpush1.bf16.msra.mxu0 %v1678
    %1922 = vmatprep.subr.bf16.mxu0 %v1683
    %1923 = vmatpush1.bf16.msra.mxu0 %v1682
    %1924 = vmatprep.subr.bf16.mxu0 %v1687
    %1925 = vmatpush1.bf16.msra.mxu0 %v1686
    %1926 = vmatprep.subr.bf16.mxu0 %v1691
    %1927 = vmatpush1.bf16.msra.mxu0 %v1690
    %1928 = vmatprep.subr.bf16.mxu0 %v1695
    %1929 = vmatpush1.bf16.msra.mxu0 %v1694
    %1930 = vmatprep.subr.bf16.mxu0 %v1699
    %1931 = vmatpush1.bf16.msra.mxu0 %v1698
    %1932 = vmatprep.subr.bf16.mxu0 %v1703
    %1933 = vmatpush1.bf16.msra.mxu0 %v1702
    %1934 = vmatprep.subr.bf16.mxu0 %v1707
    %1935 = vmatpush1.bf16.msra.mxu0 %v1706
    %1936 = vmatprep.subr.bf16.mxu0 %v1711
    %1937 = vmatpush1.bf16.msra.mxu0 %v1710
    %1938 = vmatprep.mubr.bf16.mxu0 %v1259
    %1939 = vmatmul.mubr.bf16.gmra.mrb[0].mxu0 %v1258
    %v1940 = vpop.f32.mrb[0].mxu0
    %v1941 = vadd.f32 %v1043, %v1940
    %v1942 = vpop.f32.mrb[0].mxu0
    %v1943 = vadd.f32 %v1045, %v1942
    %v1944 = vpop.f32.mrb[0].mxu0
    %v1945 = vadd.f32 %v1047, %v1944
    %v1946 = vpop.f32.mrb[0].mxu0
    %v1947 = vadd.f32 %v1049, %v1946
    %1948 = vmatprep.mubr.bf16.mxu0 %v1263
    %1949 = vmatmul.mubr.bf16.gmra.mrb[0].mxu0 %v1262
    %v1950 = vpop.f32.mrb[0].mxu0
    %v1951 = vadd.f32 %v1053, %v1950
    %v1952 = vpop.f32.mrb[0].mxu0
    %v1953 = vadd.f32 %v1055, %v1952
    %v1954 = vpop.f32.mrb[0].mxu0
    %v1955 = vadd.f32 %v1057, %v1954
    %v1956 = vpop.f32.mrb[0].mxu0
    %v1957 = vadd.f32 %v1059, %v1956
    %1958 = vdwg.mxu0
    %1959 = vmatprep.subr.bf16.mxu0 %v1715
    %1960 = vmatpush1.bf16.msra.mxu0 %v1714
    %1961 = vmatprep.subr.bf16.mxu0 %v1719
    %1962 = vmatpush1.bf16.msra.mxu0 %v1718
    %1963 = vmatprep.subr.bf16.mxu0 %v1723
    %1964 = vmatpush1.bf16.msra.mxu0 %v1722
    %1965 = vmatprep.subr.bf16.mxu0 %v1727
    %1966 = vmatpush1.bf16.msra.mxu0 %v1726
    %1967 = vmatprep.subr.bf16.mxu0 %v1731
    %1968 = vmatpush1.bf16.msra.mxu0 %v1730
    %1969 = vmatprep.subr.bf16.mxu0 %v1735
    %1970 = vmatpush1.bf16.msra.mxu0 %v1734
    %1971 = vmatprep.subr.bf16.mxu0 %v1739
    %1972 = vmatpush1.bf16.msra.mxu0 %v1738
    %1973 = vmatprep.subr.bf16.mxu0 %v1743
    %1974 = vmatpush1.bf16.msra.mxu0 %v1742
    %1975 = vmatprep.subr.bf16.mxu0 %v1747
    %1976 = vmatpush1.bf16.msra.mxu0 %v1746
    %1977 = vmatprep.subr.bf16.mxu0 %v1751
    %1978 = vmatpush1.bf16.msra.mxu0 %v1750
    %1979 = vmatprep.subr.bf16.mxu0 %v1755
    %1980 = vmatpush1.bf16.msra.mxu0 %v1754
    %1981 = vmatprep.subr.bf16.mxu0 %v1759
    %1982 = vmatpush1.bf16.msra.mxu0 %v1758
    %1983 = vmatprep.subr.bf16.mxu0 %v1763
    %1984 = vmatpush1.bf16.msra.mxu0 %v1762
    %1985 = vmatprep.subr.bf16.mxu0 %v1767
    %1986 = vmatpush1.bf16.msra.mxu0 %v1766
    %1987 = vmatprep.subr.bf16.mxu0 %v1771
    %1988 = vmatpush1.bf16.msra.mxu0 %v1770
    %1989 = vmatprep.subr.bf16.mxu0 %v1775
    %1990 = vmatpush1.bf16.msra.mxu0 %v1774
    %1991 = vmatprep.mubr.bf16.mxu0 %v1261
    %1992 = vmatmul.mubr.bf16.gmra.mrb[0].mxu0 %v1260
    %v1993 = vpop.f32.mrb[0].mxu0
    %v1994 = vadd.f32 %v1941, %v1993
    %v1995 = vpop.f32.mrb[0].mxu0
    %v1996 = vadd.f32 %v1943, %v1995
    %v1997 = vpop.f32.mrb[0].mxu0
    %v1998 = vadd.f32 %v1945, %v1997
    %v1999 = vpop.f32.mrb[0].mxu0
    %v2000 = vadd.f32 %v1947, %v1999
    %2001 = vmatprep.mubr.bf16.mxu0 %v1265
    %2002 = vmatmul.mubr.bf16.gmra.mrb[0].mxu0 %v1264
    %v2003 = vpop.f32.mrb[0].mxu0
    %v2004 = vadd.f32 %v1951, %v2003
    %v2005 = vpop.f32.mrb[0].mxu0
    %v2006 = vadd.f32 %v1953, %v2005
    %v2007 = vpop.f32.mrb[0].mxu0
    %v2008 = vadd.f32 %v1955, %v2007
    %v2009 = vpop.f32.mrb[0].mxu0
    %v2010 = vadd.f32 %v1957, %v2009
    %2011 = vdwg.mxu0
    %2012 = vmatprep.subr.bf16.mxu0 %v1653
    %2013 = vmatpush1.bf16.msra.mxu0 %v1652
    %2014 = vmatprep.subr.bf16.mxu0 %v1657
    %2015 = vmatpush1.bf16.msra.mxu0 %v1656
    %2016 = vmatprep.subr.bf16.mxu0 %v1661
    %2017 = vmatpush1.bf16.msra.mxu0 %v1660
    %2018 = vmatprep.subr.bf16.mxu0 %v1665
    %2019 = vmatpush1.bf16.msra.mxu0 %v1664
    %2020 = vmatprep.subr.bf16.mxu0 %v1669
    %2021 = vmatpush1.bf16.msra.mxu0 %v1668
    %2022 = vmatprep.subr.bf16.mxu0 %v1673
    %2023 = vmatpush1.bf16.msra.mxu0 %v1672
    %2024 = vmatprep.subr.bf16.mxu0 %v1677
    %2025 = vmatpush1.bf16.msra.mxu0 %v1676
    %2026 = vmatprep.subr.bf16.mxu0 %v1681
    %2027 = vmatpush1.bf16.msra.mxu0 %v1680
    %2028 = vmatprep.subr.bf16.mxu0 %v1685
    %2029 = vmatpush1.bf16.msra.mxu0 %v1684
    %2030 = vmatprep.subr.bf16.mxu0 %v1689
    %2031 = vmatpush1.bf16.msra.mxu0 %v1688
    %2032 = vmatprep.subr.bf16.mxu0 %v1693
    %2033 = vmatpush1.bf16.msra.mxu0 %v1692
    %2034 = vmatprep.subr.bf16.mxu0 %v1697
    %2035 = vmatpush1.bf16.msra.mxu0 %v1696
    %2036 = vmatprep.subr.bf16.mxu0 %v1701
    %2037 = vmatpush1.bf16.msra.mxu0 %v1700
    %2038 = vmatprep.subr.bf16.mxu0 %v1705
    %2039 = vmatpush1.bf16.msra.mxu0 %v1704
    %2040 = vmatprep.subr.bf16.mxu0 %v1709
    %2041 = vmatpush1.bf16.msra.mxu0 %v1708
    %2042 = vmatprep.subr.bf16.mxu0 %v1713
    %2043 = vmatpush1.bf16.msra.mxu0 %v1712
    %2044 = vmatprep.mubr.bf16.mxu0 %v1259
    %2045 = vmatmul.mubr.bf16.gmra.mrb[0].mxu0 %v1258
    %v2046 = vpop.f32.mrb[0].mxu0
    %v2047 = vadd.f32 %v1096, %v2046
    %v2048 = vpop.f32.mrb[0].mxu0
    %v2049 = vadd.f32 %v1098, %v2048
    %v2050 = vpop.f32.mrb[0].mxu0
    %v2051 = vadd.f32 %v1100, %v2050
    %v2052 = vpop.f32.mrb[0].mxu0
    %v2053 = vadd.f32 %v1102, %v2052
    %2054 = vmatprep.mubr.bf16.mxu0 %v1263
    %2055 = vmatmul.mubr.bf16.gmra.mrb[0].mxu0 %v1262
    %v2056 = vpop.f32.mrb[0].mxu0
    %v2057 = vadd.f32 %v1106, %v2056
    %v2058 = vpop.f32.mrb[0].mxu0
    %v2059 = vadd.f32 %v1108, %v2058
    %v2060 = vpop.f32.mrb[0].mxu0
    %v2061 = vadd.f32 %v1110, %v2060
    %v2062 = vpop.f32.mrb[0].mxu0
    %v2063 = vadd.f32 %v1112, %v2062
    %2064 = vdwg.mxu0
    %2065 = vmatprep.subr.bf16.mxu0 %v1717
    %2066 = vmatpush1.bf16.msra.mxu0 %v1716
    %2067 = vmatprep.subr.bf16.mxu0 %v1721
    %2068 = vmatpush1.bf16.msra.mxu0 %v1720
    %2069 = vmatprep.subr.bf16.mxu0 %v1725
    %2070 = vmatpush1.bf16.msra.mxu0 %v1724
    %2071 = vmatprep.subr.bf16.mxu0 %v1729
    %2072 = vmatpush1.bf16.msra.mxu0 %v1728
    %2073 = vmatprep.subr.bf16.mxu0 %v1733
    %2074 = vmatpush1.bf16.msra.mxu0 %v1732
    %2075 = vmatprep.subr.bf16.mxu0 %v1737
    %2076 = vmatpush1.bf16.msra.mxu0 %v1736
    %2077 = vmatprep.subr.bf16.mxu0 %v1741
    %2078 = vmatpush1.bf16.msra.mxu0 %v1740
    %2079 = vmatprep.subr.bf16.mxu0 %v1745
    %2080 = vmatpush1.bf16.msra.mxu0 %v1744
    %2081 = vmatprep.subr.bf16.mxu0 %v1749
    %2082 = vmatpush1.bf16.msra.mxu0 %v1748
    %2083 = vmatprep.subr.bf16.mxu0 %v1753
    %2084 = vmatpush1.bf16.msra.mxu0 %v1752
    %2085 = vmatprep.subr.bf16.mxu0 %v1757
    %2086 = vmatpush1.bf16.msra.mxu0 %v1756
    %2087 = vmatprep.subr.bf16.mxu0 %v1761
    %2088 = vmatpush1.bf16.msra.mxu0 %v1760
    %2089 = vmatprep.subr.bf16.mxu0 %v1765
    %2090 = vmatpush1.bf16.msra.mxu0 %v1764
    %2091 = vmatprep.subr.bf16.mxu0 %v1769
    %2092 = vmatpush1.bf16.msra.mxu0 %v1768
    %2093 = vmatprep.subr.bf16.mxu0 %v1773
    %2094 = vmatpush1.bf16.msra.mxu0 %v1772
    %2095 = vmatprep.subr.bf16.mxu0 %v1777
    %2096 = vmatpush1.bf16.msra.mxu0 %v1776
    %2097 = vmatprep.mubr.bf16.mxu0 %v1261
    %2098 = vmatmul.mubr.bf16.gmra.mrb[0].mxu0 %v1260
    %v2099 = vpop.f32.mrb[0].mxu0
    %v2100 = vadd.f32 %v2047, %v2099
    %v2101 = vpop.f32.mrb[0].mxu0
    %v2102 = vadd.f32 %v2049, %v2101
    %v2103 = vpop.f32.mrb[0].mxu0
    %v2104 = vadd.f32 %v2051, %v2103
    %v2105 = vpop.f32.mrb[0].mxu0
    %v2106 = vadd.f32 %v2053, %v2105
    %2107 = vmatprep.mubr.bf16.mxu0 %v1265
    %2108 = vmatmul.mubr.bf16.gmra.mrb[0].mxu0 %v1264
    %v2109 = vpop.f32.mrb[0].mxu0
    %v2110 = vadd.f32 %v2057, %v2109
    %v2111 = vpop.f32.mrb[0].mxu0
    %v2112 = vadd.f32 %v2059, %v2111
    %v2113 = vpop.f32.mrb[0].mxu0
    %v2114 = vadd.f32 %v2061, %v2113
    %v2115 = vpop.f32.mrb[0].mxu0
    %v2116 = vadd.f32 %v2063, %v2115
    %2117 = vdwg.mxu0
    %v2118 = vmax.f32 %v1994, 0.0
    %v2119 = vmax.f32 %v1996, 0.0
    %v2120 = vmax.f32 %v2100, 0.0
    %v2121 = vmax.f32 %v2102, 0.0
    %v2122 = vmax.f32 %v1998, 0.0
    %v2123 = vmax.f32 %v2000, 0.0
    %v2124 = vmax.f32 %v2104, 0.0
    %v2125 = vmax.f32 %v2106, 0.0
    %v2126 = vmax.f32 %v2004, 0.0
    %v2127 = vmax.f32 %v2006, 0.0
    %v2128 = vmax.f32 %v2110, 0.0
    %v2129 = vmax.f32 %v2112, 0.0
    %v2130 = vmax.f32 %v2008, 0.0
    %v2131 = vmax.f32 %v2010, 0.0
    %v2132 = vmax.f32 %v2114, 0.0
    %v2133 = vmax.f32 %v2116, 0.0
    %v2134 = vld [vmem:[#allocation7] sm:$0xff]
    %v2135 = vld [vmem:[#allocation7 + $0x8] sm:$0xff]
    %v2136 = vld [vmem:[#allocation7 + $0x10] sm:$0xff]
    %v2137 = vld [vmem:[#allocation7 + $0x18] sm:$0xff]
    %v2138 = vld [vmem:[#allocation7 + $0x20] sm:$0xff]
    %v2139 = vld [vmem:[#allocation7 + $0x28] sm:$0xff]
    %v2140 = vld [vmem:[#allocation7 + $0x30] sm:$0xff]
    %v2141 = vld [vmem:[#allocation7 + $0x38] sm:$0xff]
    %v2142 = vld [vmem:[#allocation7 + $0x40] sm:$0xff]
    %v2143 = vld [vmem:[#allocation7 + $0x48] sm:$0xff]
    %v2144 = vld [vmem:[#allocation7 + $0x50] sm:$0xff]
    %v2145 = vld [vmem:[#allocation7 + $0x58] sm:$0xff]
    %v2146 = vld [vmem:[#allocation7 + $0x60] sm:$0xff]
    %v2147 = vld [vmem:[#allocation7 + $0x68] sm:$0xff]
    %v2148 = vld [vmem:[#allocation7 + $0x70] sm:$0xff]
    %v2149 = vld [vmem:[#allocation7 + $0x78] sm:$0xff]
    %v2150 = vld [vmem:[#allocation7 + $0x80] sm:$0xff]
    %v2151 = vld [vmem:[#allocation7 + $0x88] sm:$0xff]
    %v2152 = vld [vmem:[#allocation7 + $0x90] sm:$0xff]
    %v2153 = vld [vmem:[#allocation7 + $0x98] sm:$0xff]
    %v2154 = vld [vmem:[#allocation7 + $0xa0] sm:$0xff]
    %v2155 = vld [vmem:[#allocation7 + $0xa8] sm:$0xff]
    %v2156 = vld [vmem:[#allocation7 + $0xb0] sm:$0xff]
    %v2157 = vld [vmem:[#allocation7 + $0xb8] sm:$0xff]
    %v2158 = vld [vmem:[#allocation7 + $0xc0] sm:$0xff]
    %v2159 = vld [vmem:[#allocation7 + $0xc8] sm:$0xff]
    %v2160 = vld [vmem:[#allocation7 + $0xd0] sm:$0xff]
    %v2161 = vld [vmem:[#allocation7 + $0xd8] sm:$0xff]
    %v2162 = vld [vmem:[#allocation7 + $0xe0] sm:$0xff]
    %v2163 = vld [vmem:[#allocation7 + $0xe8] sm:$0xff]
    %v2164 = vld [vmem:[#allocation7 + $0xf0] sm:$0xff]
    %v2165 = vld [vmem:[#allocation7 + $0xf8] sm:$0xff]
    %v2166 = vld [vmem:[#allocation7 + $0x100] sm:$0xff]
    %v2167 = vld [vmem:[#allocation7 + $0x108] sm:$0xff]
    %v2168 = vld [vmem:[#allocation7 + $0x110] sm:$0xff]
    %v2169 = vld [vmem:[#allocation7 + $0x118] sm:$0xff]
    %v2170 = vld [vmem:[#allocation7 + $0x120] sm:$0xff]
    %v2171 = vld [vmem:[#allocation7 + $0x128] sm:$0xff]
    %v2172 = vld [vmem:[#allocation7 + $0x130] sm:$0xff]
    %v2173 = vld [vmem:[#allocation7 + $0x138] sm:$0xff]
    %v2174 = vld [vmem:[#allocation7 + $0x140] sm:$0xff]
    %v2175 = vld [vmem:[#allocation7 + $0x148] sm:$0xff]
    %v2176 = vld [vmem:[#allocation7 + $0x150] sm:$0xff]
    %v2177 = vld [vmem:[#allocation7 + $0x158] sm:$0xff]
    %v2178 = vld [vmem:[#allocation7 + $0x160] sm:$0xff]
    %v2179 = vld [vmem:[#allocation7 + $0x168] sm:$0xff]
    %v2180 = vld [vmem:[#allocation7 + $0x170] sm:$0xff]
    %v2181 = vld [vmem:[#allocation7 + $0x178] sm:$0xff]
    %v2182 = vld [vmem:[#allocation7 + $0x180] sm:$0xff]
    %v2183 = vld [vmem:[#allocation7 + $0x188] sm:$0xff]
    %v2184 = vld [vmem:[#allocation7 + $0x190] sm:$0xff]
    %v2185 = vld [vmem:[#allocation7 + $0x198] sm:$0xff]
    %v2186 = vld [vmem:[#allocation7 + $0x1a0] sm:$0xff]
    %v2187 = vld [vmem:[#allocation7 + $0x1a8] sm:$0xff]
    %v2188 = vld [vmem:[#allocation7 + $0x1b0] sm:$0xff]
    %v2189 = vld [vmem:[#allocation7 + $0x1b8] sm:$0xff]
    %v2190 = vld [vmem:[#allocation7 + $0x1c0] sm:$0xff]
    %v2191 = vld [vmem:[#allocation7 + $0x1c8] sm:$0xff]
    %v2192 = vld [vmem:[#allocation7 + $0x1d0] sm:$0xff]
    %v2193 = vld [vmem:[#allocation7 + $0x1d8] sm:$0xff]
    %v2194 = vld [vmem:[#allocation7 + $0x1e0] sm:$0xff]
    %v2195 = vld [vmem:[#allocation7 + $0x1e8] sm:$0xff]
    %v2196 = vld [vmem:[#allocation7 + $0x1f0] sm:$0xff]
    %v2197 = vld [vmem:[#allocation7 + $0x1f8] sm:$0xff]
    %v2198 = vld [vmem:[#allocation7 + $0x200] sm:$0xff]
    %v2199 = vld [vmem:[#allocation7 + $0x208] sm:$0xff]
    %v2200 = vld [vmem:[#allocation7 + $0x210] sm:$0xff]
    %v2201 = vld [vmem:[#allocation7 + $0x218] sm:$0xff]
    %v2202 = vld [vmem:[#allocation7 + $0x220] sm:$0xff]
    %v2203 = vld [vmem:[#allocation7 + $0x228] sm:$0xff]
    %v2204 = vld [vmem:[#allocation7 + $0x230] sm:$0xff]
    %v2205 = vld [vmem:[#allocation7 + $0x238] sm:$0xff]
    %v2206 = vld [vmem:[#allocation7 + $0x240] sm:$0xff]
    %v2207 = vld [vmem:[#allocation7 + $0x248] sm:$0xff]
    %v2208 = vld [vmem:[#allocation7 + $0x250] sm:$0xff]
    %v2209 = vld [vmem:[#allocation7 + $0x258] sm:$0xff]
    %v2210 = vld [vmem:[#allocation7 + $0x260] sm:$0xff]
    %v2211 = vld [vmem:[#allocation7 + $0x268] sm:$0xff]
    %v2212 = vld [vmem:[#allocation7 + $0x270] sm:$0xff]
    %v2213 = vld [vmem:[#allocation7 + $0x278] sm:$0xff]
    %v2214 = vld [vmem:[#allocation7 + $0x280] sm:$0xff]
    %v2215 = vld [vmem:[#allocation7 + $0x288] sm:$0xff]
    %v2216 = vld [vmem:[#allocation7 + $0x290] sm:$0xff]
    %v2217 = vld [vmem:[#allocation7 + $0x298] sm:$0xff]
    %v2218 = vld [vmem:[#allocation7 + $0x2a0] sm:$0xff]
    %v2219 = vld [vmem:[#allocation7 + $0x2a8] sm:$0xff]
    %v2220 = vld [vmem:[#allocation7 + $0x2b0] sm:$0xff]
    %v2221 = vld [vmem:[#allocation7 + $0x2b8] sm:$0xff]
    %v2222 = vld [vmem:[#allocation7 + $0x2c0] sm:$0xff]
    %v2223 = vld [vmem:[#allocation7 + $0x2c8] sm:$0xff]
    %v2224 = vld [vmem:[#allocation7 + $0x2d0] sm:$0xff]
    %v2225 = vld [vmem:[#allocation7 + $0x2d8] sm:$0xff]
    %v2226 = vld [vmem:[#allocation7 + $0x2e0] sm:$0xff]
    %v2227 = vld [vmem:[#allocation7 + $0x2e8] sm:$0xff]
    %v2228 = vld [vmem:[#allocation7 + $0x2f0] sm:$0xff]
    %v2229 = vld [vmem:[#allocation7 + $0x2f8] sm:$0xff]
    %v2230 = vld [vmem:[#allocation7 + $0x300] sm:$0xff]
    %v2231 = vld [vmem:[#allocation7 + $0x308] sm:$0xff]
    %v2232 = vld [vmem:[#allocation7 + $0x310] sm:$0xff]
    %v2233 = vld [vmem:[#allocation7 + $0x318] sm:$0xff]
    %v2234 = vld [vmem:[#allocation7 + $0x320] sm:$0xff]
    %v2235 = vld [vmem:[#allocation7 + $0x328] sm:$0xff]
    %v2236 = vld [vmem:[#allocation7 + $0x330] sm:$0xff]
    %v2237 = vld [vmem:[#allocation7 + $0x338] sm:$0xff]
    %v2238 = vld [vmem:[#allocation7 + $0x340] sm:$0xff]
    %v2239 = vld [vmem:[#allocation7 + $0x348] sm:$0xff]
    %v2240 = vld [vmem:[#allocation7 + $0x350] sm:$0xff]
    %v2241 = vld [vmem:[#allocation7 + $0x358] sm:$0xff]
    %v2242 = vld [vmem:[#allocation7 + $0x360] sm:$0xff]
    %v2243 = vld [vmem:[#allocation7 + $0x368] sm:$0xff]
    %v2244 = vld [vmem:[#allocation7 + $0x370] sm:$0xff]
    %v2245 = vld [vmem:[#allocation7 + $0x378] sm:$0xff]
    %v2246 = vld [vmem:[#allocation7 + $0x380] sm:$0xff]
    %v2247 = vld [vmem:[#allocation7 + $0x388] sm:$0xff]
    %v2248 = vld [vmem:[#allocation7 + $0x390] sm:$0xff]
    %v2249 = vld [vmem:[#allocation7 + $0x398] sm:$0xff]
    %v2250 = vld [vmem:[#allocation7 + $0x3a0] sm:$0xff]
    %v2251 = vld [vmem:[#allocation7 + $0x3a8] sm:$0xff]
    %v2252 = vld [vmem:[#allocation7 + $0x3b0] sm:$0xff]
    %v2253 = vld [vmem:[#allocation7 + $0x3b8] sm:$0xff]
    %v2254 = vld [vmem:[#allocation7 + $0x3c0] sm:$0xff]
    %v2255 = vld [vmem:[#allocation7 + $0x3c8] sm:$0xff]
    %v2256 = vld [vmem:[#allocation7 + $0x3d0] sm:$0xff]
    %v2257 = vld [vmem:[#allocation7 + $0x3d8] sm:$0xff]
    %v2258 = vld [vmem:[#allocation7 + $0x3e0] sm:$0xff]
    %v2259 = vld [vmem:[#allocation7 + $0x3e8] sm:$0xff]
    %v2260 = vld [vmem:[#allocation7 + $0x3f0] sm:$0xff]
    %v2261 = vld [vmem:[#allocation7 + $0x3f8] sm:$0xff]
    %v2262 = vpack.c.bf16 %v2122, %v2118
    %v2263 = vpack.c.bf16 %v2123, %v2119
    %v2264 = vpack.c.bf16 %v2124, %v2120
    %v2265 = vpack.c.bf16 %v2125, %v2121
    %v2266 = vpack.c.bf16 %v2130, %v2126
    %v2267 = vpack.c.bf16 %v2131, %v2127
    %v2268 = vpack.c.bf16 %v2132, %v2128
    %v2269 = vpack.c.bf16 %v2133, %v2129
    %v2398 = vunpack.c.l.b16 %v2134
    %v2399 = vunpack.c.h.b16 %v2134
    %v2400 = vunpack.c.l.b16 %v2135
    %v2401 = vunpack.c.h.b16 %v2135
    %v2402 = vunpack.c.l.b16 %v2136
    %v2403 = vunpack.c.h.b16 %v2136
    %v2404 = vunpack.c.l.b16 %v2137
    %v2405 = vunpack.c.h.b16 %v2137
    %v2406 = vunpack.c.l.b16 %v2138
    %v2407 = vunpack.c.h.b16 %v2138
    %v2408 = vunpack.c.l.b16 %v2139
    %v2409 = vunpack.c.h.b16 %v2139
    %v2410 = vunpack.c.l.b16 %v2140
    %v2411 = vunpack.c.h.b16 %v2140
    %v2412 = vunpack.c.l.b16 %v2141
    %v2413 = vunpack.c.h.b16 %v2141
    %v2414 = vunpack.c.l.b16 %v2142
    %v2415 = vunpack.c.h.b16 %v2142
    %v2416 = vunpack.c.l.b16 %v2143
    %v2417 = vunpack.c.h.b16 %v2143
    %v2418 = vunpack.c.l.b16 %v2144
    %v2419 = vunpack.c.h.b16 %v2144
    %v2420 = vunpack.c.l.b16 %v2145
    %v2421 = vunpack.c.h.b16 %v2145
    %v2422 = vunpack.c.l.b16 %v2146
    %v2423 = vunpack.c.h.b16 %v2146
    %v2424 = vunpack.c.l.b16 %v2147
    %v2425 = vunpack.c.h.b16 %v2147
    %v2426 = vunpack.c.l.b16 %v2148
    %v2427 = vunpack.c.h.b16 %v2148
    %v2428 = vunpack.c.l.b16 %v2149
    %v2429 = vunpack.c.h.b16 %v2149
    %v2430 = vunpack.c.l.b16 %v2150
    %v2431 = vunpack.c.h.b16 %v2150
    %v2432 = vunpack.c.l.b16 %v2151
    %v2433 = vunpack.c.h.b16 %v2151
    %v2434 = vunpack.c.l.b16 %v2152
    %v2435 = vunpack.c.h.b16 %v2152
    %v2436 = vunpack.c.l.b16 %v2153
    %v2437 = vunpack.c.h.b16 %v2153
    %v2438 = vunpack.c.l.b16 %v2154
    %v2439 = vunpack.c.h.b16 %v2154
    %v2440 = vunpack.c.l.b16 %v2155
    %v2441 = vunpack.c.h.b16 %v2155
    %v2442 = vunpack.c.l.b16 %v2156
    %v2443 = vunpack.c.h.b16 %v2156
    %v2444 = vunpack.c.l.b16 %v2157
    %v2445 = vunpack.c.h.b16 %v2157
    %v2446 = vunpack.c.l.b16 %v2158
    %v2447 = vunpack.c.h.b16 %v2158
    %v2448 = vunpack.c.l.b16 %v2159
    %v2449 = vunpack.c.h.b16 %v2159
    %v2450 = vunpack.c.l.b16 %v2160
    %v2451 = vunpack.c.h.b16 %v2160
    %v2452 = vunpack.c.l.b16 %v2161
    %v2453 = vunpack.c.h.b16 %v2161
    %v2454 = vunpack.c.l.b16 %v2162
    %v2455 = vunpack.c.h.b16 %v2162
    %v2456 = vunpack.c.l.b16 %v2163
    %v2457 = vunpack.c.h.b16 %v2163
    %v2458 = vunpack.c.l.b16 %v2164
    %v2459 = vunpack.c.h.b16 %v2164
    %v2460 = vunpack.c.l.b16 %v2165
    %v2461 = vunpack.c.h.b16 %v2165
    %v2462 = vunpack.c.l.b16 %v2166
    %v2463 = vunpack.c.h.b16 %v2166
    %v2464 = vunpack.c.l.b16 %v2167
    %v2465 = vunpack.c.h.b16 %v2167
    %v2466 = vunpack.c.l.b16 %v2168
    %v2467 = vunpack.c.h.b16 %v2168
    %v2468 = vunpack.c.l.b16 %v2169
    %v2469 = vunpack.c.h.b16 %v2169
    %v2470 = vunpack.c.l.b16 %v2170
    %v2471 = vunpack.c.h.b16 %v2170
    %v2472 = vunpack.c.l.b16 %v2171
    %v2473 = vunpack.c.h.b16 %v2171
    %v2474 = vunpack.c.l.b16 %v2172
    %v2475 = vunpack.c.h.b16 %v2172
    %v2476 = vunpack.c.l.b16 %v2173
    %v2477 = vunpack.c.h.b16 %v2173
    %v2478 = vunpack.c.l.b16 %v2174
    %v2479 = vunpack.c.h.b16 %v2174
    %v2480 = vunpack.c.l.b16 %v2175
    %v2481 = vunpack.c.h.b16 %v2175
    %v2482 = vunpack.c.l.b16 %v2176
    %v2483 = vunpack.c.h.b16 %v2176
    %v2484 = vunpack.c.l.b16 %v2177
    %v2485 = vunpack.c.h.b16 %v2177
    %v2486 = vunpack.c.l.b16 %v2178
    %v2487 = vunpack.c.h.b16 %v2178
    %v2488 = vunpack.c.l.b16 %v2179
    %v2489 = vunpack.c.h.b16 %v2179
    %v2490 = vunpack.c.l.b16 %v2180
    %v2491 = vunpack.c.h.b16 %v2180
    %v2492 = vunpack.c.l.b16 %v2181
    %v2493 = vunpack.c.h.b16 %v2181
    %v2494 = vunpack.c.l.b16 %v2182
    %v2495 = vunpack.c.h.b16 %v2182
    %v2496 = vunpack.c.l.b16 %v2183
    %v2497 = vunpack.c.h.b16 %v2183
    %v2498 = vunpack.c.l.b16 %v2184
    %v2499 = vunpack.c.h.b16 %v2184
    %v2500 = vunpack.c.l.b16 %v2185
    %v2501 = vunpack.c.h.b16 %v2185
    %v2502 = vunpack.c.l.b16 %v2186
    %v2503 = vunpack.c.h.b16 %v2186
    %v2504 = vunpack.c.l.b16 %v2187
    %v2505 = vunpack.c.h.b16 %v2187
    %v2506 = vunpack.c.l.b16 %v2188
    %v2507 = vunpack.c.h.b16 %v2188
    %v2508 = vunpack.c.l.b16 %v2189
    %v2509 = vunpack.c.h.b16 %v2189
    %v2510 = vunpack.c.l.b16 %v2190
    %v2511 = vunpack.c.h.b16 %v2190
    %v2512 = vunpack.c.l.b16 %v2191
    %v2513 = vunpack.c.h.b16 %v2191
    %v2514 = vunpack.c.l.b16 %v2192
    %v2515 = vunpack.c.h.b16 %v2192
    %v2516 = vunpack.c.l.b16 %v2193
    %v2517 = vunpack.c.h.b16 %v2193
    %v2518 = vunpack.c.l.b16 %v2194
    %v2519 = vunpack.c.h.b16 %v2194
    %v2520 = vunpack.c.l.b16 %v2195
    %v2521 = vunpack.c.h.b16 %v2195
    %v2522 = vunpack.c.l.b16 %v2196
    %v2523 = vunpack.c.h.b16 %v2196
    %v2524 = vunpack.c.l.b16 %v2197
    %v2525 = vunpack.c.h.b16 %v2197
    %v2526 = vunpack.c.l.b16 %v2198
    %v2527 = vunpack.c.h.b16 %v2198
    %v2528 = vunpack.c.l.b16 %v2199
    %v2529 = vunpack.c.h.b16 %v2199
    %v2530 = vunpack.c.l.b16 %v2200
    %v2531 = vunpack.c.h.b16 %v2200
    %v2532 = vunpack.c.l.b16 %v2201
    %v2533 = vunpack.c.h.b16 %v2201
    %v2534 = vunpack.c.l.b16 %v2202
    %v2535 = vunpack.c.h.b16 %v2202
    %v2536 = vunpack.c.l.b16 %v2203
    %v2537 = vunpack.c.h.b16 %v2203
    %v2538 = vunpack.c.l.b16 %v2204
    %v2539 = vunpack.c.h.b16 %v2204
    %v2540 = vunpack.c.l.b16 %v2205
    %v2541 = vunpack.c.h.b16 %v2205
    %v2542 = vunpack.c.l.b16 %v2206
    %v2543 = vunpack.c.h.b16 %v2206
    %v2544 = vunpack.c.l.b16 %v2207
    %v2545 = vunpack.c.h.b16 %v2207
    %v2546 = vunpack.c.l.b16 %v2208
    %v2547 = vunpack.c.h.b16 %v2208
    %v2548 = vunpack.c.l.b16 %v2209
    %v2549 = vunpack.c.h.b16 %v2209
    %v2550 = vunpack.c.l.b16 %v2210
    %v2551 = vunpack.c.h.b16 %v2210
    %v2552 = vunpack.c.l.b16 %v2211
    %v2553 = vunpack.c.h.b16 %v2211
    %v2554 = vunpack.c.l.b16 %v2212
    %v2555 = vunpack.c.h.b16 %v2212
    %v2556 = vunpack.c.l.b16 %v2213
    %v2557 = vunpack.c.h.b16 %v2213
    %v2558 = vunpack.c.l.b16 %v2214
    %v2559 = vunpack.c.h.b16 %v2214
    %v2560 = vunpack.c.l.b16 %v2215
    %v2561 = vunpack.c.h.b16 %v2215
    %v2562 = vunpack.c.l.b16 %v2216
    %v2563 = vunpack.c.h.b16 %v2216
    %v2564 = vunpack.c.l.b16 %v2217
    %v2565 = vunpack.c.h.b16 %v2217
    %v2566 = vunpack.c.l.b16 %v2218
    %v2567 = vunpack.c.h.b16 %v2218
    %v2568 = vunpack.c.l.b16 %v2219
    %v2569 = vunpack.c.h.b16 %v2219
    %v2570 = vunpack.c.l.b16 %v2220
    %v2571 = vunpack.c.h.b16 %v2220
    %v2572 = vunpack.c.l.b16 %v2221
    %v2573 = vunpack.c.h.b16 %v2221
    %v2574 = vunpack.c.l.b16 %v2222
    %v2575 = vunpack.c.h.b16 %v2222
    %v2576 = vunpack.c.l.b16 %v2223
    %v2577 = vunpack.c.h.b16 %v2223
    %v2578 = vunpack.c.l.b16 %v2224
    %v2579 = vunpack.c.h.b16 %v2224
    %v2580 = vunpack.c.l.b16 %v2225
    %v2581 = vunpack.c.h.b16 %v2225
    %v2582 = vunpack.c.l.b16 %v2226
    %v2583 = vunpack.c.h.b16 %v2226
    %v2584 = vunpack.c.l.b16 %v2227
    %v2585 = vunpack.c.h.b16 %v2227
    %v2586 = vunpack.c.l.b16 %v2228
    %v2587 = vunpack.c.h.b16 %v2228
    %v2588 = vunpack.c.l.b16 %v2229
    %v2589 = vunpack.c.h.b16 %v2229
    %v2590 = vunpack.c.l.b16 %v2230
    %v2591 = vunpack.c.h.b16 %v2230
    %v2592 = vunpack.c.l.b16 %v2231
    %v2593 = vunpack.c.h.b16 %v2231
    %v2594 = vunpack.c.l.b16 %v2232
    %v2595 = vunpack.c.h.b16 %v2232
    %v2596 = vunpack.c.l.b16 %v2233
    %v2597 = vunpack.c.h.b16 %v2233
    %v2598 = vunpack.c.l.b16 %v2234
    %v2599 = vunpack.c.h.b16 %v2234
    %v2600 = vunpack.c.l.b16 %v2235
    %v2601 = vunpack.c.h.b16 %v2235
    %v2602 = vunpack.c.l.b16 %v2236
    %v2603 = vunpack.c.h.b16 %v2236
    %v2604 = vunpack.c.l.b16 %v2237
    %v2605 = vunpack.c.h.b16 %v2237
    %v2606 = vunpack.c.l.b16 %v2238
    %v2607 = vunpack.c.h.b16 %v2238
    %v2608 = vunpack.c.l.b16 %v2239
    %v2609 = vunpack.c.h.b16 %v2239
    %v2610 = vunpack.c.l.b16 %v2240
    %v2611 = vunpack.c.h.b16 %v2240
    %v2612 = vunpack.c.l.b16 %v2241
    %v2613 = vunpack.c.h.b16 %v2241
    %v2614 = vunpack.c.l.b16 %v2242
    %v2615 = vunpack.c.h.b16 %v2242
    %v2616 = vunpack.c.l.b16 %v2243
    %v2617 = vunpack.c.h.b16 %v2243
    %v2618 = vunpack.c.l.b16 %v2244
    %v2619 = vunpack.c.h.b16 %v2244
    %v2620 = vunpack.c.l.b16 %v2245
    %v2621 = vunpack.c.h.b16 %v2245
    %v2622 = vunpack.c.l.b16 %v2246
    %v2623 = vunpack.c.h.b16 %v2246
    %v2624 = vunpack.c.l.b16 %v2247
    %v2625 = vunpack.c.h.b16 %v2247
    %v2626 = vunpack.c.l.b16 %v2248
    %v2627 = vunpack.c.h.b16 %v2248
    %v2628 = vunpack.c.l.b16 %v2249
    %v2629 = vunpack.c.h.b16 %v2249
    %v2630 = vunpack.c.l.b16 %v2250
    %v2631 = vunpack.c.h.b16 %v2250
    %v2632 = vunpack.c.l.b16 %v2251
    %v2633 = vunpack.c.h.b16 %v2251
    %v2634 = vunpack.c.l.b16 %v2252
    %v2635 = vunpack.c.h.b16 %v2252
    %v2636 = vunpack.c.l.b16 %v2253
    %v2637 = vunpack.c.h.b16 %v2253
    %v2638 = vunpack.c.l.b16 %v2254
    %v2639 = vunpack.c.h.b16 %v2254
    %v2640 = vunpack.c.l.b16 %v2255
    %v2641 = vunpack.c.h.b16 %v2255
    %v2642 = vunpack.c.l.b16 %v2256
    %v2643 = vunpack.c.h.b16 %v2256
    %v2644 = vunpack.c.l.b16 %v2257
    %v2645 = vunpack.c.h.b16 %v2257
    %v2646 = vunpack.c.l.b16 %v2258
    %v2647 = vunpack.c.h.b16 %v2258
    %v2648 = vunpack.c.l.b16 %v2259
    %v2649 = vunpack.c.h.b16 %v2259
    %v2650 = vunpack.c.l.b16 %v2260
    %v2651 = vunpack.c.h.b16 %v2260
    %v2652 = vunpack.c.l.b16 %v2261
    %v2653 = vunpack.c.h.b16 %v2261
    %v2654 = vpack.c.b16 %v2402, %v2398
    %v2655 = vpack.c.b16 %v2403, %v2399
    %v2656 = vpack.c.b16 %v2404, %v2400
    %v2657 = vpack.c.b16 %v2405, %v2401
    %v2658 = vpack.c.b16 %v2410, %v2406
    %v2659 = vpack.c.b16 %v2411, %v2407
    %v2660 = vpack.c.b16 %v2412, %v2408
    %v2661 = vpack.c.b16 %v2413, %v2409
    %v2662 = vpack.c.b16 %v2418, %v2414
    %v2663 = vpack.c.b16 %v2419, %v2415
    %v2664 = vpack.c.b16 %v2420, %v2416
    %v2665 = vpack.c.b16 %v2421, %v2417
    %v2666 = vpack.c.b16 %v2426, %v2422
    %v2667 = vpack.c.b16 %v2427, %v2423
    %v2668 = vpack.c.b16 %v2428, %v2424
    %v2669 = vpack.c.b16 %v2429, %v2425
    %v2670 = vpack.c.b16 %v2434, %v2430
    %v2671 = vpack.c.b16 %v2435, %v2431
    %v2672 = vpack.c.b16 %v2436, %v2432
    %v2673 = vpack.c.b16 %v2437, %v2433
    %v2674 = vpack.c.b16 %v2442, %v2438
    %v2675 = vpack.c.b16 %v2443, %v2439
    %v2676 = vpack.c.b16 %v2444, %v2440
    %v2677 = vpack.c.b16 %v2445, %v2441
    %v2678 = vpack.c.b16 %v2450, %v2446
    %v2679 = vpack.c.b16 %v2451, %v2447
    %v2680 = vpack.c.b16 %v2452, %v2448
    %v2681 = vpack.c.b16 %v2453, %v2449
    %v2682 = vpack.c.b16 %v2458, %v2454
    %v2683 = vpack.c.b16 %v2459, %v2455
    %v2684 = vpack.c.b16 %v2460, %v2456
    %v2685 = vpack.c.b16 %v2461, %v2457
    %v2686 = vpack.c.b16 %v2466, %v2462
    %v2687 = vpack.c.b16 %v2467, %v2463
    %v2688 = vpack.c.b16 %v2468, %v2464
    %v2689 = vpack.c.b16 %v2469, %v2465
    %v2690 = vpack.c.b16 %v2474, %v2470
    %v2691 = vpack.c.b16 %v2475, %v2471
    %v2692 = vpack.c.b16 %v2476, %v2472
    %v2693 = vpack.c.b16 %v2477, %v2473
    %v2694 = vpack.c.b16 %v2482, %v2478
    %v2695 = vpack.c.b16 %v2483, %v2479
    %v2696 = vpack.c.b16 %v2484, %v2480
    %v2697 = vpack.c.b16 %v2485, %v2481
    %v2698 = vpack.c.b16 %v2490, %v2486
    %v2699 = vpack.c.b16 %v2491, %v2487
    %v2700 = vpack.c.b16 %v2492, %v2488
    %v2701 = vpack.c.b16 %v2493, %v2489
    %v2702 = vpack.c.b16 %v2498, %v2494
    %v2703 = vpack.c.b16 %v2499, %v2495
    %v2704 = vpack.c.b16 %v2500, %v2496
    %v2705 = vpack.c.b16 %v2501, %v2497
    %v2706 = vpack.c.b16 %v2506, %v2502
    %v2707 = vpack.c.b16 %v2507, %v2503
    %v2708 = vpack.c.b16 %v2508, %v2504
    %v2709 = vpack.c.b16 %v2509, %v2505
    %v2710 = vpack.c.b16 %v2514, %v2510
    %v2711 = vpack.c.b16 %v2515, %v2511
    %v2712 = vpack.c.b16 %v2516, %v2512
    %v2713 = vpack.c.b16 %v2517, %v2513
    %v2714 = vpack.c.b16 %v2522, %v2518
    %v2715 = vpack.c.b16 %v2523, %v2519
    %v2716 = vpack.c.b16 %v2524, %v2520
    %v2717 = vpack.c.b16 %v2525, %v2521
    %v2718 = vpack.c.b16 %v2530, %v2526
    %v2719 = vpack.c.b16 %v2531, %v2527
    %v2720 = vpack.c.b16 %v2532, %v2528
    %v2721 = vpack.c.b16 %v2533, %v2529
    %v2722 = vpack.c.b16 %v2538, %v2534
    %v2723 = vpack.c.b16 %v2539, %v2535
    %v2724 = vpack.c.b16 %v2540, %v2536
    %v2725 = vpack.c.b16 %v2541, %v2537
    %v2726 = vpack.c.b16 %v2546, %v2542
    %v2727 = vpack.c.b16 %v2547, %v2543
    %v2728 = vpack.c.b16 %v2548, %v2544
    %v2729 = vpack.c.b16 %v2549, %v2545
    %v2730 = vpack.c.b16 %v2554, %v2550
    %v2731 = vpack.c.b16 %v2555, %v2551
    %v2732 = vpack.c.b16 %v2556, %v2552
    %v2733 = vpack.c.b16 %v2557, %v2553
    %v2734 = vpack.c.b16 %v2562, %v2558
    %v2735 = vpack.c.b16 %v2563, %v2559
    %v2736 = vpack.c.b16 %v2564, %v2560
    %v2737 = vpack.c.b16 %v2565, %v2561
    %v2738 = vpack.c.b16 %v2570, %v2566
    %v2739 = vpack.c.b16 %v2571, %v2567
    %v2740 = vpack.c.b16 %v2572, %v2568
    %v2741 = vpack.c.b16 %v2573, %v2569
    %v2742 = vpack.c.b16 %v2578, %v2574
    %v2743 = vpack.c.b16 %v2579, %v2575
    %v2744 = vpack.c.b16 %v2580, %v2576
    %v2745 = vpack.c.b16 %v2581, %v2577
    %v2746 = vpack.c.b16 %v2586, %v2582
    %v2747 = vpack.c.b16 %v2587, %v2583
    %v2748 = vpack.c.b16 %v2588, %v2584
    %v2749 = vpack.c.b16 %v2589, %v2585
    %v2750 = vpack.c.b16 %v2594, %v2590
    %v2751 = vpack.c.b16 %v2595, %v2591
    %v2752 = vpack.c.b16 %v2596, %v2592
    %v2753 = vpack.c.b16 %v2597, %v2593
    %v2754 = vpack.c.b16 %v2602, %v2598
    %v2755 = vpack.c.b16 %v2603, %v2599
    %v2756 = vpack.c.b16 %v2604, %v2600
    %v2757 = vpack.c.b16 %v2605, %v2601
    %v2758 = vpack.c.b16 %v2610, %v2606
    %v2759 = vpack.c.b16 %v2611, %v2607
    %v2760 = vpack.c.b16 %v2612, %v2608
    %v2761 = vpack.c.b16 %v2613, %v2609
    %v2762 = vpack.c.b16 %v2618, %v2614
    %v2763 = vpack.c.b16 %v2619, %v2615
    %v2764 = vpack.c.b16 %v2620, %v2616
    %v2765 = vpack.c.b16 %v2621, %v2617
    %v2766 = vpack.c.b16 %v2626, %v2622
    %v2767 = vpack.c.b16 %v2627, %v2623
    %v2768 = vpack.c.b16 %v2628, %v2624
    %v2769 = vpack.c.b16 %v2629, %v2625
    %v2770 = vpack.c.b16 %v2634, %v2630
    %v2771 = vpack.c.b16 %v2635, %v2631
    %v2772 = vpack.c.b16 %v2636, %v2632
    %v2773 = vpack.c.b16 %v2637, %v2633
    %v2774 = vpack.c.b16 %v2642, %v2638
    %v2775 = vpack.c.b16 %v2643, %v2639
    %v2776 = vpack.c.b16 %v2644, %v2640
    %v2777 = vpack.c.b16 %v2645, %v2641
    %v2778 = vpack.c.b16 %v2650, %v2646
    %v2779 = vpack.c.b16 %v2651, %v2647
    %v2780 = vpack.c.b16 %v2652, %v2648
    %v2781 = vpack.c.b16 %v2653, %v2649
    %2910 = vmatprep.subr.bf16.mxu0 %v2655
    %2911 = vmatpush1.bf16.msra.mxu0 %v2654
    %2912 = vmatprep.subr.bf16.mxu0 %v2659
    %2913 = vmatpush1.bf16.msra.mxu0 %v2658
    %2914 = vmatprep.subr.bf16.mxu0 %v2663
    %2915 = vmatpush1.bf16.msra.mxu0 %v2662
    %2916 = vmatprep.subr.bf16.mxu0 %v2667
    %2917 = vmatpush1.bf16.msra.mxu0 %v2666
    %2918 = vmatprep.subr.bf16.mxu0 %v2671
    %2919 = vmatpush1.bf16.msra.mxu0 %v2670
    %2920 = vmatprep.subr.bf16.mxu0 %v2675
    %2921 = vmatpush1.bf16.msra.mxu0 %v2674
    %2922 = vmatprep.subr.bf16.mxu0 %v2679
    %2923 = vmatpush1.bf16.msra.mxu0 %v2678
    %2924 = vmatprep.subr.bf16.mxu0 %v2683
    %2925 = vmatpush1.bf16.msra.mxu0 %v2682
    %2926 = vmatprep.subr.bf16.mxu0 %v2687
    %2927 = vmatpush1.bf16.msra.mxu0 %v2686
    %2928 = vmatprep.subr.bf16.mxu0 %v2691
    %2929 = vmatpush1.bf16.msra.mxu0 %v2690
    %2930 = vmatprep.subr.bf16.mxu0 %v2695
    %2931 = vmatpush1.bf16.msra.mxu0 %v2694
    %2932 = vmatprep.subr.bf16.mxu0 %v2699
    %2933 = vmatpush1.bf16.msra.mxu0 %v2698
    %2934 = vmatprep.subr.bf16.mxu0 %v2703
    %2935 = vmatpush1.bf16.msra.mxu0 %v2702
    %2936 = vmatprep.subr.bf16.mxu0 %v2707
    %2937 = vmatpush1.bf16.msra.mxu0 %v2706
    %2938 = vmatprep.subr.bf16.mxu0 %v2711
    %2939 = vmatpush1.bf16.msra.mxu0 %v2710
    %2940 = vmatprep.subr.bf16.mxu0 %v2715
    %2941 = vmatpush1.bf16.msra.mxu0 %v2714
    %2942 = vmatprep.mubr.bf16.mxu0 %v2263
    %2943 = vmatmul.mubr.bf16.gmra.mrb[0].mxu0 %v2262
    %v2944 = vpop.f32.mrb[0].mxu0
    %v2945 = vadd.f32 0.0, %v2944
    %v2946 = vpop.f32.mrb[0].mxu0
    %v2947 = vadd.f32 0.0, %v2946
    %v2948 = vpop.f32.mrb[0].mxu0
    %v2949 = vadd.f32 0.0, %v2948
    %v2950 = vpop.f32.mrb[0].mxu0
    %v2951 = vadd.f32 0.0, %v2950
    %2952 = vmatprep.mubr.bf16.mxu0 %v2267
    %2953 = vmatmul.mubr.bf16.gmra.mrb[0].mxu0 %v2266
    %v2954 = vpop.f32.mrb[0].mxu0
    %v2955 = vadd.f32 0.0, %v2954
    %v2956 = vpop.f32.mrb[0].mxu0
    %v2957 = vadd.f32 0.0, %v2956
    %v2958 = vpop.f32.mrb[0].mxu0
    %v2959 = vadd.f32 0.0, %v2958
    %v2960 = vpop.f32.mrb[0].mxu0
    %v2961 = vadd.f32 0.0, %v2960
    %2962 = vdwg.mxu0
    %2963 = vmatprep.subr.bf16.mxu0 %v2719
    %2964 = vmatpush1.bf16.msra.mxu0 %v2718
    %2965 = vmatprep.subr.bf16.mxu0 %v2723
    %2966 = vmatpush1.bf16.msra.mxu0 %v2722
    %2967 = vmatprep.subr.bf16.mxu0 %v2727
    %2968 = vmatpush1.bf16.msra.mxu0 %v2726
    %2969 = vmatprep.subr.bf16.mxu0 %v2731
    %2970 = vmatpush1.bf16.msra.mxu0 %v2730
    %2971 = vmatprep.subr.bf16.mxu0 %v2735
    %2972 = vmatpush1.bf16.msra.mxu0 %v2734
    %2973 = vmatprep.subr.bf16.mxu0 %v2739
    %2974 = vmatpush1.bf16.msra.mxu0 %v2738
    %2975 = vmatprep.subr.bf16.mxu0 %v2743
    %2976 = vmatpush1.bf16.msra.mxu0 %v2742
    %2977 = vmatprep.subr.bf16.mxu0 %v2747
    %2978 = vmatpush1.bf16.msra.mxu0 %v2746
    %2979 = vmatprep.subr.bf16.mxu0 %v2751
    %2980 = vmatpush1.bf16.msra.mxu0 %v2750
    %2981 = vmatprep.subr.bf16.mxu0 %v2755
    %2982 = vmatpush1.bf16.msra.mxu0 %v2754
    %2983 = vmatprep.subr.bf16.mxu0 %v2759
    %2984 = vmatpush1.bf16.msra.mxu0 %v2758
    %2985 = vmatprep.subr.bf16.mxu0 %v2763
    %2986 = vmatpush1.bf16.msra.mxu0 %v2762
    %2987 = vmatprep.subr.bf16.mxu0 %v2767
    %2988 = vmatpush1.bf16.msra.mxu0 %v2766
    %2989 = vmatprep.subr.bf16.mxu0 %v2771
    %2990 = vmatpush1.bf16.msra.mxu0 %v2770
    %2991 = vmatprep.subr.bf16.mxu0 %v2775
    %2992 = vmatpush1.bf16.msra.mxu0 %v2774
    %2993 = vmatprep.subr.bf16.mxu0 %v2779
    %2994 = vmatpush1.bf16.msra.mxu0 %v2778
    %2995 = vmatprep.mubr.bf16.mxu0 %v2265
    %2996 = vmatmul.mubr.bf16.gmra.mrb[0].mxu0 %v2264
    %v2997 = vpop.f32.mrb[0].mxu0
    %v2998 = vadd.f32 %v2945, %v2997
    %v2999 = vpop.f32.mrb[0].mxu0
    %v3000 = vadd.f32 %v2947, %v2999
    %v3001 = vpop.f32.mrb[0].mxu0
    %v3002 = vadd.f32 %v2949, %v3001
    %v3003 = vpop.f32.mrb[0].mxu0
    %v3004 = vadd.f32 %v2951, %v3003
    %3005 = vmatprep.mubr.bf16.mxu0 %v2269
    %3006 = vmatmul.mubr.bf16.gmra.mrb[0].mxu0 %v2268
    %v3007 = vpop.f32.mrb[0].mxu0
    %v3008 = vadd.f32 %v2955, %v3007
    %v3009 = vpop.f32.mrb[0].mxu0
    %v3010 = vadd.f32 %v2957, %v3009
    %v3011 = vpop.f32.mrb[0].mxu0
    %v3012 = vadd.f32 %v2959, %v3011
    %v3013 = vpop.f32.mrb[0].mxu0
    %v3014 = vadd.f32 %v2961, %v3013
    %3015 = vdwg.mxu0
    %3016 = vmatprep.subr.bf16.mxu0 %v2657
    %3017 = vmatpush1.bf16.msra.mxu0 %v2656
    %3018 = vmatprep.subr.bf16.mxu0 %v2661
    %3019 = vmatpush1.bf16.msra.mxu0 %v2660
    %3020 = vmatprep.subr.bf16.mxu0 %v2665
    %3021 = vmatpush1.bf16.msra.mxu0 %v2664
    %3022 = vmatprep.subr.bf16.mxu0 %v2669
    %3023 = vmatpush1.bf16.msra.mxu0 %v2668
    %3024 = vmatprep.subr.bf16.mxu0 %v2673
    %3025 = vmatpush1.bf16.msra.mxu0 %v2672
    %3026 = vmatprep.subr.bf16.mxu0 %v2677
    %3027 = vmatpush1.bf16.msra.mxu0 %v2676
    %3028 = vmatprep.subr.bf16.mxu0 %v2681
    %3029 = vmatpush1.bf16.msra.mxu0 %v2680
    %3030 = vmatprep.subr.bf16.mxu0 %v2685
    %3031 = vmatpush1.bf16.msra.mxu0 %v2684
    %3032 = vmatprep.subr.bf16.mxu0 %v2689
    %3033 = vmatpush1.bf16.msra.mxu0 %v2688
    %3034 = vmatprep.subr.bf16.mxu0 %v2693
    %3035 = vmatpush1.bf16.msra.mxu0 %v2692
    %3036 = vmatprep.subr.bf16.mxu0 %v2697
    %3037 = vmatpush1.bf16.msra.mxu0 %v2696
    %3038 = vmatprep.subr.bf16.mxu0 %v2701
    %3039 = vmatpush1.bf16.msra.mxu0 %v2700
    %3040 = vmatprep.subr.bf16.mxu0 %v2705
    %3041 = vmatpush1.bf16.msra.mxu0 %v2704
    %3042 = vmatprep.subr.bf16.mxu0 %v2709
    %3043 = vmatpush1.bf16.msra.mxu0 %v2708
    %3044 = vmatprep.subr.bf16.mxu0 %v2713
    %3045 = vmatpush1.bf16.msra.mxu0 %v2712
    %3046 = vmatprep.subr.bf16.mxu0 %v2717
    %3047 = vmatpush1.bf16.msra.mxu0 %v2716
    %3048 = vmatprep.mubr.bf16.mxu0 %v2263
    %3049 = vmatmul.mubr.bf16.gmra.mrb[0].mxu0 %v2262
    %v3050 = vpop.f32.mrb[0].mxu0
    %v3051 = vadd.f32 0.0, %v3050
    %v3052 = vpop.f32.mrb[0].mxu0
    %v3053 = vadd.f32 0.0, %v3052
    %v3054 = vpop.f32.mrb[0].mxu0
    %v3055 = vadd.f32 0.0, %v3054
    %v3056 = vpop.f32.mrb[0].mxu0
    %v3057 = vadd.f32 0.0, %v3056
    %3058 = vmatprep.mubr.bf16.mxu0 %v2267
    %3059 = vmatmul.mubr.bf16.gmra.mrb[0].mxu0 %v2266
    %v3060 = vpop.f32.mrb[0].mxu0
    %v3061 = vadd.f32 0.0, %v3060
    %v3062 = vpop.f32.mrb[0].mxu0
    %v3063 = vadd.f32 0.0, %v3062
    %v3064 = vpop.f32.mrb[0].mxu0
    %v3065 = vadd.f32 0.0, %v3064
    %v3066 = vpop.f32.mrb[0].mxu0
    %v3067 = vadd.f32 0.0, %v3066
    %3068 = vdwg.mxu0
    %3069 = vmatprep.subr.bf16.mxu0 %v2721
    %3070 = vmatpush1.bf16.msra.mxu0 %v2720
    %3071 = vmatprep.subr.bf16.mxu0 %v2725
    %3072 = vmatpush1.bf16.msra.mxu0 %v2724
    %3073 = vmatprep.subr.bf16.mxu0 %v2729
    %3074 = vmatpush1.bf16.msra.mxu0 %v2728
    %3075 = vmatprep.subr.bf16.mxu0 %v2733
    %3076 = vmatpush1.bf16.msra.mxu0 %v2732
    %3077 = vmatprep.subr.bf16.mxu0 %v2737
    %3078 = vmatpush1.bf16.msra.mxu0 %v2736
    %3079 = vmatprep.subr.bf16.mxu0 %v2741
    %3080 = vmatpush1.bf16.msra.mxu0 %v2740
    %3081 = vmatprep.subr.bf16.mxu0 %v2745
    %3082 = vmatpush1.bf16.msra.mxu0 %v2744
    %3083 = vmatprep.subr.bf16.mxu0 %v2749
    %3084 = vmatpush1.bf16.msra.mxu0 %v2748
    %3085 = vmatprep.subr.bf16.mxu0 %v2753
    %3086 = vmatpush1.bf16.msra.mxu0 %v2752
    %3087 = vmatprep.subr.bf16.mxu0 %v2757
    %3088 = vmatpush1.bf16.msra.mxu0 %v2756
    %3089 = vmatprep.subr.bf16.mxu0 %v2761
    %3090 = vmatpush1.bf16.msra.mxu0 %v2760
    %3091 = vmatprep.subr.bf16.mxu0 %v2765
    %3092 = vmatpush1.bf16.msra.mxu0 %v2764
    %3093 = vmatprep.subr.bf16.mxu0 %v2769
    %3094 = vmatpush1.bf16.msra.mxu0 %v2768
    %3095 = vmatprep.subr.bf16.mxu0 %v2773
    %3096 = vmatpush1.bf16.msra.mxu0 %v2772
    %3097 = vmatprep.subr.bf16.mxu0 %v2777
    %3098 = vmatpush1.bf16.msra.mxu0 %v2776
    %3099 = vmatprep.subr.bf16.mxu0 %v2781
    %3100 = vmatpush1.bf16.msra.mxu0 %v2780
    %3101 = vmatprep.mubr.bf16.mxu0 %v2265
    %3102 = vmatmul.mubr.bf16.gmra.mrb[0].mxu0 %v2264
    %v3103 = vpop.f32.mrb[0].mxu0
    %v3104 = vadd.f32 %v3051, %v3103
    %v3105 = vpop.f32.mrb[0].mxu0
    %v3106 = vadd.f32 %v3053, %v3105
    %v3107 = vpop.f32.mrb[0].mxu0
    %v3108 = vadd.f32 %v3055, %v3107
    %v3109 = vpop.f32.mrb[0].mxu0
    %v3110 = vadd.f32 %v3057, %v3109
    %3111 = vmatprep.mubr.bf16.mxu0 %v2269
    %3112 = vmatmul.mubr.bf16.gmra.mrb[0].mxu0 %v2268
    %v3113 = vpop.f32.mrb[0].mxu0
    %v3114 = vadd.f32 %v3061, %v3113
    %v3115 = vpop.f32.mrb[0].mxu0
    %v3116 = vadd.f32 %v3063, %v3115
    %v3117 = vpop.f32.mrb[0].mxu0
    %v3118 = vadd.f32 %v3065, %v3117
    %v3119 = vpop.f32.mrb[0].mxu0
    %v3120 = vadd.f32 %v3067, %v3119
    %3121 = vdwg.mxu0
    %v3122 = vmax.f32 %v2998, 0.0
    %v3123 = vmax.f32 %v3000, 0.0
    %v3124 = vmax.f32 %v3002, 0.0
    %v3125 = vmax.f32 %v3004, 0.0
    %v3126 = vmax.f32 %v3008, 0.0
    %v3127 = vmax.f32 %v3010, 0.0
    %v3128 = vmax.f32 %v3012, 0.0
    %v3129 = vmax.f32 %v3014, 0.0
    %v3130 = vld [vmem:[%s5] sm:$0xff]
    %v3131 = vld [vmem:[%s5 + $0x8] sm:$0xff]
    %v3132 = vld [vmem:[%s5 + $0x10] sm:$0xff]
    %v3133 = vld [vmem:[%s5 + $0x18] sm:$0xff]
    %v3134 = vld [vmem:[%s5 + $0x20] sm:$0xff]
    %v3135 = vld [vmem:[%s5 + $0x28] sm:$0xff]
    %v3136 = vld [vmem:[%s5 + $0x30] sm:$0xff]
    %v3137 = vld [vmem:[%s5 + $0x38] sm:$0xff]
    %v3138 = vld [vmem:[%s5 + $0x40] sm:$0xff]
    %v3139 = vld [vmem:[%s5 + $0x48] sm:$0xff]
    %v3140 = vld [vmem:[%s5 + $0x50] sm:$0xff]
    %v3141 = vld [vmem:[%s5 + $0x58] sm:$0xff]
    %v3142 = vld [vmem:[%s5 + $0x60] sm:$0xff]
    %v3143 = vld [vmem:[%s5 + $0x68] sm:$0xff]
    %v3144 = vld [vmem:[%s5 + $0x70] sm:$0xff]
    %v3145 = vld [vmem:[%s5 + $0x78] sm:$0xff]
    %v3146 = vld [vmem:[%s5 + $0x80] sm:$0xff]
    %v3147 = vld [vmem:[%s5 + $0x88] sm:$0xff]
    %v3148 = vld [vmem:[%s5 + $0x90] sm:$0xff]
    %v3149 = vld [vmem:[%s5 + $0x98] sm:$0xff]
    %v3150 = vld [vmem:[%s5 + $0xa0] sm:$0xff]
    %v3151 = vld [vmem:[%s5 + $0xa8] sm:$0xff]
    %v3152 = vld [vmem:[%s5 + $0xb0] sm:$0xff]
    %v3153 = vld [vmem:[%s5 + $0xb8] sm:$0xff]
    %v3154 = vld [vmem:[%s5 + $0xc0] sm:$0xff]
    %v3155 = vld [vmem:[%s5 + $0xc8] sm:$0xff]
    %v3156 = vld [vmem:[%s5 + $0xd0] sm:$0xff]
    %v3157 = vld [vmem:[%s5 + $0xd8] sm:$0xff]
    %v3158 = vld [vmem:[%s5 + $0xe0] sm:$0xff]
    %v3159 = vld [vmem:[%s5 + $0xe8] sm:$0xff]
    %v3160 = vld [vmem:[%s5 + $0xf0] sm:$0xff]
    %v3161 = vld [vmem:[%s5 + $0xf8] sm:$0xff]
    %v3162 = vpack.c.bf16 %v3124, %v3122
    %v3163 = vpack.c.bf16 %v3125, %v3123
    %v3164 = vpack.c.bf16 %v3128, %v3126
    %v3165 = vpack.c.bf16 %v3129, %v3127
    %v3198 = vunpack.c.l.b16 %v3130
    %v3199 = vunpack.c.h.b16 %v3130
    %v3200 = vunpack.c.l.b16 %v3131
    %v3201 = vunpack.c.h.b16 %v3131
    %v3202 = vunpack.c.l.b16 %v3132
    %v3203 = vunpack.c.h.b16 %v3132
    %v3204 = vunpack.c.l.b16 %v3133
    %v3205 = vunpack.c.h.b16 %v3133
    %v3206 = vunpack.c.l.b16 %v3134
    %v3207 = vunpack.c.h.b16 %v3134
    %v3208 = vunpack.c.l.b16 %v3135
    %v3209 = vunpack.c.h.b16 %v3135
    %v3210 = vunpack.c.l.b16 %v3136
    %v3211 = vunpack.c.h.b16 %v3136
    %v3212 = vunpack.c.l.b16 %v3137
    %v3213 = vunpack.c.h.b16 %v3137
    %v3214 = vunpack.c.l.b16 %v3138
    %v3215 = vunpack.c.h.b16 %v3138
    %v3216 = vunpack.c.l.b16 %v3139
    %v3217 = vunpack.c.h.b16 %v3139
    %v3218 = vunpack.c.l.b16 %v3140
    %v3219 = vunpack.c.h.b16 %v3140
    %v3220 = vunpack.c.l.b16 %v3141
    %v3221 = vunpack.c.h.b16 %v3141
    %v3222 = vunpack.c.l.b16 %v3142
    %v3223 = vunpack.c.h.b16 %v3142
    %v3224 = vunpack.c.l.b16 %v3143
    %v3225 = vunpack.c.h.b16 %v3143
    %v3226 = vunpack.c.l.b16 %v3144
    %v3227 = vunpack.c.h.b16 %v3144
    %v3228 = vunpack.c.l.b16 %v3145
    %v3229 = vunpack.c.h.b16 %v3145
    %v3230 = vunpack.c.l.b16 %v3146
    %v3231 = vunpack.c.h.b16 %v3146
    %v3232 = vunpack.c.l.b16 %v3147
    %v3233 = vunpack.c.h.b16 %v3147
    %v3234 = vunpack.c.l.b16 %v3148
    %v3235 = vunpack.c.h.b16 %v3148
    %v3236 = vunpack.c.l.b16 %v3149
    %v3237 = vunpack.c.h.b16 %v3149
    %v3238 = vunpack.c.l.b16 %v3150
    %v3239 = vunpack.c.h.b16 %v3150
    %v3240 = vunpack.c.l.b16 %v3151
    %v3241 = vunpack.c.h.b16 %v3151
    %v3242 = vunpack.c.l.b16 %v3152
    %v3243 = vunpack.c.h.b16 %v3152
    %v3244 = vunpack.c.l.b16 %v3153
    %v3245 = vunpack.c.h.b16 %v3153
    %v3246 = vunpack.c.l.b16 %v3154
    %v3247 = vunpack.c.h.b16 %v3154
    %v3248 = vunpack.c.l.b16 %v3155
    %v3249 = vunpack.c.h.b16 %v3155
    %v3250 = vunpack.c.l.b16 %v3156
    %v3251 = vunpack.c.h.b16 %v3156
    %v3252 = vunpack.c.l.b16 %v3157
    %v3253 = vunpack.c.h.b16 %v3157
    %v3254 = vunpack.c.l.b16 %v3158
    %v3255 = vunpack.c.h.b16 %v3158
    %v3256 = vunpack.c.l.b16 %v3159
    %v3257 = vunpack.c.h.b16 %v3159
    %v3258 = vunpack.c.l.b16 %v3160
    %v3259 = vunpack.c.h.b16 %v3160
    %v3260 = vunpack.c.l.b16 %v3161
    %v3261 = vunpack.c.h.b16 %v3161
    %v3262 = vpack.c.b16 %v3200, %v3198
    %v3263 = vpack.c.b16 %v3201, %v3199
    %v3264 = vpack.c.b16 %v3204, %v3202
    %v3265 = vpack.c.b16 %v3205, %v3203
    %v3266 = vpack.c.b16 %v3208, %v3206
    %v3267 = vpack.c.b16 %v3209, %v3207
    %v3268 = vpack.c.b16 %v3212, %v3210
    %v3269 = vpack.c.b16 %v3213, %v3211
    %v3270 = vpack.c.b16 %v3216, %v3214
    %v3271 = vpack.c.b16 %v3217, %v3215
    %v3272 = vpack.c.b16 %v3220, %v3218
    %v3273 = vpack.c.b16 %v3221, %v3219
    %v3274 = vpack.c.b16 %v3224, %v3222
    %v3275 = vpack.c.b16 %v3225, %v3223
    %v3276 = vpack.c.b16 %v3228, %v3226
    %v3277 = vpack.c.b16 %v3229, %v3227
    %v3278 = vpack.c.b16 %v3232, %v3230
    %v3279 = vpack.c.b16 %v3233, %v3231
    %v3280 = vpack.c.b16 %v3236, %v3234
    %v3281 = vpack.c.b16 %v3237, %v3235
    %v3282 = vpack.c.b16 %v3240, %v3238
    %v3283 = vpack.c.b16 %v3241, %v3239
    %v3284 = vpack.c.b16 %v3244, %v3242
    %v3285 = vpack.c.b16 %v3245, %v3243
    %v3286 = vpack.c.b16 %v3248, %v3246
    %v3287 = vpack.c.b16 %v3249, %v3247
    %v3288 = vpack.c.b16 %v3252, %v3250
    %v3289 = vpack.c.b16 %v3253, %v3251
    %v3290 = vpack.c.b16 %v3256, %v3254
    %v3291 = vpack.c.b16 %v3257, %v3255
    %v3292 = vpack.c.b16 %v3260, %v3258
    %v3293 = vpack.c.b16 %v3261, %v3259
    %3326 = vmatprep.subr.bf16.mxu0 %v3263
    %3327 = vmatpush1.bf16.msra.mxu0 %v3262
    %3328 = vmatprep.subr.bf16.mxu0 %v3265
    %3329 = vmatpush1.bf16.msra.mxu0 %v3264
    %3330 = vmatprep.subr.bf16.mxu0 %v3267
    %3331 = vmatpush1.bf16.msra.mxu0 %v3266
    %3332 = vmatprep.subr.bf16.mxu0 %v3269
    %3333 = vmatpush1.bf16.msra.mxu0 %v3268
    %3334 = vmatprep.subr.bf16.mxu0 %v3271
    %3335 = vmatpush1.bf16.msra.mxu0 %v3270
    %3336 = vmatprep.subr.bf16.mxu0 %v3273
    %3337 = vmatpush1.bf16.msra.mxu0 %v3272
    %3338 = vmatprep.subr.bf16.mxu0 %v3275
    %3339 = vmatpush1.bf16.msra.mxu0 %v3274
    %3340 = vmatprep.subr.bf16.mxu0 %v3277
    %3341 = vmatpush1.bf16.msra.mxu0 %v3276
    %3342 = vmatprep.subr.bf16.mxu0 %v3279
    %3343 = vmatpush1.bf16.msra.mxu0 %v3278
    %3344 = vmatprep.subr.bf16.mxu0 %v3281
    %3345 = vmatpush1.bf16.msra.mxu0 %v3280
    %3346 = vmatprep.subr.bf16.mxu0 %v3283
    %3347 = vmatpush1.bf16.msra.mxu0 %v3282
    %3348 = vmatprep.subr.bf16.mxu0 %v3285
    %3349 = vmatpush1.bf16.msra.mxu0 %v3284
    %3350 = vmatprep.subr.bf16.mxu0 %v3287
    %3351 = vmatpush1.bf16.msra.mxu0 %v3286
    %3352 = vmatprep.subr.bf16.mxu0 %v3289
    %3353 = vmatpush1.bf16.msra.mxu0 %v3288
    %3354 = vmatprep.subr.bf16.mxu0 %v3291
    %3355 = vmatpush1.bf16.msra.mxu0 %v3290
    %3356 = vmatprep.subr.bf16.mxu0 %v3293
    %3357 = vmatpush1.bf16.msra.mxu0 %v3292
    %3358 = vmatprep.mubr.bf16.mxu0 %v3163
    %3359 = vmatmul.mubr.bf16.gmra.mrb[0].mxu0 %v3162
    %v3360 = vpop.f32.mrb[0].mxu0
    %v3361 = vadd.f32 %v3104, %v3360
    %v3362 = vpop.f32.mrb[0].mxu0
    %v3363 = vadd.f32 %v3106, %v3362
    %v3364 = vpop.f32.mrb[0].mxu0
    %v3365 = vadd.f32 %v3108, %v3364
    %v3366 = vpop.f32.mrb[0].mxu0
    %v3367 = vadd.f32 %v3110, %v3366
    %3368 = vmatprep.mubr.bf16.mxu0 %v3165
    %3369 = vmatmul.mubr.bf16.gmra.mrb[0].mxu0 %v3164
    %v3370 = vpop.f32.mrb[0].mxu0
    %v3371 = vadd.f32 %v3114, %v3370
    %v3372 = vpop.f32.mrb[0].mxu0
    %v3373 = vadd.f32 %v3116, %v3372
    %v3374 = vpop.f32.mrb[0].mxu0
    %v3375 = vadd.f32 %v3118, %v3374
    %v3376 = vpop.f32.mrb[0].mxu0
    %v3377 = vadd.f32 %v3120, %v3376
    %3378 = vdwg.mxu0
    %v3379 = vmax.f32 %v3361, 0.0
    %v3380 = vmax.f32 %v3363, 0.0
    %v3381 = vmax.f32 %v3365, 0.0
    %v3382 = vmax.f32 %v3367, 0.0
    %v3383 = vmax.f32 %v3371, 0.0
    %v3384 = vmax.f32 %v3373, 0.0
    %v3385 = vmax.f32 %v3375, 0.0
    %v3386 = vmax.f32 %v3377, 0.0
    %v3387 = vld [vmem:[%s6] sm:$0xf]
    %v3388 = vld [vmem:[%s6 + $0x4] sm:$0xf]
    %v3389 = vld [vmem:[%s6 + $0x8] sm:$0xf]
    %v3390 = vld [vmem:[%s6 + $0xc] sm:$0xf]
    %v3391 = vld [vmem:[%s6 + $0x10] sm:$0xf]
    %v3392 = vld [vmem:[%s6 + $0x14] sm:$0xf]
    %v3393 = vld [vmem:[%s6 + $0x18] sm:$0xf]
    %v3394 = vld [vmem:[%s6 + $0x1c] sm:$0xf]
    %v3395 = vld [vmem:[%s6 + $0x20] sm:$0xf]
    %v3396 = vld [vmem:[%s6 + $0x24] sm:$0xf]
    %v3397 = vld [vmem:[%s6 + $0x28] sm:$0xf]
    %v3398 = vld [vmem:[%s6 + $0x2c] sm:$0xf]
    %v3399 = vld [vmem:[%s6 + $0x30] sm:$0xf]
    %v3400 = vld [vmem:[%s6 + $0x34] sm:$0xf]
    %v3401 = vld [vmem:[%s6 + $0x38] sm:$0xf]
    %v3402 = vld [vmem:[%s6 + $0x3c] sm:$0xf]
    %v3403 = vld [vmem:[%s6 + $0x40] sm:$0xf]
    %v3404 = vld [vmem:[%s6 + $0x44] sm:$0xf]
    %v3405 = vld [vmem:[%s6 + $0x48] sm:$0xf]
    %v3406 = vld [vmem:[%s6 + $0x4c] sm:$0xf]
    %v3407 = vld [vmem:[%s6 + $0x50] sm:$0xf]
    %v3408 = vld [vmem:[%s6 + $0x54] sm:$0xf]
    %v3409 = vld [vmem:[%s6 + $0x58] sm:$0xf]
    %v3410 = vld [vmem:[%s6 + $0x5c] sm:$0xf]
    %v3411 = vld [vmem:[%s6 + $0x60] sm:$0xf]
    %v3412 = vld [vmem:[%s6 + $0x64] sm:$0xf]
    %v3413 = vld [vmem:[%s6 + $0x68] sm:$0xf]
    %v3414 = vld [vmem:[%s6 + $0x6c] sm:$0xf]
    %v3415 = vld [vmem:[%s6 + $0x70] sm:$0xf]
    %v3416 = vld [vmem:[%s6 + $0x74] sm:$0xf]
    %v3417 = vld [vmem:[%s6 + $0x78] sm:$0xf]
    %v3418 = vld [vmem:[%s6 + $0x7c] sm:$0xf]
    %v3419 = vpack.c.bf16 %v3381, %v3379
    %v3420 = vpack.c.bf16 %v3382, %v3380
    %v3421 = vpack.c.bf16 %v3385, %v3383
    %v3422 = vpack.c.bf16 %v3386, %v3384
    %v3423 = vld [vmem:[%s7] sm:$0x1]
    %v3425 = vlaneseq
    %v3426 = vshrl.u32 %v3425, 7
    %v3427 = vsub.s32 0, %v3426
    %v3428 = vrot.slane %v3423, %v3427
    %v3462 = vunpack.c.l.b16 %v3387
    %v3463 = vunpack.c.l.b16 %v3388
    %v3464 = vunpack.c.l.b16 %v3389
    %v3465 = vunpack.c.l.b16 %v3390
    %v3466 = vunpack.c.l.b16 %v3391
    %v3467 = vunpack.c.l.b16 %v3392
    %v3468 = vunpack.c.l.b16 %v3393
    %v3469 = vunpack.c.l.b16 %v3394
    %v3470 = vunpack.c.l.b16 %v3395
    %v3471 = vunpack.c.l.b16 %v3396
    %v3472 = vunpack.c.l.b16 %v3397
    %v3473 = vunpack.c.l.b16 %v3398
    %v3474 = vunpack.c.l.b16 %v3399
    %v3475 = vunpack.c.l.b16 %v3400
    %v3476 = vunpack.c.l.b16 %v3401
    %v3477 = vunpack.c.l.b16 %v3402
    %v3478 = vunpack.c.l.b16 %v3403
    %v3479 = vunpack.c.l.b16 %v3404
    %v3480 = vunpack.c.l.b16 %v3405
    %v3481 = vunpack.c.l.b16 %v3406
    %v3482 = vunpack.c.l.b16 %v3407
    %v3483 = vunpack.c.l.b16 %v3408
    %v3484 = vunpack.c.l.b16 %v3409
    %v3485 = vunpack.c.l.b16 %v3410
    %v3486 = vunpack.c.l.b16 %v3411
    %v3487 = vunpack.c.l.b16 %v3412
    %v3488 = vunpack.c.l.b16 %v3413
    %v3489 = vunpack.c.l.b16 %v3414
    %v3490 = vunpack.c.l.b16 %v3415
    %v3491 = vunpack.c.l.b16 %v3416
    %v3492 = vunpack.c.l.b16 %v3417
    %v3493 = vunpack.c.l.b16 %v3418
    %v3494 = vpack.c.b16 %v3463, %v3462
    %v3495 = vpack.c.b16 %v3465, %v3464
    %v3496 = vpack.c.b16 %v3467, %v3466
    %v3497 = vpack.c.b16 %v3469, %v3468
    %v3498 = vpack.c.b16 %v3471, %v3470
    %v3499 = vpack.c.b16 %v3473, %v3472
    %v3500 = vpack.c.b16 %v3475, %v3474
    %v3501 = vpack.c.b16 %v3477, %v3476
    %v3502 = vpack.c.b16 %v3479, %v3478
    %v3503 = vpack.c.b16 %v3481, %v3480
    %v3504 = vpack.c.b16 %v3483, %v3482
    %v3505 = vpack.c.b16 %v3485, %v3484
    %v3506 = vpack.c.b16 %v3487, %v3486
    %v3507 = vpack.c.b16 %v3489, %v3488
    %v3508 = vpack.c.b16 %v3491, %v3490
    %v3509 = vpack.c.b16 %v3493, %v3492
    %3526 = vmatprep.subr.bf16.mxu0 0
    %3527 = vmatpush1.bf16.msra.mxu0 %v3494
    %3528 = vmatprep.subr.bf16.mxu0 0
    %3529 = vmatpush1.bf16.msra.mxu0 %v3495
    %3530 = vmatprep.subr.bf16.mxu0 0
    %3531 = vmatpush1.bf16.msra.mxu0 %v3496
    %3532 = vmatprep.subr.bf16.mxu0 0
    %3533 = vmatpush1.bf16.msra.mxu0 %v3497
    %3534 = vmatprep.subr.bf16.mxu0 0
    %3535 = vmatpush1.bf16.msra.mxu0 %v3498
    %3536 = vmatprep.subr.bf16.mxu0 0
    %3537 = vmatpush1.bf16.msra.mxu0 %v3499
    %3538 = vmatprep.subr.bf16.mxu0 0
    %3539 = vmatpush1.bf16.msra.mxu0 %v3500
    %3540 = vmatprep.subr.bf16.mxu0 0
    %3541 = vmatpush1.bf16.msra.mxu0 %v3501
    %3542 = vmatprep.subr.bf16.mxu0 0
    %3543 = vmatpush1.bf16.msra.mxu0 %v3502
    %3544 = vmatprep.subr.bf16.mxu0 0
    %3545 = vmatpush1.bf16.msra.mxu0 %v3503
    %3546 = vmatprep.subr.bf16.mxu0 0
    %3547 = vmatpush1.bf16.msra.mxu0 %v3504
    %3548 = vmatprep.subr.bf16.mxu0 0
    %3549 = vmatpush1.bf16.msra.mxu0 %v3505
    %3550 = vmatprep.subr.bf16.mxu0 0
    %3551 = vmatpush1.bf16.msra.mxu0 %v3506
    %3552 = vmatprep.subr.bf16.mxu0 0
    %3553 = vmatpush1.bf16.msra.mxu0 %v3507
    %3554 = vmatprep.subr.bf16.mxu0 0
    %3555 = vmatpush1.bf16.msra.mxu0 %v3508
    %3556 = vmatprep.subr.bf16.mxu0 0
    %3557 = vmatpush1.bf16.msra.mxu0 %v3509
    %3558 = vmatprep.mubr.bf16.mxu0 %v3420
    %3559 = vmatmul.mubr.bf16.gmra.mrb[0].mxu0 %v3419
    %v3560 = vpop.f32.mrb[0].mxu0
    %v3561 = vadd.f32 %v3428, %v3560
    %v3562 = vpop.f32.mrb[0].mxu0
    %v3563 = vpop.f32.mrb[0].mxu0
    %v3564 = vadd.f32 %v3428, %v3563
    %v3565 = vpop.f32.mrb[0].mxu0
    %3566 = vmatprep.mubr.bf16.mxu0 %v3422
    %3567 = vmatmul.mubr.bf16.gmra.mrb[0].mxu0 %v3421
    %v3568 = vpop.f32.mrb[0].mxu0
    %v3569 = vadd.f32 %v3428, %v3568
    %v3570 = vpop.f32.mrb[0].mxu0
    %v3571 = vpop.f32.mrb[0].mxu0
    %v3572 = vadd.f32 %v3428, %v3571
    %v3573 = vpop.f32.mrb[0].mxu0
    %3574 = vdwg.mxu0
    %v3575 = vld [vmem:[%s8] sm:$0x1]
    %3577 = vset.pattern.permute.xlu0 0
    %3578 = vperm.xlu0 %3577, %v110
    %v3579 = vpop.permute.xlu0 %3578
    %3582 = vset.pattern.permute.xlu0 0
    %3583 = vperm.xlu0 %3582, %v111
    %v3584 = vpop.permute.xlu0 %3583
    %3587 = vset.pattern.permute.xlu0 0
    %3588 = vperm.xlu0 %3587, %v112
    %v3589 = vpop.permute.xlu0 %3588
    %3592 = vset.pattern.permute.xlu0 0
    %3593 = vperm.xlu0 %3592, %v113
    %v3594 = vpop.permute.xlu0 %3593
    %v3597 = vlaneseq
    %v3598 = vshrl.u32 %v3597, 7
    %v3599 = vsub.s32 0, %v3598
    %v3600 = vrot.slane %v3575, %v3599
    %v3602 = vmul.f32 %v3579, %v3600
    %v3603 = vmul.f32 %v3584, %v3600
    %v3604 = vmul.f32 %v3589, %v3600
    %v3605 = vmul.f32 %v3594, %v3600
    %v3606 = vadd.f32 %v3561, %v3602
    %v3607 = vadd.f32 %v3564, %v3603
    %v3608 = vadd.f32 %v3569, %v3604
    %v3609 = vadd.f32 %v3572, %v3605
    %v3610 = vld [vmem:[%s9] sm:$0x3]
    %v3611 = vpack.c.bf16 %v111, %v110
    %v3612 = vpack.c.bf16 %v113, %v112
    %3615 = vrot.lane.b32.xlu0 %v3611, 127
    %v3616 = vpop.permute.xlu0 %3615
    %3617 = vrot.lane.b32.xlu0 %v3612, 127
    %v3618 = vpop.permute.xlu0 %3617
    %vm3619 = vcmask 31744
    %v3621 = vsel %vm3619, %v3616, 0
    %v3624 = vsel %vm3619, %v3618, 0
    %vm3626 = vcmask 1041408
    %v3628 = vsel %vm3626, %v3610, 0
    %3630 = vmatprep.subr.bf16.mxu0 0
    %3631 = vmatpush1.bf16.msra.mxu0 %v3628
    %3632 = vmatprep.subr.bf16.mxu0 0
    %3633 = vmatpush1.bf16.msra.mxu0 0
    %3634 = vmatprep.subr.bf16.mxu0 0
    %3635 = vmatpush1.bf16.msra.mxu0 0
    %3636 = vmatprep.subr.bf16.mxu0 0
    %3637 = vmatpush1.bf16.msra.mxu0 0
    %3638 = vmatprep.subr.bf16.mxu0 0
    %3639 = vmatpush1.bf16.msra.mxu0 0
    %3640 = vmatprep.subr.bf16.mxu0 0
    %3641 = vmatpush1.bf16.msra.mxu0 0
    %3642 = vmatprep.subr.bf16.mxu0 0
    %3643 = vmatpush1.bf16.msra.mxu0 0
    %3644 = vmatprep.subr.bf16.mxu0 0
    %3645 = vmatpush1.bf16.msra.mxu0 0
    %3646 = vmatprep.subr.bf16.mxu0 0
    %3647 = vmatpush1.bf16.msra.mxu0 0
    %3648 = vmatprep.subr.bf16.mxu0 0
    %3649 = vmatpush1.bf16.msra.mxu0 0
    %3650 = vmatprep.subr.bf16.mxu0 0
    %3651 = vmatpush1.bf16.msra.mxu0 0
    %3652 = vmatprep.subr.bf16.mxu0 0
    %3653 = vmatpush1.bf16.msra.mxu0 0
    %3654 = vmatprep.subr.bf16.mxu0 0
    %3655 = vmatpush1.bf16.msra.mxu0 0
    %3656 = vmatprep.subr.bf16.mxu0 0
    %3657 = vmatpush1.bf16.msra.mxu0 0
    %3658 = vmatprep.subr.bf16.mxu0 0
    %3659 = vmatpush1.bf16.msra.mxu0 0
    %3660 = vmatprep.subr.bf16.mxu0 0
    %3661 = vmatpush1.bf16.msra.mxu0 0
    %3662 = vmatprep.mubr.bf16.mxu0 0
    %3663 = vmatmul.mubr.bf16.gmra.mrb[0].mxu0 %v3621
    %v3664 = vpop.f32.mrb[0].mxu0
    %v3665 = vadd.f32 0.0, %v3664
    %v3666 = vpop.f32.mrb[0].mxu0
    %v3667 = vpop.f32.mrb[0].mxu0
    %v3668 = vadd.f32 0.0, %v3667
    %v3669 = vpop.f32.mrb[0].mxu0
    %3670 = vmatprep.mubr.bf16.mxu0 0
    %3671 = vmatmul.mubr.bf16.gmra.mrb[0].mxu0 %v3624
    %v3672 = vpop.f32.mrb[0].mxu0
    %v3673 = vadd.f32 0.0, %v3672
    %v3674 = vpop.f32.mrb[0].mxu0
    %v3675 = vpop.f32.mrb[0].mxu0
    %v3676 = vadd.f32 0.0, %v3675
    %v3677 = vpop.f32.mrb[0].mxu0
    %3678 = vdwg.mxu0
    %v3679 = vadd.f32 %v3606, %v3665
    %v3680 = vadd.f32 %v3607, %v3668
    %v3681 = vadd.f32 %v3608, %v3673
    %v3682 = vadd.f32 %v3609, %v3676
    %v3683 = vmul.f32 %v3679, %v3679
    %v3684 = vmul.f32 %v3680, %v3680
    %v3685 = vmul.f32 %v3681, %v3681
    %v3686 = vmul.f32 %v3682, %v3682
    %vm3687 = vcmask 261120
    %v3688 = vsel %vm3687, %v3683, 0.0
    %3689 = vadd.xlane.f32.xlu0 %v3688
    %v3690 = vpop.xlane.xlu0 %3689
    %v3691 = vsel %vm3687, %v3684, 0.0
    %3692 = vadd.xlane.f32.xlu0 %v3691
    %v3693 = vpop.xlane.xlu0 %3692
    %v3694 = vsel %vm3687, %v3685, 0.0
    %3695 = vadd.xlane.f32.xlu0 %v3694
    %v3696 = vpop.xlane.xlu0 %3695
    %v3697 = vsel %vm3687, %v3686, 0.0
    %3698 = vadd.xlane.f32.xlu0 %v3697
    %v3699 = vpop.xlane.xlu0 %3698
    %v3700 = vrcp.pop 32.0
    %v3701 = vmul.f32 %v3690, %v3700
    %v3702 = vmul.f32 %v3693, %v3700
    %v3703 = vmul.f32 %v3696, %v3700
    %v3704 = vmul.f32 %v3699, %v3700
    %v3705 = vadd.f32 %v3701, 1e-06
    %v3706 = vadd.f32 %v3702, 1e-06
    %v3707 = vadd.f32 %v3703, 1e-06
    %v3708 = vadd.f32 %v3704, 1e-06
    %v3709 = vrsqrt.pop %v3705
    %v3710 = vrsqrt.pop %v3706
    %v3711 = vrsqrt.pop %v3707
    %v3712 = vrsqrt.pop %v3708
    %v3713 = vmul.f32 %v3679, %v3709
    %v3714 = vmul.f32 %v3680, %v3710
    %v3715 = vmul.f32 %v3681, %v3711
    %v3716 = vmul.f32 %v3682, %v3712
    %v3717 = vld [vmem:[%s10] sm:$0x1]
    %v3719 = vlaneseq
    %v3720 = vshrl.u32 %v3719, 7
    %v3721 = vsub.s32 0, %v3720
    %v3722 = vrot.slane %v3717, %v3721
    %v3724 = vmul.f32 %v3713, %v3722
    %v3725 = vmul.f32 %v3714, %v3722
    %v3726 = vmul.f32 %v3715, %v3722
    %v3727 = vmul.f32 %v3716, %v3722
    %v3728 = vpack.c.bf16 %v3725, %v3724
    %v3729 = vpack.c.bf16 %v3727, %v3726
    %v3730 = vld [vmem:[%s11] sm:$0xf]
    %v3731 = vld [vmem:[%s11 + $0x4] sm:$0xf]
    %v3732 = vld [vmem:[%s11 + $0x8] sm:$0xf]
    %v3733 = vld [vmem:[%s11 + $0xc] sm:$0xf]
    %v3734 = vld [vmem:[%s11 + $0x10] sm:$0xf]
    %v3735 = vld [vmem:[%s11 + $0x14] sm:$0xf]
    %v3736 = vld [vmem:[%s11 + $0x18] sm:$0xf]
    %v3737 = vld [vmem:[%s11 + $0x1c] sm:$0xf]
    %v3739 = vrot.slane %v3728, 4
    %v3744 = vunpack.c.l.b16 %v3734
    %v3745 = vunpack.c.l.b16 %v3735
    %v3746 = vunpack.c.l.b16 %v3736
    %v3747 = vunpack.c.l.b16 %v3737
    %v3748 = vpack.c.b16 %v3745, %v3744
    %v3749 = vpack.c.b16 %v3747, %v3746
    %v3753 = vsel %vm3687, %v3739, 0
    %3755 = vmatprep.subr.bf16.mxu0 0
    %3756 = vmatpush1.bf16.msra.mxu0 %v3748
    %3757 = vmatprep.subr.bf16.mxu0 0
    %3758 = vmatpush1.bf16.msra.mxu0 %v3749
    %3759 = vmatprep.subr.bf16.mxu0 0
    %3760 = vmatpush1.bf16.msra.mxu0 0
    %3761 = vmatprep.subr.bf16.mxu0 0
    %3762 = vmatpush1.bf16.msra.mxu0 0
    %3763 = vmatprep.subr.bf16.mxu0 0
    %3764 = vmatpush1.bf16.msra.mxu0 0
    %3765 = vmatprep.subr.bf16.mxu0 0
    %3766 = vmatpush1.bf16.msra.mxu0 0
    %3767 = vmatprep.subr.bf16.mxu0 0
    %3768 = vmatpush1.bf16.msra.mxu0 0
    %3769 = vmatprep.subr.bf16.mxu0 0
    %3770 = vmatpush1.bf16.msra.mxu0 0
    %3771 = vmatprep.subr.bf16.mxu0 0
    %3772 = vmatpush1.bf16.msra.mxu0 0
    %3773 = vmatprep.subr.bf16.mxu0 0
    %3774 = vmatpush1.bf16.msra.mxu0 0
    %3775 = vmatprep.subr.bf16.mxu0 0
    %3776 = vmatpush1.bf16.msra.mxu0 0
    %3777 = vmatprep.subr.bf16.mxu0 0
    %3778 = vmatpush1.bf16.msra.mxu0 0
    %3779 = vmatprep.subr.bf16.mxu0 0
    %3780 = vmatpush1.bf16.msra.mxu0 0
    %3781 = vmatprep.subr.bf16.mxu0 0
    %3782 = vmatpush1.bf16.msra.mxu0 0
    %3783 = vmatprep.subr.bf16.mxu0 0
    %3784 = vmatpush1.bf16.msra.mxu0 0
    %3785 = vmatprep.subr.bf16.mxu0 0
    %3786 = vmatpush1.bf16.msra.mxu0 0
    %3787 = vmatprep.mubr.bf16.mxu0 0
    %3788 = vmatmul.mubr.bf16.gmra.mrb[0].mxu0 %v3753
    %v3789 = vpop.f32.mrb[0].mxu0
    %v3790 = vadd.f32 0.0, %v3789
    %v3791 = vpop.f32.mrb[0].mxu0
    %v3792 = vpop.f32.mrb[0].mxu0
    %v3793 = vpop.f32.mrb[0].mxu0
    %3794 = vdwg.mxu0
    %v3799 = vunpack.c.l.b16 %v3730
    %v3800 = vunpack.c.l.b16 %v3731
    %v3801 = vunpack.c.l.b16 %v3732
    %v3802 = vunpack.c.l.b16 %v3733
    %v3803 = vpack.c.b16 %v3800, %v3799
    %v3804 = vpack.c.b16 %v3802, %v3801
    %v3808 = vsel %vm3687, %v3728, 0
    %3810 = vmatprep.subr.bf16.mxu0 0
    %3811 = vmatpush1.bf16.msra.mxu0 %v3803
    %3812 = vmatprep.subr.bf16.mxu0 0
    %3813 = vmatpush1.bf16.msra.mxu0 %v3804
    %3814 = vmatprep.subr.bf16.mxu0 0
    %3815 = vmatpush1.bf16.msra.mxu0 0
    %3816 = vmatprep.subr.bf16.mxu0 0
    %3817 = vmatpush1.bf16.msra.mxu0 0
    %3818 = vmatprep.subr.bf16.mxu0 0
    %3819 = vmatpush1.bf16.msra.mxu0 0
    %3820 = vmatprep.subr.bf16.mxu0 0
    %3821 = vmatpush1.bf16.msra.mxu0 0
    %3822 = vmatprep.subr.bf16.mxu0 0
    %3823 = vmatpush1.bf16.msra.mxu0 0
    %3824 = vmatprep.subr.bf16.mxu0 0
    %3825 = vmatpush1.bf16.msra.mxu0 0
    %3826 = vmatprep.subr.bf16.mxu0 0
    %3827 = vmatpush1.bf16.msra.mxu0 0
    %3828 = vmatprep.subr.bf16.mxu0 0
    %3829 = vmatpush1.bf16.msra.mxu0 0
    %3830 = vmatprep.subr.bf16.mxu0 0
    %3831 = vmatpush1.bf16.msra.mxu0 0
    %3832 = vmatprep.subr.bf16.mxu0 0
    %3833 = vmatpush1.bf16.msra.mxu0 0
    %3834 = vmatprep.subr.bf16.mxu0 0
    %3835 = vmatpush1.bf16.msra.mxu0 0
    %3836 = vmatprep.subr.bf16.mxu0 0
    %3837 = vmatpush1.bf16.msra.mxu0 0
    %3838 = vmatprep.subr.bf16.mxu0 0
    %3839 = vmatpush1.bf16.msra.mxu0 0
    %3840 = vmatprep.subr.bf16.mxu0 0
    %3841 = vmatpush1.bf16.msra.mxu0 0
    %3842 = vmatprep.mubr.bf16.mxu0 0
    %3843 = vmatmul.mubr.bf16.gmra.mrb[0].mxu0 %v3808
    %v3844 = vpop.f32.mrb[0].mxu0
    %v3845 = vadd.f32 %v3790, %v3844
    %v3846 = vpop.f32.mrb[0].mxu0
    %v3847 = vpop.f32.mrb[0].mxu0
    %v3848 = vpop.f32.mrb[0].mxu0
    %3849 = vdwg.mxu0
    %v3850 = vld [vmem:[%s11 + $0x20] sm:$0xf]
    %v3851 = vld [vmem:[%s11 + $0x24] sm:$0xf]
    %v3852 = vld [vmem:[%s11 + $0x28] sm:$0xf]
    %v3853 = vld [vmem:[%s11 + $0x2c] sm:$0xf]
    %v3858 = vunpack.c.l.b16 %v3850
    %v3859 = vunpack.c.l.b16 %v3851
    %v3860 = vunpack.c.l.b16 %v3852
    %v3861 = vunpack.c.l.b16 %v3853
    %v3862 = vpack.c.b16 %v3859, %v3858
    %v3863 = vpack.c.b16 %v3861, %v3860
    %v3867 = vsel %vm3687, %v3729, 0
    %3869 = vmatprep.subr.bf16.mxu0 0
    %3870 = vmatpush1.bf16.msra.mxu0 %v3862
    %3871 = vmatprep.subr.bf16.mxu0 0
    %3872 = vmatpush1.bf16.msra.mxu0 %v3863
    %3873 = vmatprep.subr.bf16.mxu0 0
    %3874 = vmatpush1.bf16.msra.mxu0 0
    %3875 = vmatprep.subr.bf16.mxu0 0
    %3876 = vmatpush1.bf16.msra.mxu0 0
    %3877 = vmatprep.subr.bf16.mxu0 0
    %3878 = vmatpush1.bf16.msra.mxu0 0
    %3879 = vmatprep.subr.bf16.mxu0 0
    %3880 = vmatpush1.bf16.msra.mxu0 0
    %3881 = vmatprep.subr.bf16.mxu0 0
    %3882 = vmatpush1.bf16.msra.mxu0 0
    %3883 = vmatprep.subr.bf16.mxu0 0
    %3884 = vmatpush1.bf16.msra.mxu0 0
    %3885 = vmatprep.subr.bf16.mxu0 0
    %3886 = vmatpush1.bf16.msra.mxu0 0
    %3887 = vmatprep.subr.bf16.mxu0 0
    %3888 = vmatpush1.bf16.msra.mxu0 0
    %3889 = vmatprep.subr.bf16.mxu0 0
    %3890 = vmatpush1.bf16.msra.mxu0 0
    %3891 = vmatprep.subr.bf16.mxu0 0
    %3892 = vmatpush1.bf16.msra.mxu0 0
    %3893 = vmatprep.subr.bf16.mxu0 0
    %3894 = vmatpush1.bf16.msra.mxu0 0
    %3895 = vmatprep.subr.bf16.mxu0 0
    %3896 = vmatpush1.bf16.msra.mxu0 0
    %3897 = vmatprep.subr.bf16.mxu0 0
    %3898 = vmatpush1.bf16.msra.mxu0 0
    %3899 = vmatprep.subr.bf16.mxu0 0
    %3900 = vmatpush1.bf16.msra.mxu0 0
    %3901 = vmatprep.mubr.bf16.mxu0 0
    %3902 = vmatmul.mubr.bf16.gmra.mrb[0].mxu0 %v3867
    %v3903 = vpop.f32.mrb[0].mxu0
    %v3904 = vadd.f32 0.0, %v3903
    %v3905 = vpop.f32.mrb[0].mxu0
    %v3906 = vpop.f32.mrb[0].mxu0
    %v3907 = vpop.f32.mrb[0].mxu0
    %3908 = vdwg.mxu0
    %v3909 = vadd.f32 %v3845, %v3904
    %v3910 = vld [vmem:[%s11 + $0x30] sm:$0xf]
    %v3911 = vld [vmem:[%s11 + $0x34] sm:$0xf]
    %v3912 = vld [vmem:[%s11 + $0x38] sm:$0xf]
    %v3913 = vld [vmem:[%s11 + $0x3c] sm:$0xf]
    %v3915 = vrot.slane %v3729, 4
    %v3920 = vunpack.c.l.b16 %v3910
    %v3921 = vunpack.c.l.b16 %v3911
    %v3922 = vunpack.c.l.b16 %v3912
    %v3923 = vunpack.c.l.b16 %v3913
    %v3924 = vpack.c.b16 %v3921, %v3920
    %v3925 = vpack.c.b16 %v3923, %v3922
    %v3929 = vsel %vm3687, %v3915, 0
    %3931 = vmatprep.subr.bf16.mxu0 0
    %3932 = vmatpush1.bf16.msra.mxu0 %v3924
    %3933 = vmatprep.subr.bf16.mxu0 0
    %3934 = vmatpush1.bf16.msra.mxu0 %v3925
    %3935 = vmatprep.subr.bf16.mxu0 0
    %3936 = vmatpush1.bf16.msra.mxu0 0
    %3937 = vmatprep.subr.bf16.mxu0 0
    %3938 = vmatpush1.bf16.msra.mxu0 0
    %3939 = vmatprep.subr.bf16.mxu0 0
    %3940 = vmatpush1.bf16.msra.mxu0 0
    %3941 = vmatprep.subr.bf16.mxu0 0
    %3942 = vmatpush1.bf16.msra.mxu0 0
    %3943 = vmatprep.subr.bf16.mxu0 0
    %3944 = vmatpush1.bf16.msra.mxu0 0
    %3945 = vmatprep.subr.bf16.mxu0 0
    %3946 = vmatpush1.bf16.msra.mxu0 0
    %3947 = vmatprep.subr.bf16.mxu0 0
    %3948 = vmatpush1.bf16.msra.mxu0 0
    %3949 = vmatprep.subr.bf16.mxu0 0
    %3950 = vmatpush1.bf16.msra.mxu0 0
    %3951 = vmatprep.subr.bf16.mxu0 0
    %3952 = vmatpush1.bf16.msra.mxu0 0
    %3953 = vmatprep.subr.bf16.mxu0 0
    %3954 = vmatpush1.bf16.msra.mxu0 0
    %3955 = vmatprep.subr.bf16.mxu0 0
    %3956 = vmatpush1.bf16.msra.mxu0 0
    %3957 = vmatprep.subr.bf16.mxu0 0
    %3958 = vmatpush1.bf16.msra.mxu0 0
    %3959 = vmatprep.subr.bf16.mxu0 0
    %3960 = vmatpush1.bf16.msra.mxu0 0
    %3961 = vmatprep.subr.bf16.mxu0 0
    %3962 = vmatpush1.bf16.msra.mxu0 0
    %3963 = vmatprep.mubr.bf16.mxu0 0
    %3964 = vmatmul.mubr.bf16.gmra.mrb[0].mxu0 %v3929
    %v3965 = vpop.f32.mrb[0].mxu0
    %v3966 = vadd.f32 0.0, %v3965
    %v3967 = vpop.f32.mrb[0].mxu0
    %v3968 = vpop.f32.mrb[0].mxu0
    %v3969 = vpop.f32.mrb[0].mxu0
    %3970 = vdwg.mxu0
    %v3971 = vadd.f32 %v3909, %v3966
    %v3972 = vld [vmem:[%s12] sm:$0x1]
    %v3974 = vlaneseq
    %v3975 = vshrl.u32 %v3974, 7
    %v3976 = vsub.s32 0, %v3975
    %v3977 = vrot.slane %v3972, %v3976
    %v3979 = vadd.f32 %v3971, %v3977
    %v3980 = vmax.f32 %v3979, 0.0
    %v3981 = vld [vmem:[%s13] sm:$0xf]
    %v3982 = vld [vmem:[%s13 + $0x4] sm:$0xf]
    %v3983 = vld [vmem:[%s13 + $0x8] sm:$0xf]
    %v3984 = vld [vmem:[%s13 + $0xc] sm:$0xf]
    %v3985 = vld [vmem:[%s13 + $0x10] sm:$0xf]
    %v3986 = vld [vmem:[%s13 + $0x14] sm:$0xf]
    %v3987 = vld [vmem:[%s13 + $0x18] sm:$0xf]
    %v3988 = vld [vmem:[%s13 + $0x1c] sm:$0xf]
    %v3989 = vpack.c.bf16 %v3980, %v3980
    %v3990 = vld [vmem:[%s14] sm:$0x1]
    %v3992 = vlaneseq
    %v3993 = vshrl.u32 %v3992, 7
    %v3994 = vsub.s32 0, %v3993
    %v3995 = vrot.slane %v3990, %v3994
    %v4005 = vunpack.c.l.b16 %v3981
    %v4006 = vunpack.c.l.b16 %v3982
    %v4007 = vunpack.c.l.b16 %v3983
    %v4008 = vunpack.c.l.b16 %v3984
    %v4009 = vunpack.c.l.b16 %v3985
    %v4010 = vunpack.c.l.b16 %v3986
    %v4011 = vunpack.c.l.b16 %v3987
    %v4012 = vunpack.c.l.b16 %v3988
    %v4013 = vpack.c.b16 %v4006, %v4005
    %v4014 = vpack.c.b16 %v4008, %v4007
    %v4015 = vpack.c.b16 %v4010, %v4009
    %v4016 = vpack.c.b16 %v4012, %v4011
    %vm4021 = vcmask 523264
    %v4023 = vsel %vm4021, %v3989, 0
    %4025 = vmatprep.subr.bf16.mxu0 0
    %4026 = vmatpush1.bf16.msra.mxu0 %v4013
    %4027 = vmatprep.subr.bf16.mxu0 0
    %4028 = vmatpush1.bf16.msra.mxu0 %v4014
    %4029 = vmatprep.subr.bf16.mxu0 0
    %4030 = vmatpush1.bf16.msra.mxu0 %v4015
    %4031 = vmatprep.subr.bf16.mxu0 0
    %4032 = vmatpush1.bf16.msra.mxu0 %v4016
    %4033 = vmatprep.subr.bf16.mxu0 0
    %4034 = vmatpush1.bf16.msra.mxu0 0
    %4035 = vmatprep.subr.bf16.mxu0 0
    %4036 = vmatpush1.bf16.msra.mxu0 0
    %4037 = vmatprep.subr.bf16.mxu0 0
    %4038 = vmatpush1.bf16.msra.mxu0 0
    %4039 = vmatprep.subr.bf16.mxu0 0
    %4040 = vmatpush1.bf16.msra.mxu0 0
    %4041 = vmatprep.subr.bf16.mxu0 0
    %4042 = vmatpush1.bf16.msra.mxu0 0
    %4043 = vmatprep.subr.bf16.mxu0 0
    %4044 = vmatpush1.bf16.msra.mxu0 0
    %4045 = vmatprep.subr.bf16.mxu0 0
    %4046 = vmatpush1.bf16.msra.mxu0 0
    %4047 = vmatprep.subr.bf16.mxu0 0
    %4048 = vmatpush1.bf16.msra.mxu0 0
    %4049 = vmatprep.subr.bf16.mxu0 0
    %4050 = vmatpush1.bf16.msra.mxu0 0
    %4051 = vmatprep.subr.bf16.mxu0 0
    %4052 = vmatpush1.bf16.msra.mxu0 0
    %4053 = vmatprep.subr.bf16.mxu0 0
    %4054 = vmatpush1.bf16.msra.mxu0 0
    %4055 = vmatprep.subr.bf16.mxu0 0
    %4056 = vmatpush1.bf16.msra.mxu0 0
    %4057 = vmatprep.mubr.bf16.mxu0 0
    %4058 = vmatmul.mubr.bf16.gmra.mrb[0].mxu0 %v4023
    %v4059 = vpop.f32.mrb[0].mxu0
    %v4060 = vadd.f32 %v3995, %v4059
    %v4061 = vpop.f32.mrb[0].mxu0
    %v4062 = vpop.f32.mrb[0].mxu0
    %v4063 = vpop.f32.mrb[0].mxu0
    %4064 = vdwg.mxu0
    %v4065 = vmax.f32 %v4060, 0.0
    %v4066 = vld [vmem:[%s15] sm:$0xf]
    %v4067 = vld [vmem:[%s15 + $0x4] sm:$0xf]
    %v4068 = vld [vmem:[%s15 + $0x8] sm:$0xf]
    %v4069 = vld [vmem:[%s15 + $0xc] sm:$0xf]
    %v4070 = vpack.c.bf16 %v4065, %v4065
    %v4071 = vld [vmem:[%s16] sm:$0x1]
    %v4073 = vlaneseq
    %v4074 = vshrl.u32 %v4073, 7
    %v4075 = vsub.s32 0, %v4074
    %v4076 = vrot.slane %v4071, %v4075
    %v4082 = vunpack.c.l.b16 %v4066
    %v4083 = vunpack.c.l.b16 %v4067
    %v4084 = vunpack.c.l.b16 %v4068
    %v4085 = vunpack.c.l.b16 %v4069
    %v4086 = vpack.c.b16 %v4083, %v4082
    %v4087 = vpack.c.b16 %v4085, %v4084
    %v4091 = vsel %vm3687, %v4070, 0
    %4093 = vmatprep.subr.bf16.mxu0 0
    %4094 = vmatpush1.bf16.msra.mxu0 %v4086
    %4095 = vmatprep.subr.bf16.mxu0 0
    %4096 = vmatpush1.bf16.msra.mxu0 %v4087
    %4097 = vmatprep.subr.bf16.mxu0 0
    %4098 = vmatpush1.bf16.msra.mxu0 0
    %4099 = vmatprep.subr.bf16.mxu0 0
    %4100 = vmatpush1.bf16.msra.mxu0 0
    %4101 = vmatprep.subr.bf16.mxu0 0
    %4102 = vmatpush1.bf16.msra.mxu0 0
    %4103 = vmatprep.subr.bf16.mxu0 0
    %4104 = vmatpush1.bf16.msra.mxu0 0
    %4105 = vmatprep.subr.bf16.mxu0 0
    %4106 = vmatpush1.bf16.msra.mxu0 0
    %4107 = vmatprep.subr.bf16.mxu0 0
    %4108 = vmatpush1.bf16.msra.mxu0 0
    %4109 = vmatprep.subr.bf16.mxu0 0
    %4110 = vmatpush1.bf16.msra.mxu0 0
    %4111 = vmatprep.subr.bf16.mxu0 0
    %4112 = vmatpush1.bf16.msra.mxu0 0
    %4113 = vmatprep.subr.bf16.mxu0 0
    %4114 = vmatpush1.bf16.msra.mxu0 0
    %4115 = vmatprep.subr.bf16.mxu0 0
    %4116 = vmatpush1.bf16.msra.mxu0 0
    %4117 = vmatprep.subr.bf16.mxu0 0
    %4118 = vmatpush1.bf16.msra.mxu0 0
    %4119 = vmatprep.subr.bf16.mxu0 0
    %4120 = vmatpush1.bf16.msra.mxu0 0
    %4121 = vmatprep.subr.bf16.mxu0 0
    %4122 = vmatpush1.bf16.msra.mxu0 0
    %4123 = vmatprep.subr.bf16.mxu0 0
    %4124 = vmatpush1.bf16.msra.mxu0 0
    %4125 = vmatprep.mubr.bf16.mxu0 0
    %4126 = vmatmul.mubr.bf16.gmra.mrb[0].mxu0 %v4091
    %v4127 = vpop.f32.mrb[0].mxu0
    %v4128 = vadd.f32 %v4076, %v4127
    %v4129 = vpop.f32.mrb[0].mxu0
    %v4130 = vpop.f32.mrb[0].mxu0
    %v4131 = vpop.f32.mrb[0].mxu0
    %4132 = vdwg.mxu0
    %v4133 = vmax.f32 %v4128, 0.0
    %v4134 = vld [vmem:[%s17] sm:$0xf]
    %v4135 = vld [vmem:[%s17 + $0x4] sm:$0xf]
    %v4136 = vld [vmem:[%s17 + $0x8] sm:$0xf]
    %v4137 = vld [vmem:[%s17 + $0xc] sm:$0xf]
    %v4138 = vpack.c.bf16 %v4133, %v4133
    %v4139 = vld [vmem:[#allocation2] sm:$0x1]
    %v4141 = vlaneseq
    %v4142 = vshrl.u32 %v4141, 7
    %v4143 = vsub.s32 0, %v4142
    %v4144 = vrot.slane %v4139, %v4143
    %v4150 = vunpack.c.l.b16 %v4134
    %v4151 = vunpack.c.l.b16 %v4135
    %v4152 = vunpack.c.l.b16 %v4136
    %v4153 = vunpack.c.l.b16 %v4137
    %v4154 = vpack.c.b16 %v4151, %v4150
    %v4155 = vpack.c.b16 %v4153, %v4152
    %v4159 = vsel %vm3687, %v4138, 0
    %4161 = vmatprep.subr.bf16.mxu0 0
    %4162 = vmatpush1.bf16.msra.mxu0 %v4154
    %4163 = vmatprep.subr.bf16.mxu0 0
    %4164 = vmatpush1.bf16.msra.mxu0 %v4155
    %4165 = vmatprep.subr.bf16.mxu0 0
    %4166 = vmatpush1.bf16.msra.mxu0 0
    %4167 = vmatprep.subr.bf16.mxu0 0
    %4168 = vmatpush1.bf16.msra.mxu0 0
    %4169 = vmatprep.subr.bf16.mxu0 0
    %4170 = vmatpush1.bf16.msra.mxu0 0
    %4171 = vmatprep.subr.bf16.mxu0 0
    %4172 = vmatpush1.bf16.msra.mxu0 0
    %4173 = vmatprep.subr.bf16.mxu0 0
    %4174 = vmatpush1.bf16.msra.mxu0 0
    %4175 = vmatprep.subr.bf16.mxu0 0
    %4176 = vmatpush1.bf16.msra.mxu0 0
    %4177 = vmatprep.subr.bf16.mxu0 0
    %4178 = vmatpush1.bf16.msra.mxu0 0
    %4179 = vmatprep.subr.bf16.mxu0 0
    %4180 = vmatpush1.bf16.msra.mxu0 0
    %4181 = vmatprep.subr.bf16.mxu0 0
    %4182 = vmatpush1.bf16.msra.mxu0 0
    %4183 = vmatprep.subr.bf16.mxu0 0
    %4184 = vmatpush1.bf16.msra.mxu0 0
    %4185 = vmatprep.subr.bf16.mxu0 0
    %4186 = vmatpush1.bf16.msra.mxu0 0
    %4187 = vmatprep.subr.bf16.mxu0 0
    %4188 = vmatpush1.bf16.msra.mxu0 0
    %4189 = vmatprep.subr.bf16.mxu0 0
    %4190 = vmatpush1.bf16.msra.mxu0 0
    %4191 = vmatprep.subr.bf16.mxu0 0
    %4192 = vmatpush1.bf16.msra.mxu0 0
    %4193 = vmatprep.mubr.bf16.mxu0 0
    %4194 = vmatmul.mubr.bf16.gmra.mrb[0].mxu0 %v4159
    %v4195 = vpop.f32.mrb[0].mxu0
    %v4196 = vadd.f32 %v4144, %v4195
    %v4197 = vpop.f32.mrb[0].mxu0
    %v4198 = vpop.f32.mrb[0].mxu0
    %v4199 = vpop.f32.mrb[0].mxu0
    %4200 = vdwg.mxu0
    %vm4201 = vcmask 7168
    %4202 = vst.msk [vmem:[%s19] sm:$0xff] %vm4201, %v4196
    // Predicated region
    $region90: #{forward.1} parent=1 // pred_check
      _
    $region91: #{forward.1} parent=1 // pred_check_branch
      %4204 = sbr.rel (0) target = $region93
    $region92: #{forward.1} parent=1 // pred_region
      _
    $region93: #{forward.1} parent=1 // pred_fallthru
      _
    // Predicated region
    $region94: #{forward.1} parent=1 // pred_check
      _
    $region95: #{forward.1} parent=1 // pred_check_branch
      %4206 = sbr.rel (0) target = $region97
    $region96: #{forward.1} parent=1 // pred_region
      _
    $region97: #{forward.1} parent=1 // pred_fallthru
      _
    %4207 = vsyncpa [#allocation4], 1
    %4208 = vsyncpa [#allocation6], 1

</llo_original>
